<compile_context>
chip_gen: v5e
topology: v5e:2x2
jax: 0.10.0
libtpu: 0.0.40
codegen_flags: <defaults>
</compile_context>

<pallas_src>
import jax
import jax.numpy as jnp
from jax.experimental import pallas as pl
from jax.experimental.pallas import tpu as pltpu


def _leaky_conv(xpad, w2t, H, W):
    """LeakyReLU(0.2) + 3x3 'valid' conv on one zero-padded NCHW image.

    xpad : (Cin, H+2, W+2) padded pre-activation image
    w2t  : (Cout, 9*Cin)   weights, columns ordered (kh, kw, cin)
    returns (Cout, H*W) float32 conv output (bias-free).
    """
    cin = xpad.shape[0]
    # LeakyReLU(0.2) (VPU). lrelu(0) == 0, so the zero padding is preserved and
    # activation/padding commute.
    x = jnp.where(xpad >= 0, xpad, 0.2 * xpad)
    # im2col in the transposed orientation: 9 shifted windows, each a linear-order
    # preserving (Cin, H, W) -> (Cin, H*W) reshape, concatenated along the
    # contraction axis -> one MXU matmul with K = 9*Cin.
    rows = [x[:, kh:kh + H, kw:kw + W].reshape(cin, H * W)
            for kh in range(3) for kw in range(3)]
    slab_t = jnp.concatenate(rows, axis=0)                     # (9*Cin, H*W)
    # f32 matmul to match the PyTorch f32 reference numerics (bf16 would halve
    # traffic but breaks bit-level parity).
    return jnp.dot(w2t, slab_t, preferred_element_type=jnp.float32)


def _stats_kernel(xpad_ref, w2t_ref, stats_ref):
    """Pass 1: per-image BN partial stats (phase 1 of the global BN reduction)."""
    # xpad_ref : (1, Cin, H+2, W+2), w2t_ref : (Cout, 9*Cin), stats_ref : (1, Cout, 2)
    _, _, hp, wp = xpad_ref.shape
    H, W = hp - 2, wp - 2
    acc = _leaky_conv(xpad_ref[0], w2t_ref[...], H, W)          # (Cout, H*W)
    s1 = jnp.sum(acc, axis=1, keepdims=True)                    # (Cout, 1)
    s2 = jnp.sum(acc * acc, axis=1, keepdims=True)              # (Cout, 1)
    stats_ref[0] = jnp.concatenate([s1, s2], axis=1)            # (Cout, 2)


def _apply_kernel(xpad_ref, w2t_ref, scale_ref, shift_ref, out_ref):
    """Pass 2: recompute LeakyReLU+conv and apply y = conv*scale + shift (NCHW)."""
    # out_ref : (1, Cout, H*W) -- dense 8-sublane x (H*W)-lane stores.
    _, _, hp, wp = xpad_ref.shape
    H, W = hp - 2, wp - 2
    acc = _leaky_conv(xpad_ref[0], w2t_ref[...], H, W)          # (Cout, H*W)
    out_ref[0] = acc * scale_ref[...] + shift_ref[...]          # (Cout,1) broadcast


def conv_block_nchw(x, w_oihw, b, gamma, beta, eps=1e-5):
    """ConvBlock forward: NCHW in, NCHW out, float32."""
    del b  # cancels exactly under training-mode BatchNorm (see header comment).
    N, Cin, H, W = x.shape
    Cout = w_oihw.shape[0]

    # Zero-pad H/W by 1 (fuses with the producer of x under jit).
    xpad = jnp.pad(x, ((0, 0), (0, 0), (1, 1), (1, 1)))
    # OIHW -> (Cout, 9*Cin) with columns ordered (kh, kw, cin), matching slab_t rows.
    w2t = jnp.transpose(w_oihw, (0, 2, 3, 1)).reshape(Cout, 9 * Cin)

    in_specs_common = [
        pl.BlockSpec((1, Cin, H + 2, W + 2), lambda n: (n, 0, 0, 0)),
        pl.BlockSpec((Cout, 9 * Cin), lambda n: (0, 0)),   # block index constant ->
    ]                                                      # fetched once, not per step

    # Pass 1: per-image partial BN stats only (tiny (Cout,2) output per image).
    stats = pl.pallas_call(
        _stats_kernel,
        grid=(N,),
        in_specs=in_specs_common,
        out_specs=pl.BlockSpec((1, Cout, 2), lambda n: (n, 0, 0)),
        out_shape=jax.ShapeDtypeStruct((N, Cout, 2), jnp.float32),
        compiler_params=pltpu.CompilerParams(
            dimension_semantics=("parallel",)),
    )(xpad, w2t)

    # Phase 2 of the BN reduction: tiny per-channel math (Cout elements, plain XLA).
    count = jnp.float32(N * H * W)
    mean = jnp.sum(stats[:, :, 0], axis=0) / count
    var = jnp.sum(stats[:, :, 1], axis=0) / count - mean * mean  # biased (training)
    inv = jax.lax.rsqrt(var + eps)
    scale = (gamma * inv).reshape(Cout, 1)
    shift = (beta - mean * gamma * inv).reshape(Cout, 1)

    # Pass 2: recompute conv (no HBM intermediate) and apply BN, lane-dense output.
    y = pl.pallas_call(
        _apply_kernel,
        grid=(N,),
        in_specs=in_specs_common + [
            pl.BlockSpec((Cout, 1), lambda n: (0, 0)),
            pl.BlockSpec((Cout, 1), lambda n: (0, 0)),
        ],
        out_specs=pl.BlockSpec((1, Cout, H * W), lambda n: (n, 0, 0)),
        out_shape=jax.ShapeDtypeStruct((N, Cout, H * W), jnp.float32),
        compiler_params=pltpu.CompilerParams(
            dimension_semantics=("parallel",)),
    )(xpad, w2t, scale, shift)

    # (N, Cout, H*W) -> (N, Cout, H, W) is byte-identical: free reshape, already NCHW.
    return y.reshape(N, Cout, H, W)


@jax.jit
def conv_block(x_nchw, w_oihw, b, gamma, beta):
    """PyTorch-facing ConvBlock forward (no layout transposes needed anymore)."""
    return conv_block_nchw(x_nchw, w_oihw, b, gamma, beta)


if __name__ == "__main__":
    # ConvBlock(input_size=4, output_size=8), small demo shapes.
    N, Cin, Cout, H, W = 2, 4, 8, 16, 16

    key = jax.random.PRNGKey(0)
    kx, kw, kb = jax.random.split(key, 3)

    x = jax.random.normal(kx, (N, Cin, H, W), dtype=jnp.float32)

    # Deterministic Conv2d-style init (uniform in [-1/sqrt(fan_in), 1/sqrt(fan_in)]).
    fan_in = Cin * 3 * 3
    bound = 1.0 / (fan_in ** 0.5)
    w = jax.random.uniform(kw, (Cout, Cin, 3, 3), jnp.float32, -bound, bound)
    b = jax.random.uniform(kb, (Cout,), jnp.float32, -bound, bound)

    # BatchNorm2d default affine init: weight=1, bias=0.
    gamma = jnp.ones((Cout,), jnp.float32)
    beta = jnp.zeros((Cout,), jnp.float32)

    out = conv_block(x, w, b, gamma, beta)
    jax.block_until_ready(out)
    assert out.shape == (N, Cout, H, W)
    print("KERNEL_OK")
</pallas_src>

<mosaic_0001>
module attributes {stable_mosaic.version = 11 : i64} {
  func.func @_stats_kernel(%arg0: i32, %arg1: memref<1x4x18x18xf32, #tpu.memory_space<vmem>>, %arg2: memref<8x36xf32, #tpu.memory_space<vmem>>, %arg3: memref<1x8x2xf32, #tpu.memory_space<vmem>>) attributes {dimension_semantics = [#tpu.dimension_semantics<parallel>], iteration_bounds = array<i64: 2>, scalar_prefetch = 0 : i64, scratch_operands = 0 : i64, tpu.core_type = #tpu.core_type<tc>, window_params = [{transform_indices = @transform_0, window_bounds = array<i64: 1, 4, 18, 18>}, {pipeline_mode = #tpu.pipeline_mode<synchronous>, transform_indices = @transform_1, window_bounds = array<i64: 8, 36>}, {transform_indices = @transform_2, window_bounds = array<i64: 1, 8, 2>}]} {
    %c0 = arith.constant 0 : index
    %c0_0 = arith.constant 0 : index
    %c0_1 = arith.constant 0 : index
    %c0_2 = arith.constant 0 : index
    %0 = vector.load %arg1[%c0, %c0_0, %c0_1, %c0_2] : memref<1x4x18x18xf32, #tpu.memory_space<vmem>>, vector<1x4x18x18xf32>
    %1 = vector.shape_cast %0 : vector<1x4x18x18xf32> to vector<4x18x18xf32>
    %c0_3 = arith.constant 0 : index
    %c0_4 = arith.constant 0 : index
    %2 = vector.load %arg2[%c0_3, %c0_4] : memref<8x36xf32, #tpu.memory_space<vmem>>, vector<8x36xf32>
    %cst = arith.constant 0.000000e+00 : f32
    %3 = vector.broadcast %cst : f32 to vector<4x18x18xf32>
    %4 = arith.cmpf oge, %1, %3 : vector<4x18x18xf32>
    %cst_5 = arith.constant 2.000000e-01 : f32
    %5 = vector.broadcast %cst_5 : f32 to vector<4x18x18xf32>
    %6 = arith.mulf %5, %1 : vector<4x18x18xf32>
    %7 = arith.select %4, %1, %6 : vector<4x18x18xi1>, vector<4x18x18xf32>
    %8 = vector.extract_strided_slice %7 {offsets = [0, 0, 0], sizes = [4, 16, 16], strides = [1, 1, 1]} : vector<4x18x18xf32> to vector<4x16x16xf32>
    %9 = vector.shape_cast %8 : vector<4x16x16xf32> to vector<4x256xf32>
    %10 = vector.extract_strided_slice %7 {offsets = [0, 0, 1], sizes = [4, 16, 16], strides = [1, 1, 1]} : vector<4x18x18xf32> to vector<4x16x16xf32>
    %11 = vector.shape_cast %10 : vector<4x16x16xf32> to vector<4x256xf32>
    %12 = vector.extract_strided_slice %7 {offsets = [0, 0, 2], sizes = [4, 16, 16], strides = [1, 1, 1]} : vector<4x18x18xf32> to vector<4x16x16xf32>
    %13 = vector.shape_cast %12 : vector<4x16x16xf32> to vector<4x256xf32>
    %14 = vector.extract_strided_slice %7 {offsets = [0, 1, 0], sizes = [4, 16, 16], strides = [1, 1, 1]} : vector<4x18x18xf32> to vector<4x16x16xf32>
    %15 = vector.shape_cast %14 : vector<4x16x16xf32> to vector<4x256xf32>
    %16 = vector.extract_strided_slice %7 {offsets = [0, 1, 1], sizes = [4, 16, 16], strides = [1, 1, 1]} : vector<4x18x18xf32> to vector<4x16x16xf32>
    %17 = vector.shape_cast %16 : vector<4x16x16xf32> to vector<4x256xf32>
    %18 = vector.extract_strided_slice %7 {offsets = [0, 1, 2], sizes = [4, 16, 16], strides = [1, 1, 1]} : vector<4x18x18xf32> to vector<4x16x16xf32>
    %19 = vector.shape_cast %18 : vector<4x16x16xf32> to vector<4x256xf32>
    %20 = vector.extract_strided_slice %7 {offsets = [0, 2, 0], sizes = [4, 16, 16], strides = [1, 1, 1]} : vector<4x18x18xf32> to vector<4x16x16xf32>
    %21 = vector.shape_cast %20 : vector<4x16x16xf32> to vector<4x256xf32>
    %22 = vector.extract_strided_slice %7 {offsets = [0, 2, 1], sizes = [4, 16, 16], strides = [1, 1, 1]} : vector<4x18x18xf32> to vector<4x16x16xf32>
    %23 = vector.shape_cast %22 : vector<4x16x16xf32> to vector<4x256xf32>
    %24 = vector.extract_strided_slice %7 {offsets = [0, 2, 2], sizes = [4, 16, 16], strides = [1, 1, 1]} : vector<4x18x18xf32> to vector<4x16x16xf32>
    %25 = vector.shape_cast %24 : vector<4x16x16xf32> to vector<4x256xf32>
    %26 = tpu.concatenate %9, %11, %13, %15, %17, %19, %21, %23, %25 in 0 : vector<4x256xf32>, vector<4x256xf32>, vector<4x256xf32>, vector<4x256xf32>, vector<4x256xf32>, vector<4x256xf32>, vector<4x256xf32>, vector<4x256xf32>, vector<4x256xf32> -> vector<36x256xf32>
    %cst_6 = arith.constant dense<0.000000e+00> : vector<8x256xf32>
    %27 = tpu.matmul %2, %26, %cst_6 {dimension_numbers = #tpu.dot_dimension_numbers<[1], [0], [0], [1], [0, 0, 1, 1], [], []>} : vector<8x36xf32>, vector<36x256xf32>, vector<8x256xf32> -> vector<8x256xf32>
    %cst_7 = arith.constant dense<0.000000e+00> : vector<8xf32>
    %28 = vector.multi_reduction <add>, %27, %cst_7 [1] : vector<8x256xf32> to vector<8xf32>
    %29 = vector.shape_cast %28 : vector<8xf32> to vector<8x1xf32>
    %30 = arith.mulf %27, %27 : vector<8x256xf32>
    %cst_8 = arith.constant dense<0.000000e+00> : vector<8xf32>
    %31 = vector.multi_reduction <add>, %30, %cst_8 [1] : vector<8x256xf32> to vector<8xf32>
    %32 = vector.shape_cast %31 : vector<8xf32> to vector<8x1xf32>
    %33 = tpu.concatenate %29, %32 in 1 : vector<8x1xf32>, vector<8x1xf32> -> vector<8x2xf32>
    %c0_9 = arith.constant 0 : index
    %c0_10 = arith.constant 0 : index
    %c0_11 = arith.constant 0 : index
    %34 = vector.load %arg3[%c0_9, %c0_10, %c0_11] : memref<1x8x2xf32, #tpu.memory_space<vmem>>, vector<1x8x2xf32>
    %35 = vector.shape_cast %34 : vector<1x8x2xf32> to vector<8x2xf32>
    %36 = vector.shape_cast %33 : vector<8x2xf32> to vector<1x8x2xf32>
    tpu.vector_store %arg3[%c0_9, %c0_10, %c0_11], %36 {strides = array<i32>} : memref<1x8x2xf32, #tpu.memory_space<vmem>>, vector<1x8x2xf32>,
    return
  }
  func.func @transform_0(%arg0: i32) -> (i32, i32, i32, i32) {
    %c0_i32 = arith.constant 0 : i32
    %c0_i32_0 = arith.constant 0 : i32
    %c0_i32_1 = arith.constant 0 : i32
    %c0_i32_2 = arith.constant 0 : i32
    return %arg0, %c0_i32, %c0_i32_0, %c0_i32_1 : i32, i32, i32, i32
  }
  func.func @transform_1(%arg0: i32) -> (i32, i32) {
    %c0_i32 = arith.constant 0 : i32
    %c0_i32_0 = arith.constant 0 : i32
    %c0_i32_1 = arith.constant 0 : i32
    return %c0_i32, %c0_i32_0 : i32, i32
  }
  func.func @transform_2(%arg0: i32) -> (i32, i32, i32) {
    %c0_i32 = arith.constant 0 : i32
    %c0_i32_0 = arith.constant 0 : i32
    %c0_i32_1 = arith.constant 0 : i32
    return %arg0, %c0_i32, %c0_i32_0 : i32, i32, i32
  }
}

module attributes {stable_mosaic.version = 11 : i64} {
  func.func @_apply_kernel(%arg0: i32, %arg1: memref<1x4x18x18xf32, #tpu.memory_space<vmem>>, %arg2: memref<8x36xf32, #tpu.memory_space<vmem>>, %arg3: memref<8x1xf32, #tpu.memory_space<vmem>>, %arg4: memref<8x1xf32, #tpu.memory_space<vmem>>, %arg5: memref<1x8x256xf32, #tpu.memory_space<vmem>>) attributes {dimension_semantics = [#tpu.dimension_semantics<parallel>], iteration_bounds = array<i64: 2>, scalar_prefetch = 0 : i64, scratch_operands = 0 : i64, tpu.core_type = #tpu.core_type<tc>, window_params = [{transform_indices = @transform_0, window_bounds = array<i64: 1, 4, 18, 18>}, {pipeline_mode = #tpu.pipeline_mode<synchronous>, transform_indices = @transform_1, window_bounds = array<i64: 8, 36>}, {pipeline_mode = #tpu.pipeline_mode<synchronous>, transform_indices = @transform_2, window_bounds = array<i64: 8, 1>}, {pipeline_mode = #tpu.pipeline_mode<synchronous>, transform_indices = @transform_3, window_bounds = array<i64: 8, 1>}, {transform_indices = @transform_4, window_bounds = array<i64: 1, 8, 256>}]} {
    %c0 = arith.constant 0 : index
    %c0_0 = arith.constant 0 : index
    %c0_1 = arith.constant 0 : index
    %c0_2 = arith.constant 0 : index
    %0 = vector.load %arg1[%c0, %c0_0, %c0_1, %c0_2] : memref<1x4x18x18xf32, #tpu.memory_space<vmem>>, vector<1x4x18x18xf32>
    %1 = vector.shape_cast %0 : vector<1x4x18x18xf32> to vector<4x18x18xf32>
    %c0_3 = arith.constant 0 : index
    %c0_4 = arith.constant 0 : index
    %2 = vector.load %arg2[%c0_3, %c0_4] : memref<8x36xf32, #tpu.memory_space<vmem>>, vector<8x36xf32>
    %cst = arith.constant 0.000000e+00 : f32
    %3 = vector.broadcast %cst : f32 to vector<4x18x18xf32>
    %4 = arith.cmpf oge, %1, %3 : vector<4x18x18xf32>
    %cst_5 = arith.constant 2.000000e-01 : f32
    %5 = vector.broadcast %cst_5 : f32 to vector<4x18x18xf32>
    %6 = arith.mulf %5, %1 : vector<4x18x18xf32>
    %7 = arith.select %4, %1, %6 : vector<4x18x18xi1>, vector<4x18x18xf32>
    %8 = vector.extract_strided_slice %7 {offsets = [0, 0, 0], sizes = [4, 16, 16], strides = [1, 1, 1]} : vector<4x18x18xf32> to vector<4x16x16xf32>
    %9 = vector.shape_cast %8 : vector<4x16x16xf32> to vector<4x256xf32>
    %10 = vector.extract_strided_slice %7 {offsets = [0, 0, 1], sizes = [4, 16, 16], strides = [1, 1, 1]} : vector<4x18x18xf32> to vector<4x16x16xf32>
    %11 = vector.shape_cast %10 : vector<4x16x16xf32> to vector<4x256xf32>
    %12 = vector.extract_strided_slice %7 {offsets = [0, 0, 2], sizes = [4, 16, 16], strides = [1, 1, 1]} : vector<4x18x18xf32> to vector<4x16x16xf32>
    %13 = vector.shape_cast %12 : vector<4x16x16xf32> to vector<4x256xf32>
    %14 = vector.extract_strided_slice %7 {offsets = [0, 1, 0], sizes = [4, 16, 16], strides = [1, 1, 1]} : vector<4x18x18xf32> to vector<4x16x16xf32>
    %15 = vector.shape_cast %14 : vector<4x16x16xf32> to vector<4x256xf32>
    %16 = vector.extract_strided_slice %7 {offsets = [0, 1, 1], sizes = [4, 16, 16], strides = [1, 1, 1]} : vector<4x18x18xf32> to vector<4x16x16xf32>
    %17 = vector.shape_cast %16 : vector<4x16x16xf32> to vector<4x256xf32>
    %18 = vector.extract_strided_slice %7 {offsets = [0, 1, 2], sizes = [4, 16, 16], strides = [1, 1, 1]} : vector<4x18x18xf32> to vector<4x16x16xf32>
    %19 = vector.shape_cast %18 : vector<4x16x16xf32> to vector<4x256xf32>
    %20 = vector.extract_strided_slice %7 {offsets = [0, 2, 0], sizes = [4, 16, 16], strides = [1, 1, 1]} : vector<4x18x18xf32> to vector<4x16x16xf32>
    %21 = vector.shape_cast %20 : vector<4x16x16xf32> to vector<4x256xf32>
    %22 = vector.extract_strided_slice %7 {offsets = [0, 2, 1], sizes = [4, 16, 16], strides = [1, 1, 1]} : vector<4x18x18xf32> to vector<4x16x16xf32>
    %23 = vector.shape_cast %22 : vector<4x16x16xf32> to vector<4x256xf32>
    %24 = vector.extract_strided_slice %7 {offsets = [0, 2, 2], sizes = [4, 16, 16], strides = [1, 1, 1]} : vector<4x18x18xf32> to vector<4x16x16xf32>
    %25 = vector.shape_cast %24 : vector<4x16x16xf32> to vector<4x256xf32>
    %26 = tpu.concatenate %9, %11, %13, %15, %17, %19, %21, %23, %25 in 0 : vector<4x256xf32>, vector<4x256xf32>, vector<4x256xf32>, vector<4x256xf32>, vector<4x256xf32>, vector<4x256xf32>, vector<4x256xf32>, vector<4x256xf32>, vector<4x256xf32> -> vector<36x256xf32>
    %cst_6 = arith.constant dense<0.000000e+00> : vector<8x256xf32>
    %27 = tpu.matmul %2, %26, %cst_6 {dimension_numbers = #tpu.dot_dimension_numbers<[1], [0], [0], [1], [0, 0, 1, 1], [], []>} : vector<8x36xf32>, vector<36x256xf32>, vector<8x256xf32> -> vector<8x256xf32>
    %c0_7 = arith.constant 0 : index
    %c0_8 = arith.constant 0 : index
    %28 = vector.load %arg3[%c0_7, %c0_8] : memref<8x1xf32, #tpu.memory_space<vmem>>, vector<8x1xf32>
    %29 = vector.broadcast %28 : vector<8x1xf32> to vector<8x256xf32>
    %30 = arith.mulf %27, %29 : vector<8x256xf32>
    %c0_9 = arith.constant 0 : index
    %c0_10 = arith.constant 0 : index
    %31 = vector.load %arg4[%c0_9, %c0_10] : memref<8x1xf32, #tpu.memory_space<vmem>>, vector<8x1xf32>
    %32 = vector.broadcast %31 : vector<8x1xf32> to vector<8x256xf32>
    %33 = arith.addf %30, %32 : vector<8x256xf32>
    %c0_11 = arith.constant 0 : index
    %c0_12 = arith.constant 0 : index
    %c0_13 = arith.constant 0 : index
    %34 = vector.load %arg5[%c0_11, %c0_12, %c0_13] : memref<1x8x256xf32, #tpu.memory_space<vmem>>, vector<1x8x256xf32>
    %35 = vector.shape_cast %34 : vector<1x8x256xf32> to vector<8x256xf32>
    %36 = vector.shape_cast %33 : vector<8x256xf32> to vector<1x8x256xf32>
    tpu.vector_store %arg5[%c0_11, %c0_12, %c0_13], %36 {strides = array<i32>} : memref<1x8x256xf32, #tpu.memory_space<vmem>>, vector<1x8x256xf32>,
    return
  }
  func.func @transform_0(%arg0: i32) -> (i32, i32, i32, i32) {
    %c0_i32 = arith.constant 0 : i32
    %c0_i32_0 = arith.constant 0 : i32
    %c0_i32_1 = arith.constant 0 : i32
    %c0_i32_2 = arith.constant 0 : i32
    return %arg0, %c0_i32, %c0_i32_0, %c0_i32_1 : i32, i32, i32, i32
  }
  func.func @transform_1(%arg0: i32) -> (i32, i32) {
    %c0_i32 = arith.constant 0 : i32
    %c0_i32_0 = arith.constant 0 : i32
    %c0_i32_1 = arith.constant 0 : i32
    return %c0_i32, %c0_i32_0 : i32, i32
  }
  func.func @transform_2(%arg0: i32) -> (i32, i32) {
    %c0_i32 = arith.constant 0 : i32
    %c0_i32_0 = arith.constant 0 : i32
    %c0_i32_1 = arith.constant 0 : i32
    return %c0_i32, %c0_i32_0 : i32, i32
  }
  func.func @transform_3(%arg0: i32) -> (i32, i32) {
    %c0_i32 = arith.constant 0 : i32
    %c0_i32_0 = arith.constant 0 : i32
    %c0_i32_1 = arith.constant 0 : i32
    return %c0_i32, %c0_i32_0 : i32, i32
  }
  func.func @transform_4(%arg0: i32) -> (i32, i32, i32) {
    %c0_i32 = arith.constant 0 : i32
    %c0_i32_0 = arith.constant 0 : i32
    %c0_i32_1 = arith.constant 0 : i32
    return %arg0, %c0_i32, %c0_i32_0 : i32, i32, i32
  }
}

</mosaic_0001>

<llo_original>
// kernel: conv_block.2
$region0: #{conv_block.2}
  #allocation0 [shape = 'u32[]', space=smem, size = 0x4, offset = 0x4, fixed_abs, tag = 'smem constant byte address 0x4 - core index']
  #allocation1 [shape = 'u32[72,128]{1,0:T(1,128)}', space=vmem, size = 0x9000, scoped, tag = 'internal scratch']
  %s0 = inlined_call_operand.vmem [shape: f32[2,4,18,18], index: 0, kind: input, shape index: {}]
  %s1 = inlined_call_operand.vmem [shape: f32[8,36], index: 1, kind: input, shape index: {}]
  %s2 = inlined_call_operand.vmem [shape: f32[2,8,2], index: 2, kind: output, shape index: {}]
  %s3 = sld [smem:[#allocation0]]
  $region41: #{conv_block.2} parent=0
    _
  %s5 = ssub.s32 1, %s3
  %s6 = scalar_select 0, %s5, %s3
  loop: start=0, step=1, limit=4
  $region2: #{conv_block.2} parent=0 // loop_pre_header
    _
  $region3: #{conv_block.2} parent=0 // loop_header
    %s8 = sphi 0, %s12
    %p9 = scmp.ge.s32.totalorder %s8, 4
    %s18 = sphi 0, %s20
    %s21 = sphi 0, %s18
    %s22 = sphi 0, %s21
    %s38 = sphi 0, %s22
    %s42 = sphi 0, %s42
    %s44 = sphi 0, %s42
    %s45 = sphi 0, %s44
    %s59 = sphi 0, %s45
    %s65 = sphi 0, %s67
    %s68 = sphi 0, %s65
    %s69 = sphi 0, %s68
    %s85 = sphi 0, %s69
  $region4: #{conv_block.2} parent=0 // loop_header_branch
    %11 = sbr.rel (%p9) target = $region8
  $region5: #{conv_block.2} parent=0 // loop_body
    %s13 = ssub.s32 %s8, 1
    %s14 = ssub.s32 %s8, 2
    %s15 = sadd.s32 %s8, 1
    %s16 = ssub.s32 %s8, %s15
    %p17 = scmp.eq.s32.totalorder %s16, 0
    %s19 = sadd.s32 %s18, 1
    %s20 = scalar_select %p17, %s18, %s19
    %p23 = pneg %p17
    %p24 = scmp.eq.s32.totalorder %s8, 1
    %p25 = por %p23, %p24
    %p26 = scmp.ne.s32.totalorder %s18, %s21
    %p27 = scmp.eq.s32.totalorder %s8, 0
    %p28 = por %p26, %p27
    %p29 = scmp.ne.s32.totalorder %s18, %s21
    %p30 = scmp.eq.s32.totalorder %s13, 1
    %p31 = por %p29, %p30
    %p32 = scmp.ne.s32.totalorder %s21, %s22
    %p33 = scmp.eq.s32.totalorder %s13, 0
    %p34 = por %p32, %p33
    %p35 = scmp.ne.s32.totalorder %s21, %s22
    %p36 = scmp.eq.s32.totalorder %s14, 1
    %p37 = por %p35, %p36
    %p39 = scmp.ne.s32.totalorder %s22, %s38
    %p40 = scmp.eq.s32.totalorder %s14, 0
    %p41 = por %p39, %p40
    %s43 = sadd.s32 %s42, 1
    %p46 = scmp.eq.s32.totalorder %s8, 1
    %p47 = scmp.ne.s32.totalorder %s42, %s44
    %p48 = scmp.eq.s32.totalorder %s8, 0
    %p49 = por %p47, %p48
    %p50 = scmp.ne.s32.totalorder %s42, %s44
    %p51 = scmp.eq.s32.totalorder %s13, 1
    %p52 = por %p50, %p51
    %p53 = scmp.ne.s32.totalorder %s44, %s45
    %p54 = scmp.eq.s32.totalorder %s13, 0
    %p55 = por %p53, %p54
    %p56 = scmp.ne.s32.totalorder %s44, %s45
    %p57 = scmp.eq.s32.totalorder %s14, 1
    %p58 = por %p56, %p57
    %p60 = scmp.ne.s32.totalorder %s45, %s59
    %p61 = scmp.eq.s32.totalorder %s14, 0
    %p62 = por %p60, %p61
    %s63 = ssub.s32 %s8, %s15
    %p64 = scmp.eq.s32.totalorder %s63, 0
    %s66 = sadd.s32 %s65, 1
    %s67 = scalar_select %p64, %s65, %s66
    %p70 = pneg %p64
    %p71 = scmp.eq.s32.totalorder %s8, 1
    %p72 = por %p70, %p71
    %p73 = scmp.ne.s32.totalorder %s65, %s68
    %p74 = scmp.eq.s32.totalorder %s8, 0
    %p75 = por %p73, %p74
    %p76 = scmp.ne.s32.totalorder %s65, %s68
    %p77 = scmp.eq.s32.totalorder %s13, 1
    %p78 = por %p76, %p77
    %p79 = scmp.ne.s32.totalorder %s68, %s69
    %p80 = scmp.eq.s32.totalorder %s13, 0
    %p81 = por %p79, %p80
    %p82 = scmp.ne.s32.totalorder %s68, %s69
    %p83 = scmp.eq.s32.totalorder %s14, 1
    %p84 = por %p82, %p83
    %p86 = scmp.ne.s32.totalorder %s69, %s85
    %p87 = scmp.eq.s32.totalorder %s14, 0
    %p88 = por %p86, %p87
    %p89 = scmp.le.s32.totalorder 1, %s8
    %p90 = scmp.lt.s32.totalorder %s8, 3
    %p91 = pnand %p89, %p90
    %p92 = pneg %p91
    // Predicated region
    $region9: #{conv_block.2} parent=5 // pred_check
      _
    $region10: #{conv_block.2} parent=5 // pred_check_branch
      %94 = sbr.rel (%p91) target = $region12
    $region11: #{conv_block.2} parent=5 // pred_region
      %s95 = ssub.s32 %s8, 1
      // Predicated region
      $region13: #{conv_block.2} parent=11 // pred_check
        %p96 = pneg %p55
      $region14: #{conv_block.2} parent=11 // pred_check_branch
        %98 = sbr.rel (%p96) target = $region16
      $region15: #{conv_block.2} parent=11 // pred_region
        _
      $region16: #{conv_block.2} parent=11 // pred_fallthru
        _
    $region12: #{conv_block.2} parent=5 // pred_fallthru
      _
    %p99 = scmp.lt.s32.totalorder %s8, 2
    // Predicated region
    $region17: #{conv_block.2} parent=5 // pred_check
      %p100 = pneg %p99
    $region18: #{conv_block.2} parent=5 // pred_check_branch
      %102 = sbr.rel (%p100) target = $region20
    $region19: #{conv_block.2} parent=5 // pred_region
      // Predicated region
      $region21: #{conv_block.2} parent=19 // pred_check
        %p103 = pneg %p28
      $region22: #{conv_block.2} parent=19 // pred_check_branch
        %105 = sbr.rel (%p103) target = $region24
      $region23: #{conv_block.2} parent=19 // pred_region
        %p106 = scmp.lt.s32.totalorder %s8, 1
        %s107 = scalar_select %p106, %s8, 1
        %s108 = smul.addr %s107, 12
        %s109 = smul.addr %s108, 8
        %s110 = scalar_lea.vmem %s0, %s109
      $region24: #{conv_block.2} parent=19 // pred_fallthru
        _
    $region20: #{conv_block.2} parent=5 // pred_fallthru
      _
    %p111 = scmp.le.s32.totalorder 1, %s8
    %p112 = scmp.lt.s32.totalorder %s8, 3
    %p113 = pnand %p111, %p112
    %p114 = pneg %p113
    // Predicated region
    $region25: #{conv_block.2} parent=5 // pred_check
      _
    $region26: #{conv_block.2} parent=5 // pred_check_branch
      %116 = sbr.rel (%p113) target = $region28
    $region27: #{conv_block.2} parent=5 // pred_region
      %s117 = ssub.s32 %s8, 1
      %p118 = scmp.lt.s32.totalorder %s13, 1
      %s119 = scalar_select %p118, %s13, 1
      %s120 = smul.addr %s119, 12
      %s121 = smul.addr %s120, 8
      %s122 = scalar_lea.vmem %s0, %s121
      %p123 = pneg %p34
      %p124 = pneg %p31
      %p125 = pneg %p55
      %p126 = pneg %p52
      %p127 = pneg %p81
      %p128 = pneg %p78
      %p129 = scmp.lt.s32.totalorder %s13, 1
      %s130 = scalar_select %p129, %s13, 1
      %s131 = smul.addr %s130, 8
      %s132 = scalar_lea.vmem %s2, %s131
      %p133 = scmp.lt.s32.totalorder %s13, 1
      %s134 = scalar_select %p133, %s13, 1
      %s135 = smul.addr %s134, 12
      %s136 = smul.addr %s135, 8
      %s137 = scalar_lea.vmem %s0, %s136
      %p138 = scmp.lt.s32.totalorder %s13, 1
      %s139 = scalar_select %p138, %s13, 1
      %s140 = smul.addr %s139, 8
      %s141 = scalar_lea.vmem %s2, %s140
      %v142 = vld [vmem:[%s137] sm:$0xff]
      %v143 = vld [vmem:[%s137 + $0x8] sm:$0xff]
      %v144 = vld [vmem:[%s137 + $0x10] sm:$0x3]
      %v145 = vld [vmem:[%s137 + $0x18] sm:$0xff]
      %v146 = vld [vmem:[%s137 + $0x20] sm:$0xff]
      %v147 = vld [vmem:[%s137 + $0x28] sm:$0x3]
      %v148 = vld [vmem:[%s137 + $0x30] sm:$0xff]
      %v149 = vld [vmem:[%s137 + $0x38] sm:$0xff]
      %v150 = vld [vmem:[%s137 + $0x40] sm:$0x3]
      %v151 = vld [vmem:[%s137 + $0x48] sm:$0xff]
      %v152 = vld [vmem:[%s137 + $0x50] sm:$0xff]
      %v153 = vld [vmem:[%s137 + $0x58] sm:$0x3]
      %v154 = vld [vmem:[%s1] sm:$0xff]
      %vm155 = vcmp.ge.f32.partialorder %v142, 0.0
      %vm156 = vcmp.ge.f32.partialorder %v143, 0.0
      %vm157 = vcmp.ge.f32.partialorder %v144, 0.0
      %vm158 = vcmp.ge.f32.partialorder %v145, 0.0
      %vm159 = vcmp.ge.f32.partialorder %v146, 0.0
      %vm160 = vcmp.ge.f32.partialorder %v147, 0.0
      %vm161 = vcmp.ge.f32.partialorder %v148, 0.0
      %vm162 = vcmp.ge.f32.partialorder %v149, 0.0
      %vm163 = vcmp.ge.f32.partialorder %v150, 0.0
      %vm164 = vcmp.ge.f32.partialorder %v151, 0.0
      %vm165 = vcmp.ge.f32.partialorder %v152, 0.0
      %vm166 = vcmp.ge.f32.partialorder %v153, 0.0
      %v167 = vmul.f32 %v142, 0.2
      %v168 = vmul.f32 %v143, 0.2
      %v169 = vmul.f32 %v144, 0.2
      %v170 = vmul.f32 %v145, 0.2
      %v171 = vmul.f32 %v146, 0.2
      %v172 = vmul.f32 %v147, 0.2
      %v173 = vmul.f32 %v148, 0.2
      %v174 = vmul.f32 %v149, 0.2
      %v175 = vmul.f32 %v150, 0.2
      %v176 = vmul.f32 %v151, 0.2
      %v177 = vmul.f32 %v152, 0.2
      %v178 = vmul.f32 %v153, 0.2
      %v179 = vsel %vm155, %v142, %v167
      %v180 = vsel %vm156, %v143, %v168
      %v181 = vsel %vm157, %v144, %v169
      %v182 = vsel %vm158, %v145, %v170
      %v183 = vsel %vm159, %v146, %v171
      %v184 = vsel %vm160, %v147, %v172
      %v185 = vsel %vm161, %v148, %v173
      %v186 = vsel %vm162, %v149, %v174
      %v187 = vsel %vm163, %v150, %v175
      %v188 = vsel %vm164, %v151, %v176
      %v189 = vsel %vm165, %v152, %v177
      %v190 = vsel %vm166, %v153, %v178
      %v191 = vrot.slane %v185, 4
      %vm192 = vcmask 1047556
      %v193 = vsel %vm192, %v191, %v179
      %v194 = vrot.slane %v179, 4
      %v195 = vsel %vm192, %v185, %v194
      %v197 = vunpack.c.l.s4 1983009808
      %v198 = vunpack.c.0.s8 %v197
      %v199 = vperm.slane %v193, %v198
      %v201 = vunpack.c.l.s4 1983009808
      %v202 = vunpack.c.0.s8 %v201
      %v203 = vperm.slane %v195, %v202
      %v204 = vrot.slane %v188, 4
      %v205 = vsel %vm192, %v204, %v182
      %v206 = vrot.slane %v182, 4
      %v207 = vsel %vm192, %v188, %v206
      %v209 = vunpack.c.l.s4 1983009808
      %v210 = vunpack.c.0.s8 %v209
      %v211 = vperm.slane %v205, %v210
      %v213 = vunpack.c.l.s4 1983009808
      %v214 = vunpack.c.0.s8 %v213
      %v215 = vperm.slane %v207, %v214
      %v216 = vrot.slane %v211, 4
      %v217 = vsel %vm192, %v216, %v199
      %v218 = vrot.slane %v199, 4
      %v219 = vsel %vm192, %v211, %v218
      %v221 = vunpack.c.l.s4 1934713408
      %v222 = vunpack.c.0.s8 %v221
      %v223 = vperm.slane %v217, %v222
      %v225 = vunpack.c.l.s4 1934713408
      %v226 = vunpack.c.0.s8 %v225
      %v227 = vperm.slane %v219, %v226
      %v228 = vrot.slane %v215, 4
      %v229 = vsel %vm192, %v228, %v203
      %v230 = vrot.slane %v203, 4
      %v231 = vsel %vm192, %v215, %v230
      %v233 = vunpack.c.l.s4 1934713408
      %v234 = vunpack.c.0.s8 %v233
      %v235 = vperm.slane %v229, %v234
      %v237 = vunpack.c.l.s4 1934713408
      %v238 = vunpack.c.0.s8 %v237
      %v239 = vperm.slane %v231, %v238
      %v240 = vrot.slane %v223, 4
      %v241 = vsel %vm192, 0.0, %v240
      %v242 = vrot.slane %v227, 4
      %v243 = vsel %vm192, 0.0, %v242
      %v244 = vrot.slane %v235, 4
      %v245 = vsel %vm192, 0.0, %v244
      %v246 = vrot.slane %v239, 4
      %v247 = vsel %vm192, 0.0, %v246
      %v248 = vrot.slane %v186, 4
      %v249 = vsel %vm192, %v248, %v180
      %v250 = vrot.slane %v180, 4
      %v251 = vsel %vm192, %v186, %v250
      %v253 = vunpack.c.l.s4 1983009808
      %v254 = vunpack.c.0.s8 %v253
      %v255 = vperm.slane %v249, %v254
      %v257 = vunpack.c.l.s4 1983009808
      %v258 = vunpack.c.0.s8 %v257
      %v259 = vperm.slane %v251, %v258
      %v260 = vrot.slane %v189, 4
      %v261 = vsel %vm192, %v260, %v183
      %v262 = vrot.slane %v183, 4
      %v263 = vsel %vm192, %v189, %v262
      %v265 = vunpack.c.l.s4 1983009808
      %v266 = vunpack.c.0.s8 %v265
      %v267 = vperm.slane %v261, %v266
      %v269 = vunpack.c.l.s4 1983009808
      %v270 = vunpack.c.0.s8 %v269
      %v271 = vperm.slane %v263, %v270
      %v272 = vrot.slane %v267, 4
      %v273 = vsel %vm192, %v272, %v255
      %v274 = vrot.slane %v255, 4
      %v275 = vsel %vm192, %v267, %v274
      %v277 = vunpack.c.l.s4 1934713408
      %v278 = vunpack.c.0.s8 %v277
      %v279 = vperm.slane %v273, %v278
      %v281 = vunpack.c.l.s4 1934713408
      %v282 = vunpack.c.0.s8 %v281
      %v283 = vperm.slane %v275, %v282
      %v284 = vrot.slane %v271, 4
      %v285 = vsel %vm192, %v284, %v259
      %v286 = vrot.slane %v259, 4
      %v287 = vsel %vm192, %v271, %v286
      %v289 = vunpack.c.l.s4 1934713408
      %v290 = vunpack.c.0.s8 %v289
      %v291 = vperm.slane %v285, %v290
      %v293 = vunpack.c.l.s4 1934713408
      %v294 = vunpack.c.0.s8 %v293
      %v295 = vperm.slane %v287, %v294
      %v296 = vrot.slane %v279, 4
      %v297 = vsel %vm192, 0.0, %v296
      %v298 = vrot.slane %v283, 4
      %v299 = vsel %vm192, 0.0, %v298
      %v300 = vrot.slane %v291, 4
      %v301 = vsel %vm192, 0.0, %v300
      %v302 = vrot.slane %v295, 4
      %v303 = vsel %vm192, 0.0, %v302
      %305 = vrot.lane.b32.xlu0 %v241, 16
      %v306 = vpop.permute.xlu0 %305
      %309 = vrot.lane.b32.xlu0 %v227, 32
      %v310 = vpop.permute.xlu0 %309
      %313 = vrot.lane.b32.xlu0 %v243, 48
      %v314 = vpop.permute.xlu0 %313
      %317 = vrot.lane.b32.xlu0 %v235, 64
      %v318 = vpop.permute.xlu0 %317
      %321 = vrot.lane.b32.xlu0 %v245, 80
      %v322 = vpop.permute.xlu0 %321
      %325 = vrot.lane.b32.xlu0 %v239, 96
      %v326 = vpop.permute.xlu0 %325
      %329 = vrot.lane.b32.xlu0 %v247, 112
      %v330 = vpop.permute.xlu0 %329
      %333 = vrot.lane.b32.xlu0 %v297, 16
      %v334 = vpop.permute.xlu0 %333
      %337 = vrot.lane.b32.xlu0 %v283, 32
      %v338 = vpop.permute.xlu0 %337
      %341 = vrot.lane.b32.xlu0 %v299, 48
      %v342 = vpop.permute.xlu0 %341
      %345 = vrot.lane.b32.xlu0 %v291, 64
      %v346 = vpop.permute.xlu0 %345
      %349 = vrot.lane.b32.xlu0 %v301, 80
      %v350 = vpop.permute.xlu0 %349
      %353 = vrot.lane.b32.xlu0 %v295, 96
      %v354 = vpop.permute.xlu0 %353
      %357 = vrot.lane.b32.xlu0 %v303, 112
      %v358 = vpop.permute.xlu0 %357
      %vm360 = vcmask 130048
      %v361 = vsel %vm360, %v223, %v306
      %vm362 = vcmask 261120
      %v363 = vsel %vm362, %v361, %v310
      %vm364 = vcmask 392192
      %v365 = vsel %vm364, %v363, %v314
      %vm366 = vcmask 523264
      %v367 = vsel %vm366, %v365, %v318
      %vm368 = vcmask 654336
      %v369 = vsel %vm368, %v367, %v322
      %vm370 = vcmask 785408
      %v371 = vsel %vm370, %v369, %v326
      %vm372 = vcmask 916480
      %v373 = vsel %vm372, %v371, %v330
      %v374 = vsel %vm360, %v279, %v334
      %v375 = vsel %vm362, %v374, %v338
      %v376 = vsel %vm364, %v375, %v342
      %v377 = vsel %vm366, %v376, %v346
      %v378 = vsel %vm368, %v377, %v350
      %v379 = vsel %vm370, %v378, %v354
      %v380 = vsel %vm372, %v379, %v358
      %389 = vrot.lane.b32.xlu0 %v179, 127
      %v390 = vpop.permute.xlu0 %389
      %391 = vrot.lane.b32.xlu0 %v180, 127
      %v392 = vpop.permute.xlu0 %391
      %393 = vrot.lane.b32.xlu0 %v182, 127
      %v394 = vpop.permute.xlu0 %393
      %395 = vrot.lane.b32.xlu0 %v183, 127
      %v396 = vpop.permute.xlu0 %395
      %397 = vrot.lane.b32.xlu0 %v185, 127
      %v398 = vpop.permute.xlu0 %397
      %399 = vrot.lane.b32.xlu0 %v186, 127
      %v400 = vpop.permute.xlu0 %399
      %401 = vrot.lane.b32.xlu0 %v188, 127
      %v402 = vpop.permute.xlu0 %401
      %403 = vrot.lane.b32.xlu0 %v189, 127
      %v404 = vpop.permute.xlu0 %403
      %v413 = vrot.slane %v398, 4
      %v414 = vsel %vm192, %v413, %v390
      %v415 = vrot.slane %v390, 4
      %v416 = vsel %vm192, %v398, %v415
      %v418 = vunpack.c.l.s4 1983009808
      %v419 = vunpack.c.0.s8 %v418
      %v420 = vperm.slane %v414, %v419
      %v422 = vunpack.c.l.s4 1983009808
      %v423 = vunpack.c.0.s8 %v422
      %v424 = vperm.slane %v416, %v423
      %v425 = vrot.slane %v402, 4
      %v426 = vsel %vm192, %v425, %v394
      %v427 = vrot.slane %v394, 4
      %v428 = vsel %vm192, %v402, %v427
      %v430 = vunpack.c.l.s4 1983009808
      %v431 = vunpack.c.0.s8 %v430
      %v432 = vperm.slane %v426, %v431
      %v434 = vunpack.c.l.s4 1983009808
      %v435 = vunpack.c.0.s8 %v434
      %v436 = vperm.slane %v428, %v435
      %v437 = vrot.slane %v432, 4
      %v438 = vsel %vm192, %v437, %v420
      %v439 = vrot.slane %v420, 4
      %v440 = vsel %vm192, %v432, %v439
      %v442 = vunpack.c.l.s4 1934713408
      %v443 = vunpack.c.0.s8 %v442
      %v444 = vperm.slane %v438, %v443
      %v446 = vunpack.c.l.s4 1934713408
      %v447 = vunpack.c.0.s8 %v446
      %v448 = vperm.slane %v440, %v447
      %v449 = vrot.slane %v436, 4
      %v450 = vsel %vm192, %v449, %v424
      %v451 = vrot.slane %v424, 4
      %v452 = vsel %vm192, %v436, %v451
      %v454 = vunpack.c.l.s4 1934713408
      %v455 = vunpack.c.0.s8 %v454
      %v456 = vperm.slane %v450, %v455
      %v458 = vunpack.c.l.s4 1934713408
      %v459 = vunpack.c.0.s8 %v458
      %v460 = vperm.slane %v452, %v459
      %v461 = vrot.slane %v444, 4
      %v462 = vsel %vm192, 0.0, %v461
      %v463 = vrot.slane %v448, 4
      %v464 = vsel %vm192, 0.0, %v463
      %v465 = vrot.slane %v456, 4
      %v466 = vsel %vm192, 0.0, %v465
      %v467 = vrot.slane %v460, 4
      %v468 = vsel %vm192, 0.0, %v467
      %v469 = vrot.slane %v400, 4
      %v470 = vsel %vm192, %v469, %v392
      %v471 = vrot.slane %v392, 4
      %v472 = vsel %vm192, %v400, %v471
      %v474 = vunpack.c.l.s4 1983009808
      %v475 = vunpack.c.0.s8 %v474
      %v476 = vperm.slane %v470, %v475
      %v478 = vunpack.c.l.s4 1983009808
      %v479 = vunpack.c.0.s8 %v478
      %v480 = vperm.slane %v472, %v479
      %v481 = vrot.slane %v404, 4
      %v482 = vsel %vm192, %v481, %v396
      %v483 = vrot.slane %v396, 4
      %v484 = vsel %vm192, %v404, %v483
      %v486 = vunpack.c.l.s4 1983009808
      %v487 = vunpack.c.0.s8 %v486
      %v488 = vperm.slane %v482, %v487
      %v490 = vunpack.c.l.s4 1983009808
      %v491 = vunpack.c.0.s8 %v490
      %v492 = vperm.slane %v484, %v491
      %v493 = vrot.slane %v488, 4
      %v494 = vsel %vm192, %v493, %v476
      %v495 = vrot.slane %v476, 4
      %v496 = vsel %vm192, %v488, %v495
      %v498 = vunpack.c.l.s4 1934713408
      %v499 = vunpack.c.0.s8 %v498
      %v500 = vperm.slane %v494, %v499
      %v502 = vunpack.c.l.s4 1934713408
      %v503 = vunpack.c.0.s8 %v502
      %v504 = vperm.slane %v496, %v503
      %v505 = vrot.slane %v492, 4
      %v506 = vsel %vm192, %v505, %v480
      %v507 = vrot.slane %v480, 4
      %v508 = vsel %vm192, %v492, %v507
      %v510 = vunpack.c.l.s4 1934713408
      %v511 = vunpack.c.0.s8 %v510
      %v512 = vperm.slane %v506, %v511
      %v514 = vunpack.c.l.s4 1934713408
      %v515 = vunpack.c.0.s8 %v514
      %v516 = vperm.slane %v508, %v515
      %v517 = vrot.slane %v500, 4
      %v518 = vsel %vm192, 0.0, %v517
      %v519 = vrot.slane %v504, 4
      %v520 = vsel %vm192, 0.0, %v519
      %v521 = vrot.slane %v512, 4
      %v522 = vsel %vm192, 0.0, %v521
      %v523 = vrot.slane %v516, 4
      %v524 = vsel %vm192, 0.0, %v523
      %526 = vrot.lane.b32.xlu0 %v462, 16
      %v527 = vpop.permute.xlu0 %526
      %530 = vrot.lane.b32.xlu0 %v448, 32
      %v531 = vpop.permute.xlu0 %530
      %534 = vrot.lane.b32.xlu0 %v464, 48
      %v535 = vpop.permute.xlu0 %534
      %538 = vrot.lane.b32.xlu0 %v456, 64
      %v539 = vpop.permute.xlu0 %538
      %542 = vrot.lane.b32.xlu0 %v466, 80
      %v543 = vpop.permute.xlu0 %542
      %546 = vrot.lane.b32.xlu0 %v460, 96
      %v547 = vpop.permute.xlu0 %546
      %550 = vrot.lane.b32.xlu0 %v468, 112
      %v551 = vpop.permute.xlu0 %550
      %554 = vrot.lane.b32.xlu0 %v518, 16
      %v555 = vpop.permute.xlu0 %554
      %558 = vrot.lane.b32.xlu0 %v504, 32
      %v559 = vpop.permute.xlu0 %558
      %562 = vrot.lane.b32.xlu0 %v520, 48
      %v563 = vpop.permute.xlu0 %562
      %566 = vrot.lane.b32.xlu0 %v512, 64
      %v567 = vpop.permute.xlu0 %566
      %570 = vrot.lane.b32.xlu0 %v522, 80
      %v571 = vpop.permute.xlu0 %570
      %574 = vrot.lane.b32.xlu0 %v516, 96
      %v575 = vpop.permute.xlu0 %574
      %578 = vrot.lane.b32.xlu0 %v524, 112
      %v579 = vpop.permute.xlu0 %578
      %v581 = vsel %vm360, %v444, %v527
      %v582 = vsel %vm362, %v581, %v531
      %v583 = vsel %vm364, %v582, %v535
      %v584 = vsel %vm366, %v583, %v539
      %v585 = vsel %vm368, %v584, %v543
      %v586 = vsel %vm370, %v585, %v547
      %v587 = vsel %vm372, %v586, %v551
      %v588 = vsel %vm360, %v500, %v555
      %v589 = vsel %vm362, %v588, %v559
      %v590 = vsel %vm364, %v589, %v563
      %v591 = vsel %vm366, %v590, %v567
      %v592 = vsel %vm368, %v591, %v571
      %v593 = vsel %vm370, %v592, %v575
      %v594 = vsel %vm372, %v593, %v579
      %595 = vrot.lane.b32.xlu0 %v179, 126
      %v596 = vpop.permute.xlu0 %595
      %597 = vrot.lane.b32.xlu0 %v180, 126
      %v598 = vpop.permute.xlu0 %597
      %599 = vrot.lane.b32.xlu0 %v182, 126
      %v600 = vpop.permute.xlu0 %599
      %601 = vrot.lane.b32.xlu0 %v183, 126
      %v602 = vpop.permute.xlu0 %601
      %603 = vrot.lane.b32.xlu0 %v185, 126
      %v604 = vpop.permute.xlu0 %603
      %605 = vrot.lane.b32.xlu0 %v186, 126
      %v606 = vpop.permute.xlu0 %605
      %607 = vrot.lane.b32.xlu0 %v188, 126
      %v608 = vpop.permute.xlu0 %607
      %609 = vrot.lane.b32.xlu0 %v189, 126
      %v610 = vpop.permute.xlu0 %609
      %v619 = vrot.slane %v604, 4
      %v620 = vsel %vm192, %v619, %v596
      %v621 = vrot.slane %v596, 4
      %v622 = vsel %vm192, %v604, %v621
      %v624 = vunpack.c.l.s4 1983009808
      %v625 = vunpack.c.0.s8 %v624
      %v626 = vperm.slane %v620, %v625
      %v628 = vunpack.c.l.s4 1983009808
      %v629 = vunpack.c.0.s8 %v628
      %v630 = vperm.slane %v622, %v629
      %v631 = vrot.slane %v608, 4
      %v632 = vsel %vm192, %v631, %v600
      %v633 = vrot.slane %v600, 4
      %v634 = vsel %vm192, %v608, %v633
      %v636 = vunpack.c.l.s4 1983009808
      %v637 = vunpack.c.0.s8 %v636
      %v638 = vperm.slane %v632, %v637
      %v640 = vunpack.c.l.s4 1983009808
      %v641 = vunpack.c.0.s8 %v640
      %v642 = vperm.slane %v634, %v641
      %v643 = vrot.slane %v638, 4
      %v644 = vsel %vm192, %v643, %v626
      %v645 = vrot.slane %v626, 4
      %v646 = vsel %vm192, %v638, %v645
      %v648 = vunpack.c.l.s4 1934713408
      %v649 = vunpack.c.0.s8 %v648
      %v650 = vperm.slane %v644, %v649
      %v652 = vunpack.c.l.s4 1934713408
      %v653 = vunpack.c.0.s8 %v652
      %v654 = vperm.slane %v646, %v653
      %v655 = vrot.slane %v642, 4
      %v656 = vsel %vm192, %v655, %v630
      %v657 = vrot.slane %v630, 4
      %v658 = vsel %vm192, %v642, %v657
      %v660 = vunpack.c.l.s4 1934713408
      %v661 = vunpack.c.0.s8 %v660
      %v662 = vperm.slane %v656, %v661
      %v664 = vunpack.c.l.s4 1934713408
      %v665 = vunpack.c.0.s8 %v664
      %v666 = vperm.slane %v658, %v665
      %v667 = vrot.slane %v650, 4
      %v668 = vsel %vm192, 0.0, %v667
      %v669 = vrot.slane %v654, 4
      %v670 = vsel %vm192, 0.0, %v669
      %v671 = vrot.slane %v662, 4
      %v672 = vsel %vm192, 0.0, %v671
      %v673 = vrot.slane %v666, 4
      %v674 = vsel %vm192, 0.0, %v673
      %v675 = vrot.slane %v606, 4
      %v676 = vsel %vm192, %v675, %v598
      %v677 = vrot.slane %v598, 4
      %v678 = vsel %vm192, %v606, %v677
      %v680 = vunpack.c.l.s4 1983009808
      %v681 = vunpack.c.0.s8 %v680
      %v682 = vperm.slane %v676, %v681
      %v684 = vunpack.c.l.s4 1983009808
      %v685 = vunpack.c.0.s8 %v684
      %v686 = vperm.slane %v678, %v685
      %v687 = vrot.slane %v610, 4
      %v688 = vsel %vm192, %v687, %v602
      %v689 = vrot.slane %v602, 4
      %v690 = vsel %vm192, %v610, %v689
      %v692 = vunpack.c.l.s4 1983009808
      %v693 = vunpack.c.0.s8 %v692
      %v694 = vperm.slane %v688, %v693
      %v696 = vunpack.c.l.s4 1983009808
      %v697 = vunpack.c.0.s8 %v696
      %v698 = vperm.slane %v690, %v697
      %v699 = vrot.slane %v694, 4
      %v700 = vsel %vm192, %v699, %v682
      %v701 = vrot.slane %v682, 4
      %v702 = vsel %vm192, %v694, %v701
      %v704 = vunpack.c.l.s4 1934713408
      %v705 = vunpack.c.0.s8 %v704
      %v706 = vperm.slane %v700, %v705
      %v708 = vunpack.c.l.s4 1934713408
      %v709 = vunpack.c.0.s8 %v708
      %v710 = vperm.slane %v702, %v709
      %v711 = vrot.slane %v698, 4
      %v712 = vsel %vm192, %v711, %v686
      %v713 = vrot.slane %v686, 4
      %v714 = vsel %vm192, %v698, %v713
      %v716 = vunpack.c.l.s4 1934713408
      %v717 = vunpack.c.0.s8 %v716
      %v718 = vperm.slane %v712, %v717
      %v720 = vunpack.c.l.s4 1934713408
      %v721 = vunpack.c.0.s8 %v720
      %v722 = vperm.slane %v714, %v721
      %v723 = vrot.slane %v706, 4
      %v724 = vsel %vm192, 0.0, %v723
      %v725 = vrot.slane %v710, 4
      %v726 = vsel %vm192, 0.0, %v725
      %v727 = vrot.slane %v718, 4
      %v728 = vsel %vm192, 0.0, %v727
      %v729 = vrot.slane %v722, 4
      %v730 = vsel %vm192, 0.0, %v729
      %732 = vrot.lane.b32.xlu0 %v668, 16
      %v733 = vpop.permute.xlu0 %732
      %736 = vrot.lane.b32.xlu0 %v654, 32
      %v737 = vpop.permute.xlu0 %736
      %740 = vrot.lane.b32.xlu0 %v670, 48
      %v741 = vpop.permute.xlu0 %740
      %744 = vrot.lane.b32.xlu0 %v662, 64
      %v745 = vpop.permute.xlu0 %744
      %748 = vrot.lane.b32.xlu0 %v672, 80
      %v749 = vpop.permute.xlu0 %748
      %752 = vrot.lane.b32.xlu0 %v666, 96
      %v753 = vpop.permute.xlu0 %752
      %756 = vrot.lane.b32.xlu0 %v674, 112
      %v757 = vpop.permute.xlu0 %756
      %760 = vrot.lane.b32.xlu0 %v724, 16
      %v761 = vpop.permute.xlu0 %760
      %764 = vrot.lane.b32.xlu0 %v710, 32
      %v765 = vpop.permute.xlu0 %764
      %768 = vrot.lane.b32.xlu0 %v726, 48
      %v769 = vpop.permute.xlu0 %768
      %772 = vrot.lane.b32.xlu0 %v718, 64
      %v773 = vpop.permute.xlu0 %772
      %776 = vrot.lane.b32.xlu0 %v728, 80
      %v777 = vpop.permute.xlu0 %776
      %780 = vrot.lane.b32.xlu0 %v722, 96
      %v781 = vpop.permute.xlu0 %780
      %784 = vrot.lane.b32.xlu0 %v730, 112
      %v785 = vpop.permute.xlu0 %784
      %v787 = vsel %vm360, %v650, %v733
      %v788 = vsel %vm362, %v787, %v737
      %v789 = vsel %vm364, %v788, %v741
      %v790 = vsel %vm366, %v789, %v745
      %v791 = vsel %vm368, %v790, %v749
      %v792 = vsel %vm370, %v791, %v753
      %v793 = vsel %vm372, %v792, %v757
      %v794 = vsel %vm360, %v706, %v761
      %v795 = vsel %vm362, %v794, %v765
      %v796 = vsel %vm364, %v795, %v769
      %v797 = vsel %vm366, %v796, %v773
      %v798 = vsel %vm368, %v797, %v777
      %v799 = vsel %vm370, %v798, %v781
      %v800 = vsel %vm372, %v799, %v785
      %vm805 = vcmask 1046528
      %v806 = vrot.slane %v179, 1
      %v807 = vrot.slane %v180, 1
      %v808 = vsel %vm805, %v806, %v807
      %v809 = vrot.slane %v181, 1
      %v810 = vsel %vm805, %v807, %v809
      %v811 = vrot.slane %v182, 1
      %v812 = vrot.slane %v183, 1
      %v813 = vsel %vm805, %v811, %v812
      %v814 = vrot.slane %v184, 1
      %v815 = vsel %vm805, %v812, %v814
      %v816 = vrot.slane %v185, 1
      %v817 = vrot.slane %v186, 1
      %v818 = vsel %vm805, %v816, %v817
      %v819 = vrot.slane %v187, 1
      %v820 = vsel %vm805, %v817, %v819
      %v821 = vrot.slane %v188, 1
      %v822 = vrot.slane %v189, 1
      %v823 = vsel %vm805, %v821, %v822
      %v824 = vrot.slane %v190, 1
      %v825 = vsel %vm805, %v822, %v824
      %v834 = vrot.slane %v818, 4
      %v835 = vsel %vm192, %v834, %v808
      %v836 = vrot.slane %v808, 4
      %v837 = vsel %vm192, %v818, %v836
      %v839 = vunpack.c.l.s4 1983009808
      %v840 = vunpack.c.0.s8 %v839
      %v841 = vperm.slane %v835, %v840
      %v843 = vunpack.c.l.s4 1983009808
      %v844 = vunpack.c.0.s8 %v843
      %v845 = vperm.slane %v837, %v844
      %v846 = vrot.slane %v823, 4
      %v847 = vsel %vm192, %v846, %v813
      %v848 = vrot.slane %v813, 4
      %v849 = vsel %vm192, %v823, %v848
      %v851 = vunpack.c.l.s4 1983009808
      %v852 = vunpack.c.0.s8 %v851
      %v853 = vperm.slane %v847, %v852
      %v855 = vunpack.c.l.s4 1983009808
      %v856 = vunpack.c.0.s8 %v855
      %v857 = vperm.slane %v849, %v856
      %v858 = vrot.slane %v853, 4
      %v859 = vsel %vm192, %v858, %v841
      %v860 = vrot.slane %v841, 4
      %v861 = vsel %vm192, %v853, %v860
      %v863 = vunpack.c.l.s4 1934713408
      %v864 = vunpack.c.0.s8 %v863
      %v865 = vperm.slane %v859, %v864
      %v867 = vunpack.c.l.s4 1934713408
      %v868 = vunpack.c.0.s8 %v867
      %v869 = vperm.slane %v861, %v868
      %v870 = vrot.slane %v857, 4
      %v871 = vsel %vm192, %v870, %v845
      %v872 = vrot.slane %v845, 4
      %v873 = vsel %vm192, %v857, %v872
      %v875 = vunpack.c.l.s4 1934713408
      %v876 = vunpack.c.0.s8 %v875
      %v877 = vperm.slane %v871, %v876
      %v879 = vunpack.c.l.s4 1934713408
      %v880 = vunpack.c.0.s8 %v879
      %v881 = vperm.slane %v873, %v880
      %v882 = vrot.slane %v865, 4
      %v883 = vsel %vm192, 0.0, %v882
      %v884 = vrot.slane %v869, 4
      %v885 = vsel %vm192, 0.0, %v884
      %v886 = vrot.slane %v877, 4
      %v887 = vsel %vm192, 0.0, %v886
      %v888 = vrot.slane %v881, 4
      %v889 = vsel %vm192, 0.0, %v888
      %v890 = vrot.slane %v820, 4
      %v891 = vsel %vm192, %v890, %v810
      %v892 = vrot.slane %v810, 4
      %v893 = vsel %vm192, %v820, %v892
      %v895 = vunpack.c.l.s4 1983009808
      %v896 = vunpack.c.0.s8 %v895
      %v897 = vperm.slane %v891, %v896
      %v899 = vunpack.c.l.s4 1983009808
      %v900 = vunpack.c.0.s8 %v899
      %v901 = vperm.slane %v893, %v900
      %v902 = vrot.slane %v825, 4
      %v903 = vsel %vm192, %v902, %v815
      %v904 = vrot.slane %v815, 4
      %v905 = vsel %vm192, %v825, %v904
      %v907 = vunpack.c.l.s4 1983009808
      %v908 = vunpack.c.0.s8 %v907
      %v909 = vperm.slane %v903, %v908
      %v911 = vunpack.c.l.s4 1983009808
      %v912 = vunpack.c.0.s8 %v911
      %v913 = vperm.slane %v905, %v912
      %v914 = vrot.slane %v909, 4
      %v915 = vsel %vm192, %v914, %v897
      %v916 = vrot.slane %v897, 4
      %v917 = vsel %vm192, %v909, %v916
      %v919 = vunpack.c.l.s4 1934713408
      %v920 = vunpack.c.0.s8 %v919
      %v921 = vperm.slane %v915, %v920
      %v923 = vunpack.c.l.s4 1934713408
      %v924 = vunpack.c.0.s8 %v923
      %v925 = vperm.slane %v917, %v924
      %v926 = vrot.slane %v913, 4
      %v927 = vsel %vm192, %v926, %v901
      %v928 = vrot.slane %v901, 4
      %v929 = vsel %vm192, %v913, %v928
      %v931 = vunpack.c.l.s4 1934713408
      %v932 = vunpack.c.0.s8 %v931
      %v933 = vperm.slane %v927, %v932
      %v935 = vunpack.c.l.s4 1934713408
      %v936 = vunpack.c.0.s8 %v935
      %v937 = vperm.slane %v929, %v936
      %v938 = vrot.slane %v921, 4
      %v939 = vsel %vm192, 0.0, %v938
      %v940 = vrot.slane %v925, 4
      %v941 = vsel %vm192, 0.0, %v940
      %v942 = vrot.slane %v933, 4
      %v943 = vsel %vm192, 0.0, %v942
      %v944 = vrot.slane %v937, 4
      %v945 = vsel %vm192, 0.0, %v944
      %947 = vrot.lane.b32.xlu0 %v883, 16
      %v948 = vpop.permute.xlu0 %947
      %951 = vrot.lane.b32.xlu0 %v869, 32
      %v952 = vpop.permute.xlu0 %951
      %955 = vrot.lane.b32.xlu0 %v885, 48
      %v956 = vpop.permute.xlu0 %955
      %959 = vrot.lane.b32.xlu0 %v877, 64
      %v960 = vpop.permute.xlu0 %959
      %963 = vrot.lane.b32.xlu0 %v887, 80
      %v964 = vpop.permute.xlu0 %963
      %967 = vrot.lane.b32.xlu0 %v881, 96
      %v968 = vpop.permute.xlu0 %967
      %971 = vrot.lane.b32.xlu0 %v889, 112
      %v972 = vpop.permute.xlu0 %971
      %975 = vrot.lane.b32.xlu0 %v939, 16
      %v976 = vpop.permute.xlu0 %975
      %979 = vrot.lane.b32.xlu0 %v925, 32
      %v980 = vpop.permute.xlu0 %979
      %983 = vrot.lane.b32.xlu0 %v941, 48
      %v984 = vpop.permute.xlu0 %983
      %987 = vrot.lane.b32.xlu0 %v933, 64
      %v988 = vpop.permute.xlu0 %987
      %991 = vrot.lane.b32.xlu0 %v943, 80
      %v992 = vpop.permute.xlu0 %991
      %995 = vrot.lane.b32.xlu0 %v937, 96
      %v996 = vpop.permute.xlu0 %995
      %999 = vrot.lane.b32.xlu0 %v945, 112
      %v1000 = vpop.permute.xlu0 %999
      %v1002 = vsel %vm360, %v865, %v948
      %v1003 = vsel %vm362, %v1002, %v952
      %v1004 = vsel %vm364, %v1003, %v956
      %v1005 = vsel %vm366, %v1004, %v960
      %v1006 = vsel %vm368, %v1005, %v964
      %v1007 = vsel %vm370, %v1006, %v968
      %v1008 = vsel %vm372, %v1007, %v972
      %v1009 = vsel %vm360, %v921, %v976
      %v1010 = vsel %vm362, %v1009, %v980
      %v1011 = vsel %vm364, %v1010, %v984
      %v1012 = vsel %vm366, %v1011, %v988
      %v1013 = vsel %vm368, %v1012, %v992
      %v1014 = vsel %vm370, %v1013, %v996
      %v1015 = vsel %vm372, %v1014, %v1000
      %1016 = vrot.lane.b32.xlu0 %v808, 127
      %v1017 = vpop.permute.xlu0 %1016
      %1018 = vrot.lane.b32.xlu0 %v810, 127
      %v1019 = vpop.permute.xlu0 %1018
      %1020 = vrot.lane.b32.xlu0 %v813, 127
      %v1021 = vpop.permute.xlu0 %1020
      %1022 = vrot.lane.b32.xlu0 %v815, 127
      %v1023 = vpop.permute.xlu0 %1022
      %1024 = vrot.lane.b32.xlu0 %v818, 127
      %v1025 = vpop.permute.xlu0 %1024
      %1026 = vrot.lane.b32.xlu0 %v820, 127
      %v1027 = vpop.permute.xlu0 %1026
      %1028 = vrot.lane.b32.xlu0 %v823, 127
      %v1029 = vpop.permute.xlu0 %1028
      %1030 = vrot.lane.b32.xlu0 %v825, 127
      %v1031 = vpop.permute.xlu0 %1030
      %v1040 = vrot.slane %v1025, 4
      %v1041 = vsel %vm192, %v1040, %v1017
      %v1042 = vrot.slane %v1017, 4
      %v1043 = vsel %vm192, %v1025, %v1042
      %v1045 = vunpack.c.l.s4 1983009808
      %v1046 = vunpack.c.0.s8 %v1045
      %v1047 = vperm.slane %v1041, %v1046
      %v1049 = vunpack.c.l.s4 1983009808
      %v1050 = vunpack.c.0.s8 %v1049
      %v1051 = vperm.slane %v1043, %v1050
      %v1052 = vrot.slane %v1029, 4
      %v1053 = vsel %vm192, %v1052, %v1021
      %v1054 = vrot.slane %v1021, 4
      %v1055 = vsel %vm192, %v1029, %v1054
      %v1057 = vunpack.c.l.s4 1983009808
      %v1058 = vunpack.c.0.s8 %v1057
      %v1059 = vperm.slane %v1053, %v1058
      %v1061 = vunpack.c.l.s4 1983009808
      %v1062 = vunpack.c.0.s8 %v1061
      %v1063 = vperm.slane %v1055, %v1062
      %v1064 = vrot.slane %v1059, 4
      %v1065 = vsel %vm192, %v1064, %v1047
      %v1066 = vrot.slane %v1047, 4
      %v1067 = vsel %vm192, %v1059, %v1066
      %v1069 = vunpack.c.l.s4 1934713408
      %v1070 = vunpack.c.0.s8 %v1069
      %v1071 = vperm.slane %v1065, %v1070
      %v1073 = vunpack.c.l.s4 1934713408
      %v1074 = vunpack.c.0.s8 %v1073
      %v1075 = vperm.slane %v1067, %v1074
      %v1076 = vrot.slane %v1063, 4
      %v1077 = vsel %vm192, %v1076, %v1051
      %v1078 = vrot.slane %v1051, 4
      %v1079 = vsel %vm192, %v1063, %v1078
      %v1081 = vunpack.c.l.s4 1934713408
      %v1082 = vunpack.c.0.s8 %v1081
      %v1083 = vperm.slane %v1077, %v1082
      %v1085 = vunpack.c.l.s4 1934713408
      %v1086 = vunpack.c.0.s8 %v1085
      %v1087 = vperm.slane %v1079, %v1086
      %v1088 = vrot.slane %v1071, 4
      %v1089 = vsel %vm192, 0.0, %v1088
      %v1090 = vrot.slane %v1075, 4
      %v1091 = vsel %vm192, 0.0, %v1090
      %v1092 = vrot.slane %v1083, 4
      %v1093 = vsel %vm192, 0.0, %v1092
      %v1094 = vrot.slane %v1087, 4
      %v1095 = vsel %vm192, 0.0, %v1094
      %v1096 = vrot.slane %v1027, 4
      %v1097 = vsel %vm192, %v1096, %v1019
      %v1098 = vrot.slane %v1019, 4
      %v1099 = vsel %vm192, %v1027, %v1098
      %v1101 = vunpack.c.l.s4 1983009808
      %v1102 = vunpack.c.0.s8 %v1101
      %v1103 = vperm.slane %v1097, %v1102
      %v1105 = vunpack.c.l.s4 1983009808
      %v1106 = vunpack.c.0.s8 %v1105
      %v1107 = vperm.slane %v1099, %v1106
      %v1108 = vrot.slane %v1031, 4
      %v1109 = vsel %vm192, %v1108, %v1023
      %v1110 = vrot.slane %v1023, 4
      %v1111 = vsel %vm192, %v1031, %v1110
      %v1113 = vunpack.c.l.s4 1983009808
      %v1114 = vunpack.c.0.s8 %v1113
      %v1115 = vperm.slane %v1109, %v1114
      %v1117 = vunpack.c.l.s4 1983009808
      %v1118 = vunpack.c.0.s8 %v1117
      %v1119 = vperm.slane %v1111, %v1118
      %v1120 = vrot.slane %v1115, 4
      %v1121 = vsel %vm192, %v1120, %v1103
      %v1122 = vrot.slane %v1103, 4
      %v1123 = vsel %vm192, %v1115, %v1122
      %v1125 = vunpack.c.l.s4 1934713408
      %v1126 = vunpack.c.0.s8 %v1125
      %v1127 = vperm.slane %v1121, %v1126
      %v1129 = vunpack.c.l.s4 1934713408
      %v1130 = vunpack.c.0.s8 %v1129
      %v1131 = vperm.slane %v1123, %v1130
      %v1132 = vrot.slane %v1119, 4
      %v1133 = vsel %vm192, %v1132, %v1107
      %v1134 = vrot.slane %v1107, 4
      %v1135 = vsel %vm192, %v1119, %v1134
      %v1137 = vunpack.c.l.s4 1934713408
      %v1138 = vunpack.c.0.s8 %v1137
      %v1139 = vperm.slane %v1133, %v1138
      %v1141 = vunpack.c.l.s4 1934713408
      %v1142 = vunpack.c.0.s8 %v1141
      %v1143 = vperm.slane %v1135, %v1142
      %v1144 = vrot.slane %v1127, 4
      %v1145 = vsel %vm192, 0.0, %v1144
      %v1146 = vrot.slane %v1131, 4
      %v1147 = vsel %vm192, 0.0, %v1146
      %v1148 = vrot.slane %v1139, 4
      %v1149 = vsel %vm192, 0.0, %v1148
      %v1150 = vrot.slane %v1143, 4
      %v1151 = vsel %vm192, 0.0, %v1150
      %1153 = vrot.lane.b32.xlu0 %v1089, 16
      %v1154 = vpop.permute.xlu0 %1153
      %1157 = vrot.lane.b32.xlu0 %v1075, 32
      %v1158 = vpop.permute.xlu0 %1157
      %1161 = vrot.lane.b32.xlu0 %v1091, 48
      %v1162 = vpop.permute.xlu0 %1161
      %1165 = vrot.lane.b32.xlu0 %v1083, 64
      %v1166 = vpop.permute.xlu0 %1165
      %1169 = vrot.lane.b32.xlu0 %v1093, 80
      %v1170 = vpop.permute.xlu0 %1169
      %1173 = vrot.lane.b32.xlu0 %v1087, 96
      %v1174 = vpop.permute.xlu0 %1173
      %1177 = vrot.lane.b32.xlu0 %v1095, 112
      %v1178 = vpop.permute.xlu0 %1177
      %1181 = vrot.lane.b32.xlu0 %v1145, 16
      %v1182 = vpop.permute.xlu0 %1181
      %1185 = vrot.lane.b32.xlu0 %v1131, 32
      %v1186 = vpop.permute.xlu0 %1185
      %1189 = vrot.lane.b32.xlu0 %v1147, 48
      %v1190 = vpop.permute.xlu0 %1189
      %1193 = vrot.lane.b32.xlu0 %v1139, 64
      %v1194 = vpop.permute.xlu0 %1193
      %1197 = vrot.lane.b32.xlu0 %v1149, 80
      %v1198 = vpop.permute.xlu0 %1197
      %1201 = vrot.lane.b32.xlu0 %v1143, 96
      %v1202 = vpop.permute.xlu0 %1201
      %1205 = vrot.lane.b32.xlu0 %v1151, 112
      %v1206 = vpop.permute.xlu0 %1205
      %v1208 = vsel %vm360, %v1071, %v1154
      %v1209 = vsel %vm362, %v1208, %v1158
      %v1210 = vsel %vm364, %v1209, %v1162
      %v1211 = vsel %vm366, %v1210, %v1166
      %v1212 = vsel %vm368, %v1211, %v1170
      %v1213 = vsel %vm370, %v1212, %v1174
      %v1214 = vsel %vm372, %v1213, %v1178
      %v1215 = vsel %vm360, %v1127, %v1182
      %v1216 = vsel %vm362, %v1215, %v1186
      %v1217 = vsel %vm364, %v1216, %v1190
      %v1218 = vsel %vm366, %v1217, %v1194
      %v1219 = vsel %vm368, %v1218, %v1198
      %v1220 = vsel %vm370, %v1219, %v1202
      %v1221 = vsel %vm372, %v1220, %v1206
      %1222 = vrot.lane.b32.xlu0 %v808, 126
      %v1223 = vpop.permute.xlu0 %1222
      %1224 = vrot.lane.b32.xlu0 %v810, 126
      %v1225 = vpop.permute.xlu0 %1224
      %1226 = vrot.lane.b32.xlu0 %v813, 126
      %v1227 = vpop.permute.xlu0 %1226
      %1228 = vrot.lane.b32.xlu0 %v815, 126
      %v1229 = vpop.permute.xlu0 %1228
      %1230 = vrot.lane.b32.xlu0 %v818, 126
      %v1231 = vpop.permute.xlu0 %1230
      %1232 = vrot.lane.b32.xlu0 %v820, 126
      %v1233 = vpop.permute.xlu0 %1232
      %1234 = vrot.lane.b32.xlu0 %v823, 126
      %v1235 = vpop.permute.xlu0 %1234
      %1236 = vrot.lane.b32.xlu0 %v825, 126
      %v1237 = vpop.permute.xlu0 %1236
      %v1246 = vrot.slane %v1231, 4
      %v1247 = vsel %vm192, %v1246, %v1223
      %v1248 = vrot.slane %v1223, 4
      %v1249 = vsel %vm192, %v1231, %v1248
      %v1251 = vunpack.c.l.s4 1983009808
      %v1252 = vunpack.c.0.s8 %v1251
      %v1253 = vperm.slane %v1247, %v1252
      %v1255 = vunpack.c.l.s4 1983009808
      %v1256 = vunpack.c.0.s8 %v1255
      %v1257 = vperm.slane %v1249, %v1256
      %v1258 = vrot.slane %v1235, 4
      %v1259 = vsel %vm192, %v1258, %v1227
      %v1260 = vrot.slane %v1227, 4
      %v1261 = vsel %vm192, %v1235, %v1260
      %v1263 = vunpack.c.l.s4 1983009808
      %v1264 = vunpack.c.0.s8 %v1263
      %v1265 = vperm.slane %v1259, %v1264
      %v1267 = vunpack.c.l.s4 1983009808
      %v1268 = vunpack.c.0.s8 %v1267
      %v1269 = vperm.slane %v1261, %v1268
      %v1270 = vrot.slane %v1265, 4
      %v1271 = vsel %vm192, %v1270, %v1253
      %v1272 = vrot.slane %v1253, 4
      %v1273 = vsel %vm192, %v1265, %v1272
      %v1275 = vunpack.c.l.s4 1934713408
      %v1276 = vunpack.c.0.s8 %v1275
      %v1277 = vperm.slane %v1271, %v1276
      %v1279 = vunpack.c.l.s4 1934713408
      %v1280 = vunpack.c.0.s8 %v1279
      %v1281 = vperm.slane %v1273, %v1280
      %v1282 = vrot.slane %v1269, 4
      %v1283 = vsel %vm192, %v1282, %v1257
      %v1284 = vrot.slane %v1257, 4
      %v1285 = vsel %vm192, %v1269, %v1284
      %v1287 = vunpack.c.l.s4 1934713408
      %v1288 = vunpack.c.0.s8 %v1287
      %v1289 = vperm.slane %v1283, %v1288
      %v1291 = vunpack.c.l.s4 1934713408
      %v1292 = vunpack.c.0.s8 %v1291
      %v1293 = vperm.slane %v1285, %v1292
      %v1294 = vrot.slane %v1277, 4
      %v1295 = vsel %vm192, 0.0, %v1294
      %v1296 = vrot.slane %v1281, 4
      %v1297 = vsel %vm192, 0.0, %v1296
      %v1298 = vrot.slane %v1289, 4
      %v1299 = vsel %vm192, 0.0, %v1298
      %v1300 = vrot.slane %v1293, 4
      %v1301 = vsel %vm192, 0.0, %v1300
      %v1302 = vrot.slane %v1233, 4
      %v1303 = vsel %vm192, %v1302, %v1225
      %v1304 = vrot.slane %v1225, 4
      %v1305 = vsel %vm192, %v1233, %v1304
      %v1307 = vunpack.c.l.s4 1983009808
      %v1308 = vunpack.c.0.s8 %v1307
      %v1309 = vperm.slane %v1303, %v1308
      %v1311 = vunpack.c.l.s4 1983009808
      %v1312 = vunpack.c.0.s8 %v1311
      %v1313 = vperm.slane %v1305, %v1312
      %v1314 = vrot.slane %v1237, 4
      %v1315 = vsel %vm192, %v1314, %v1229
      %v1316 = vrot.slane %v1229, 4
      %v1317 = vsel %vm192, %v1237, %v1316
      %v1319 = vunpack.c.l.s4 1983009808
      %v1320 = vunpack.c.0.s8 %v1319
      %v1321 = vperm.slane %v1315, %v1320
      %v1323 = vunpack.c.l.s4 1983009808
      %v1324 = vunpack.c.0.s8 %v1323
      %v1325 = vperm.slane %v1317, %v1324
      %v1326 = vrot.slane %v1321, 4
      %v1327 = vsel %vm192, %v1326, %v1309
      %v1328 = vrot.slane %v1309, 4
      %v1329 = vsel %vm192, %v1321, %v1328
      %v1331 = vunpack.c.l.s4 1934713408
      %v1332 = vunpack.c.0.s8 %v1331
      %v1333 = vperm.slane %v1327, %v1332
      %v1335 = vunpack.c.l.s4 1934713408
      %v1336 = vunpack.c.0.s8 %v1335
      %v1337 = vperm.slane %v1329, %v1336
      %v1338 = vrot.slane %v1325, 4
      %v1339 = vsel %vm192, %v1338, %v1313
      %v1340 = vrot.slane %v1313, 4
      %v1341 = vsel %vm192, %v1325, %v1340
      %v1343 = vunpack.c.l.s4 1934713408
      %v1344 = vunpack.c.0.s8 %v1343
      %v1345 = vperm.slane %v1339, %v1344
      %v1347 = vunpack.c.l.s4 1934713408
      %v1348 = vunpack.c.0.s8 %v1347
      %v1349 = vperm.slane %v1341, %v1348
      %v1350 = vrot.slane %v1333, 4
      %v1351 = vsel %vm192, 0.0, %v1350
      %v1352 = vrot.slane %v1337, 4
      %v1353 = vsel %vm192, 0.0, %v1352
      %v1354 = vrot.slane %v1345, 4
      %v1355 = vsel %vm192, 0.0, %v1354
      %v1356 = vrot.slane %v1349, 4
      %v1357 = vsel %vm192, 0.0, %v1356
      %1359 = vrot.lane.b32.xlu0 %v1295, 16
      %v1360 = vpop.permute.xlu0 %1359
      %1363 = vrot.lane.b32.xlu0 %v1281, 32
      %v1364 = vpop.permute.xlu0 %1363
      %1367 = vrot.lane.b32.xlu0 %v1297, 48
      %v1368 = vpop.permute.xlu0 %1367
      %1371 = vrot.lane.b32.xlu0 %v1289, 64
      %v1372 = vpop.permute.xlu0 %1371
      %1375 = vrot.lane.b32.xlu0 %v1299, 80
      %v1376 = vpop.permute.xlu0 %1375
      %1379 = vrot.lane.b32.xlu0 %v1293, 96
      %v1380 = vpop.permute.xlu0 %1379
      %1383 = vrot.lane.b32.xlu0 %v1301, 112
      %v1384 = vpop.permute.xlu0 %1383
      %1387 = vrot.lane.b32.xlu0 %v1351, 16
      %v1388 = vpop.permute.xlu0 %1387
      %1391 = vrot.lane.b32.xlu0 %v1337, 32
      %v1392 = vpop.permute.xlu0 %1391
      %1395 = vrot.lane.b32.xlu0 %v1353, 48
      %v1396 = vpop.permute.xlu0 %1395
      %1399 = vrot.lane.b32.xlu0 %v1345, 64
      %v1400 = vpop.permute.xlu0 %1399
      %1403 = vrot.lane.b32.xlu0 %v1355, 80
      %v1404 = vpop.permute.xlu0 %1403
      %1407 = vrot.lane.b32.xlu0 %v1349, 96
      %v1408 = vpop.permute.xlu0 %1407
      %1411 = vrot.lane.b32.xlu0 %v1357, 112
      %v1412 = vpop.permute.xlu0 %1411
      %v1414 = vsel %vm360, %v1277, %v1360
      %v1415 = vsel %vm362, %v1414, %v1364
      %v1416 = vsel %vm364, %v1415, %v1368
      %v1417 = vsel %vm366, %v1416, %v1372
      %v1418 = vsel %vm368, %v1417, %v1376
      %v1419 = vsel %vm370, %v1418, %v1380
      %v1420 = vsel %vm372, %v1419, %v1384
      %v1421 = vsel %vm360, %v1333, %v1388
      %v1422 = vsel %vm362, %v1421, %v1392
      %v1423 = vsel %vm364, %v1422, %v1396
      %v1424 = vsel %vm366, %v1423, %v1400
      %v1425 = vsel %vm368, %v1424, %v1404
      %v1426 = vsel %vm370, %v1425, %v1408
      %v1427 = vsel %vm372, %v1426, %v1412
      %vm1428 = vcmask 1045504
      %v1429 = vrot.slane %v179, 2
      %v1430 = vrot.slane %v180, 2
      %v1431 = vsel %vm1428, %v1429, %v1430
      %v1432 = vrot.slane %v181, 2
      %v1433 = vsel %vm1428, %v1430, %v1432
      %v1434 = vrot.slane %v182, 2
      %v1435 = vrot.slane %v183, 2
      %v1436 = vsel %vm1428, %v1434, %v1435
      %v1437 = vrot.slane %v184, 2
      %v1438 = vsel %vm1428, %v1435, %v1437
      %v1439 = vrot.slane %v185, 2
      %v1440 = vrot.slane %v186, 2
      %v1441 = vsel %vm1428, %v1439, %v1440
      %v1442 = vrot.slane %v187, 2
      %v1443 = vsel %vm1428, %v1440, %v1442
      %v1444 = vrot.slane %v188, 2
      %v1445 = vrot.slane %v189, 2
      %v1446 = vsel %vm1428, %v1444, %v1445
      %v1447 = vrot.slane %v190, 2
      %v1448 = vsel %vm1428, %v1445, %v1447
      %v1457 = vrot.slane %v1441, 4
      %v1458 = vsel %vm192, %v1457, %v1431
      %v1459 = vrot.slane %v1431, 4
      %v1460 = vsel %vm192, %v1441, %v1459
      %v1462 = vunpack.c.l.s4 1983009808
      %v1463 = vunpack.c.0.s8 %v1462
      %v1464 = vperm.slane %v1458, %v1463
      %v1466 = vunpack.c.l.s4 1983009808
      %v1467 = vunpack.c.0.s8 %v1466
      %v1468 = vperm.slane %v1460, %v1467
      %v1469 = vrot.slane %v1446, 4
      %v1470 = vsel %vm192, %v1469, %v1436
      %v1471 = vrot.slane %v1436, 4
      %v1472 = vsel %vm192, %v1446, %v1471
      %v1474 = vunpack.c.l.s4 1983009808
      %v1475 = vunpack.c.0.s8 %v1474
      %v1476 = vperm.slane %v1470, %v1475
      %v1478 = vunpack.c.l.s4 1983009808
      %v1479 = vunpack.c.0.s8 %v1478
      %v1480 = vperm.slane %v1472, %v1479
      %v1481 = vrot.slane %v1476, 4
      %v1482 = vsel %vm192, %v1481, %v1464
      %v1483 = vrot.slane %v1464, 4
      %v1484 = vsel %vm192, %v1476, %v1483
      %v1486 = vunpack.c.l.s4 1934713408
      %v1487 = vunpack.c.0.s8 %v1486
      %v1488 = vperm.slane %v1482, %v1487
      %v1490 = vunpack.c.l.s4 1934713408
      %v1491 = vunpack.c.0.s8 %v1490
      %v1492 = vperm.slane %v1484, %v1491
      %v1493 = vrot.slane %v1480, 4
      %v1494 = vsel %vm192, %v1493, %v1468
      %v1495 = vrot.slane %v1468, 4
      %v1496 = vsel %vm192, %v1480, %v1495
      %v1498 = vunpack.c.l.s4 1934713408
      %v1499 = vunpack.c.0.s8 %v1498
      %v1500 = vperm.slane %v1494, %v1499
      %v1502 = vunpack.c.l.s4 1934713408
      %v1503 = vunpack.c.0.s8 %v1502
      %v1504 = vperm.slane %v1496, %v1503
      %v1505 = vrot.slane %v1488, 4
      %v1506 = vsel %vm192, 0.0, %v1505
      %v1507 = vrot.slane %v1492, 4
      %v1508 = vsel %vm192, 0.0, %v1507
      %v1509 = vrot.slane %v1500, 4
      %v1510 = vsel %vm192, 0.0, %v1509
      %v1511 = vrot.slane %v1504, 4
      %v1512 = vsel %vm192, 0.0, %v1511
      %v1513 = vrot.slane %v1443, 4
      %v1514 = vsel %vm192, %v1513, %v1433
      %v1515 = vrot.slane %v1433, 4
      %v1516 = vsel %vm192, %v1443, %v1515
      %v1518 = vunpack.c.l.s4 1983009808
      %v1519 = vunpack.c.0.s8 %v1518
      %v1520 = vperm.slane %v1514, %v1519
      %v1522 = vunpack.c.l.s4 1983009808
      %v1523 = vunpack.c.0.s8 %v1522
      %v1524 = vperm.slane %v1516, %v1523
      %v1525 = vrot.slane %v1448, 4
      %v1526 = vsel %vm192, %v1525, %v1438
      %v1527 = vrot.slane %v1438, 4
      %v1528 = vsel %vm192, %v1448, %v1527
      %v1530 = vunpack.c.l.s4 1983009808
      %v1531 = vunpack.c.0.s8 %v1530
      %v1532 = vperm.slane %v1526, %v1531
      %v1534 = vunpack.c.l.s4 1983009808
      %v1535 = vunpack.c.0.s8 %v1534
      %v1536 = vperm.slane %v1528, %v1535
      %v1537 = vrot.slane %v1532, 4
      %v1538 = vsel %vm192, %v1537, %v1520
      %v1539 = vrot.slane %v1520, 4
      %v1540 = vsel %vm192, %v1532, %v1539
      %v1542 = vunpack.c.l.s4 1934713408
      %v1543 = vunpack.c.0.s8 %v1542
      %v1544 = vperm.slane %v1538, %v1543
      %v1546 = vunpack.c.l.s4 1934713408
      %v1547 = vunpack.c.0.s8 %v1546
      %v1548 = vperm.slane %v1540, %v1547
      %v1549 = vrot.slane %v1536, 4
      %v1550 = vsel %vm192, %v1549, %v1524
      %v1551 = vrot.slane %v1524, 4
      %v1552 = vsel %vm192, %v1536, %v1551
      %v1554 = vunpack.c.l.s4 1934713408
      %v1555 = vunpack.c.0.s8 %v1554
      %v1556 = vperm.slane %v1550, %v1555
      %v1558 = vunpack.c.l.s4 1934713408
      %v1559 = vunpack.c.0.s8 %v1558
      %v1560 = vperm.slane %v1552, %v1559
      %v1561 = vrot.slane %v1544, 4
      %v1562 = vsel %vm192, 0.0, %v1561
      %v1563 = vrot.slane %v1548, 4
      %v1564 = vsel %vm192, 0.0, %v1563
      %v1565 = vrot.slane %v1556, 4
      %v1566 = vsel %vm192, 0.0, %v1565
      %v1567 = vrot.slane %v1560, 4
      %v1568 = vsel %vm192, 0.0, %v1567
      %1570 = vrot.lane.b32.xlu0 %v1506, 16
      %v1571 = vpop.permute.xlu0 %1570
      %1574 = vrot.lane.b32.xlu0 %v1492, 32
      %v1575 = vpop.permute.xlu0 %1574
      %1578 = vrot.lane.b32.xlu0 %v1508, 48
      %v1579 = vpop.permute.xlu0 %1578
      %1582 = vrot.lane.b32.xlu0 %v1500, 64
      %v1583 = vpop.permute.xlu0 %1582
      %1586 = vrot.lane.b32.xlu0 %v1510, 80
      %v1587 = vpop.permute.xlu0 %1586
      %1590 = vrot.lane.b32.xlu0 %v1504, 96
      %v1591 = vpop.permute.xlu0 %1590
      %1594 = vrot.lane.b32.xlu0 %v1512, 112
      %v1595 = vpop.permute.xlu0 %1594
      %1598 = vrot.lane.b32.xlu0 %v1562, 16
      %v1599 = vpop.permute.xlu0 %1598
      %1602 = vrot.lane.b32.xlu0 %v1548, 32
      %v1603 = vpop.permute.xlu0 %1602
      %1606 = vrot.lane.b32.xlu0 %v1564, 48
      %v1607 = vpop.permute.xlu0 %1606
      %1610 = vrot.lane.b32.xlu0 %v1556, 64
      %v1611 = vpop.permute.xlu0 %1610
      %1614 = vrot.lane.b32.xlu0 %v1566, 80
      %v1615 = vpop.permute.xlu0 %1614
      %1618 = vrot.lane.b32.xlu0 %v1560, 96
      %v1619 = vpop.permute.xlu0 %1618
      %1622 = vrot.lane.b32.xlu0 %v1568, 112
      %v1623 = vpop.permute.xlu0 %1622
      %v1625 = vsel %vm360, %v1488, %v1571
      %v1626 = vsel %vm362, %v1625, %v1575
      %v1627 = vsel %vm364, %v1626, %v1579
      %v1628 = vsel %vm366, %v1627, %v1583
      %v1629 = vsel %vm368, %v1628, %v1587
      %v1630 = vsel %vm370, %v1629, %v1591
      %v1631 = vsel %vm372, %v1630, %v1595
      %v1632 = vsel %vm360, %v1544, %v1599
      %v1633 = vsel %vm362, %v1632, %v1603
      %v1634 = vsel %vm364, %v1633, %v1607
      %v1635 = vsel %vm366, %v1634, %v1611
      %v1636 = vsel %vm368, %v1635, %v1615
      %v1637 = vsel %vm370, %v1636, %v1619
      %v1638 = vsel %vm372, %v1637, %v1623
      %1639 = vrot.lane.b32.xlu0 %v1431, 127
      %v1640 = vpop.permute.xlu0 %1639
      %1641 = vrot.lane.b32.xlu0 %v1433, 127
      %v1642 = vpop.permute.xlu0 %1641
      %1643 = vrot.lane.b32.xlu0 %v1436, 127
      %v1644 = vpop.permute.xlu0 %1643
      %1645 = vrot.lane.b32.xlu0 %v1438, 127
      %v1646 = vpop.permute.xlu0 %1645
      %1647 = vrot.lane.b32.xlu0 %v1441, 127
      %v1648 = vpop.permute.xlu0 %1647
      %1649 = vrot.lane.b32.xlu0 %v1443, 127
      %v1650 = vpop.permute.xlu0 %1649
      %1651 = vrot.lane.b32.xlu0 %v1446, 127
      %v1652 = vpop.permute.xlu0 %1651
      %1653 = vrot.lane.b32.xlu0 %v1448, 127
      %v1654 = vpop.permute.xlu0 %1653
      %v1663 = vrot.slane %v1648, 4
      %v1664 = vsel %vm192, %v1663, %v1640
      %v1665 = vrot.slane %v1640, 4
      %v1666 = vsel %vm192, %v1648, %v1665
      %v1668 = vunpack.c.l.s4 1983009808
      %v1669 = vunpack.c.0.s8 %v1668
      %v1670 = vperm.slane %v1664, %v1669
      %v1672 = vunpack.c.l.s4 1983009808
      %v1673 = vunpack.c.0.s8 %v1672
      %v1674 = vperm.slane %v1666, %v1673
      %v1675 = vrot.slane %v1652, 4
      %v1676 = vsel %vm192, %v1675, %v1644
      %v1677 = vrot.slane %v1644, 4
      %v1678 = vsel %vm192, %v1652, %v1677
      %v1680 = vunpack.c.l.s4 1983009808
      %v1681 = vunpack.c.0.s8 %v1680
      %v1682 = vperm.slane %v1676, %v1681
      %v1684 = vunpack.c.l.s4 1983009808
      %v1685 = vunpack.c.0.s8 %v1684
      %v1686 = vperm.slane %v1678, %v1685
      %v1687 = vrot.slane %v1682, 4
      %v1688 = vsel %vm192, %v1687, %v1670
      %v1689 = vrot.slane %v1670, 4
      %v1690 = vsel %vm192, %v1682, %v1689
      %v1692 = vunpack.c.l.s4 1934713408
      %v1693 = vunpack.c.0.s8 %v1692
      %v1694 = vperm.slane %v1688, %v1693
      %v1696 = vunpack.c.l.s4 1934713408
      %v1697 = vunpack.c.0.s8 %v1696
      %v1698 = vperm.slane %v1690, %v1697
      %v1699 = vrot.slane %v1686, 4
      %v1700 = vsel %vm192, %v1699, %v1674
      %v1701 = vrot.slane %v1674, 4
      %v1702 = vsel %vm192, %v1686, %v1701
      %v1704 = vunpack.c.l.s4 1934713408
      %v1705 = vunpack.c.0.s8 %v1704
      %v1706 = vperm.slane %v1700, %v1705
      %v1708 = vunpack.c.l.s4 1934713408
      %v1709 = vunpack.c.0.s8 %v1708
      %v1710 = vperm.slane %v1702, %v1709
      %v1711 = vrot.slane %v1694, 4
      %v1712 = vsel %vm192, 0.0, %v1711
      %v1713 = vrot.slane %v1698, 4
      %v1714 = vsel %vm192, 0.0, %v1713
      %v1715 = vrot.slane %v1706, 4
      %v1716 = vsel %vm192, 0.0, %v1715
      %v1717 = vrot.slane %v1710, 4
      %v1718 = vsel %vm192, 0.0, %v1717
      %v1719 = vrot.slane %v1650, 4
      %v1720 = vsel %vm192, %v1719, %v1642
      %v1721 = vrot.slane %v1642, 4
      %v1722 = vsel %vm192, %v1650, %v1721
      %v1724 = vunpack.c.l.s4 1983009808
      %v1725 = vunpack.c.0.s8 %v1724
      %v1726 = vperm.slane %v1720, %v1725
      %v1728 = vunpack.c.l.s4 1983009808
      %v1729 = vunpack.c.0.s8 %v1728
      %v1730 = vperm.slane %v1722, %v1729
      %v1731 = vrot.slane %v1654, 4
      %v1732 = vsel %vm192, %v1731, %v1646
      %v1733 = vrot.slane %v1646, 4
      %v1734 = vsel %vm192, %v1654, %v1733
      %v1736 = vunpack.c.l.s4 1983009808
      %v1737 = vunpack.c.0.s8 %v1736
      %v1738 = vperm.slane %v1732, %v1737
      %v1740 = vunpack.c.l.s4 1983009808
      %v1741 = vunpack.c.0.s8 %v1740
      %v1742 = vperm.slane %v1734, %v1741
      %v1743 = vrot.slane %v1738, 4
      %v1744 = vsel %vm192, %v1743, %v1726
      %v1745 = vrot.slane %v1726, 4
      %v1746 = vsel %vm192, %v1738, %v1745
      %v1748 = vunpack.c.l.s4 1934713408
      %v1749 = vunpack.c.0.s8 %v1748
      %v1750 = vperm.slane %v1744, %v1749
      %v1752 = vunpack.c.l.s4 1934713408
      %v1753 = vunpack.c.0.s8 %v1752
      %v1754 = vperm.slane %v1746, %v1753
      %v1755 = vrot.slane %v1742, 4
      %v1756 = vsel %vm192, %v1755, %v1730
      %v1757 = vrot.slane %v1730, 4
      %v1758 = vsel %vm192, %v1742, %v1757
      %v1760 = vunpack.c.l.s4 1934713408
      %v1761 = vunpack.c.0.s8 %v1760
      %v1762 = vperm.slane %v1756, %v1761
      %v1764 = vunpack.c.l.s4 1934713408
      %v1765 = vunpack.c.0.s8 %v1764
      %v1766 = vperm.slane %v1758, %v1765
      %v1767 = vrot.slane %v1750, 4
      %v1768 = vsel %vm192, 0.0, %v1767
      %v1769 = vrot.slane %v1754, 4
      %v1770 = vsel %vm192, 0.0, %v1769
      %v1771 = vrot.slane %v1762, 4
      %v1772 = vsel %vm192, 0.0, %v1771
      %v1773 = vrot.slane %v1766, 4
      %v1774 = vsel %vm192, 0.0, %v1773
      %1776 = vrot.lane.b32.xlu0 %v1712, 16
      %v1777 = vpop.permute.xlu0 %1776
      %1780 = vrot.lane.b32.xlu0 %v1698, 32
      %v1781 = vpop.permute.xlu0 %1780
      %1784 = vrot.lane.b32.xlu0 %v1714, 48
      %v1785 = vpop.permute.xlu0 %1784
      %1788 = vrot.lane.b32.xlu0 %v1706, 64
      %v1789 = vpop.permute.xlu0 %1788
      %1792 = vrot.lane.b32.xlu0 %v1716, 80
      %v1793 = vpop.permute.xlu0 %1792
      %1796 = vrot.lane.b32.xlu0 %v1710, 96
      %v1797 = vpop.permute.xlu0 %1796
      %1800 = vrot.lane.b32.xlu0 %v1718, 112
      %v1801 = vpop.permute.xlu0 %1800
      %1804 = vrot.lane.b32.xlu0 %v1768, 16
      %v1805 = vpop.permute.xlu0 %1804
      %1808 = vrot.lane.b32.xlu0 %v1754, 32
      %v1809 = vpop.permute.xlu0 %1808
      %1812 = vrot.lane.b32.xlu0 %v1770, 48
      %v1813 = vpop.permute.xlu0 %1812
      %1816 = vrot.lane.b32.xlu0 %v1762, 64
      %v1817 = vpop.permute.xlu0 %1816
      %1820 = vrot.lane.b32.xlu0 %v1772, 80
      %v1821 = vpop.permute.xlu0 %1820
      %1824 = vrot.lane.b32.xlu0 %v1766, 96
      %v1825 = vpop.permute.xlu0 %1824
      %1828 = vrot.lane.b32.xlu0 %v1774, 112
      %v1829 = vpop.permute.xlu0 %1828
      %v1831 = vsel %vm360, %v1694, %v1777
      %v1832 = vsel %vm362, %v1831, %v1781
      %v1833 = vsel %vm364, %v1832, %v1785
      %v1834 = vsel %vm366, %v1833, %v1789
      %v1835 = vsel %vm368, %v1834, %v1793
      %v1836 = vsel %vm370, %v1835, %v1797
      %v1837 = vsel %vm372, %v1836, %v1801
      %v1838 = vsel %vm360, %v1750, %v1805
      %v1839 = vsel %vm362, %v1838, %v1809
      %v1840 = vsel %vm364, %v1839, %v1813
      %v1841 = vsel %vm366, %v1840, %v1817
      %v1842 = vsel %vm368, %v1841, %v1821
      %v1843 = vsel %vm370, %v1842, %v1825
      %v1844 = vsel %vm372, %v1843, %v1829
      %1845 = vrot.lane.b32.xlu0 %v1431, 126
      %v1846 = vpop.permute.xlu0 %1845
      %1847 = vrot.lane.b32.xlu0 %v1433, 126
      %v1848 = vpop.permute.xlu0 %1847
      %1849 = vrot.lane.b32.xlu0 %v1436, 126
      %v1850 = vpop.permute.xlu0 %1849
      %1851 = vrot.lane.b32.xlu0 %v1438, 126
      %v1852 = vpop.permute.xlu0 %1851
      %1853 = vrot.lane.b32.xlu0 %v1441, 126
      %v1854 = vpop.permute.xlu0 %1853
      %1855 = vrot.lane.b32.xlu0 %v1443, 126
      %v1856 = vpop.permute.xlu0 %1855
      %1857 = vrot.lane.b32.xlu0 %v1446, 126
      %v1858 = vpop.permute.xlu0 %1857
      %1859 = vrot.lane.b32.xlu0 %v1448, 126
      %v1860 = vpop.permute.xlu0 %1859
      %v1869 = vrot.slane %v1854, 4
      %v1870 = vsel %vm192, %v1869, %v1846
      %v1871 = vrot.slane %v1846, 4
      %v1872 = vsel %vm192, %v1854, %v1871
      %v1874 = vunpack.c.l.s4 1983009808
      %v1875 = vunpack.c.0.s8 %v1874
      %v1876 = vperm.slane %v1870, %v1875
      %v1878 = vunpack.c.l.s4 1983009808
      %v1879 = vunpack.c.0.s8 %v1878
      %v1880 = vperm.slane %v1872, %v1879
      %v1881 = vrot.slane %v1858, 4
      %v1882 = vsel %vm192, %v1881, %v1850
      %v1883 = vrot.slane %v1850, 4
      %v1884 = vsel %vm192, %v1858, %v1883
      %v1886 = vunpack.c.l.s4 1983009808
      %v1887 = vunpack.c.0.s8 %v1886
      %v1888 = vperm.slane %v1882, %v1887
      %v1890 = vunpack.c.l.s4 1983009808
      %v1891 = vunpack.c.0.s8 %v1890
      %v1892 = vperm.slane %v1884, %v1891
      %v1893 = vrot.slane %v1888, 4
      %v1894 = vsel %vm192, %v1893, %v1876
      %v1895 = vrot.slane %v1876, 4
      %v1896 = vsel %vm192, %v1888, %v1895
      %v1898 = vunpack.c.l.s4 1934713408
      %v1899 = vunpack.c.0.s8 %v1898
      %v1900 = vperm.slane %v1894, %v1899
      %v1902 = vunpack.c.l.s4 1934713408
      %v1903 = vunpack.c.0.s8 %v1902
      %v1904 = vperm.slane %v1896, %v1903
      %v1905 = vrot.slane %v1892, 4
      %v1906 = vsel %vm192, %v1905, %v1880
      %v1907 = vrot.slane %v1880, 4
      %v1908 = vsel %vm192, %v1892, %v1907
      %v1910 = vunpack.c.l.s4 1934713408
      %v1911 = vunpack.c.0.s8 %v1910
      %v1912 = vperm.slane %v1906, %v1911
      %v1914 = vunpack.c.l.s4 1934713408
      %v1915 = vunpack.c.0.s8 %v1914
      %v1916 = vperm.slane %v1908, %v1915
      %v1917 = vrot.slane %v1900, 4
      %v1918 = vsel %vm192, 0.0, %v1917
      %v1919 = vrot.slane %v1904, 4
      %v1920 = vsel %vm192, 0.0, %v1919
      %v1921 = vrot.slane %v1912, 4
      %v1922 = vsel %vm192, 0.0, %v1921
      %v1923 = vrot.slane %v1916, 4
      %v1924 = vsel %vm192, 0.0, %v1923
      %v1925 = vrot.slane %v1856, 4
      %v1926 = vsel %vm192, %v1925, %v1848
      %v1927 = vrot.slane %v1848, 4
      %v1928 = vsel %vm192, %v1856, %v1927
      %v1930 = vunpack.c.l.s4 1983009808
      %v1931 = vunpack.c.0.s8 %v1930
      %v1932 = vperm.slane %v1926, %v1931
      %v1934 = vunpack.c.l.s4 1983009808
      %v1935 = vunpack.c.0.s8 %v1934
      %v1936 = vperm.slane %v1928, %v1935
      %v1937 = vrot.slane %v1860, 4
      %v1938 = vsel %vm192, %v1937, %v1852
      %v1939 = vrot.slane %v1852, 4
      %v1940 = vsel %vm192, %v1860, %v1939
      %v1942 = vunpack.c.l.s4 1983009808
      %v1943 = vunpack.c.0.s8 %v1942
      %v1944 = vperm.slane %v1938, %v1943
      %v1946 = vunpack.c.l.s4 1983009808
      %v1947 = vunpack.c.0.s8 %v1946
      %v1948 = vperm.slane %v1940, %v1947
      %v1949 = vrot.slane %v1944, 4
      %v1950 = vsel %vm192, %v1949, %v1932
      %v1951 = vrot.slane %v1932, 4
      %v1952 = vsel %vm192, %v1944, %v1951
      %v1954 = vunpack.c.l.s4 1934713408
      %v1955 = vunpack.c.0.s8 %v1954
      %v1956 = vperm.slane %v1950, %v1955
      %v1958 = vunpack.c.l.s4 1934713408
      %v1959 = vunpack.c.0.s8 %v1958
      %v1960 = vperm.slane %v1952, %v1959
      %v1961 = vrot.slane %v1948, 4
      %v1962 = vsel %vm192, %v1961, %v1936
      %v1963 = vrot.slane %v1936, 4
      %v1964 = vsel %vm192, %v1948, %v1963
      %v1966 = vunpack.c.l.s4 1934713408
      %v1967 = vunpack.c.0.s8 %v1966
      %v1968 = vperm.slane %v1962, %v1967
      %v1970 = vunpack.c.l.s4 1934713408
      %v1971 = vunpack.c.0.s8 %v1970
      %v1972 = vperm.slane %v1964, %v1971
      %v1973 = vrot.slane %v1956, 4
      %v1974 = vsel %vm192, 0.0, %v1973
      %v1975 = vrot.slane %v1960, 4
      %v1976 = vsel %vm192, 0.0, %v1975
      %v1977 = vrot.slane %v1968, 4
      %v1978 = vsel %vm192, 0.0, %v1977
      %v1979 = vrot.slane %v1972, 4
      %v1980 = vsel %vm192, 0.0, %v1979
      %1982 = vrot.lane.b32.xlu0 %v1918, 16
      %v1983 = vpop.permute.xlu0 %1982
      %1986 = vrot.lane.b32.xlu0 %v1904, 32
      %v1987 = vpop.permute.xlu0 %1986
      %1990 = vrot.lane.b32.xlu0 %v1920, 48
      %v1991 = vpop.permute.xlu0 %1990
      %1994 = vrot.lane.b32.xlu0 %v1912, 64
      %v1995 = vpop.permute.xlu0 %1994
      %1998 = vrot.lane.b32.xlu0 %v1922, 80
      %v1999 = vpop.permute.xlu0 %1998
      %2002 = vrot.lane.b32.xlu0 %v1916, 96
      %v2003 = vpop.permute.xlu0 %2002
      %2006 = vrot.lane.b32.xlu0 %v1924, 112
      %v2007 = vpop.permute.xlu0 %2006
      %2010 = vrot.lane.b32.xlu0 %v1974, 16
      %v2011 = vpop.permute.xlu0 %2010
      %2014 = vrot.lane.b32.xlu0 %v1960, 32
      %v2015 = vpop.permute.xlu0 %2014
      %2018 = vrot.lane.b32.xlu0 %v1976, 48
      %v2019 = vpop.permute.xlu0 %2018
      %2022 = vrot.lane.b32.xlu0 %v1968, 64
      %v2023 = vpop.permute.xlu0 %2022
      %2026 = vrot.lane.b32.xlu0 %v1978, 80
      %v2027 = vpop.permute.xlu0 %2026
      %2030 = vrot.lane.b32.xlu0 %v1972, 96
      %v2031 = vpop.permute.xlu0 %2030
      %2034 = vrot.lane.b32.xlu0 %v1980, 112
      %v2035 = vpop.permute.xlu0 %2034
      %v2037 = vsel %vm360, %v1900, %v1983
      %v2038 = vsel %vm362, %v2037, %v1987
      %v2039 = vsel %vm364, %v2038, %v1991
      %v2040 = vsel %vm366, %v2039, %v1995
      %v2041 = vsel %vm368, %v2040, %v1999
      %v2042 = vsel %vm370, %v2041, %v2003
      %v2043 = vsel %vm372, %v2042, %v2007
      %v2044 = vsel %vm360, %v1956, %v2011
      %v2045 = vsel %vm362, %v2044, %v2015
      %v2046 = vsel %vm364, %v2045, %v2019
      %v2047 = vsel %vm366, %v2046, %v2023
      %v2048 = vsel %vm368, %v2047, %v2027
      %v2049 = vsel %vm370, %v2048, %v2031
      %v2050 = vsel %vm372, %v2049, %v2035
      %v2053 = vrot.slane %v587, 4
      %v2054 = vrot.slane %v594, 4
      %v2059 = vrot.slane %v1008, 4
      %v2060 = vrot.slane %v1015, 4
      %v2065 = vrot.slane %v1420, 4
      %v2066 = vrot.slane %v1427, 4
      %v2071 = vrot.slane %v1837, 4
      %v2072 = vrot.slane %v1844, 4
      %vm2075 = vcmask 1043456
      %v2076 = vsel %vm2075, %v373, %v2053
      %v2077 = vsel %vm2075, %v380, %v2054
      %v2078 = vsel %vm2075, %v793, %v2059
      %v2079 = vsel %vm2075, %v800, %v2060
      %v2080 = vsel %vm2075, %v1214, %v2065
      %v2081 = vsel %vm2075, %v1221, %v2066
      %v2082 = vsel %vm2075, %v1631, %v2071
      %v2083 = vsel %vm2075, %v1638, %v2072
      %vm2084 = vcmask 293888
      %v2086 = vsel %vm2084, %v154, 0
      %v2089 = vsel %vm2075, %v2043, 0
      %v2092 = vsel %vm2075, %v2050, 0
      %2094 = vmatpush.msra.mxu0 0.0
      %2095 = vmatpush.msra.mxu0 0.0
      %2096 = vmatpush.msra.mxu0 0.0
      %2097 = vmatpush.msra.mxu0 0.0
      %2098 = vmatpush.msra.mxu0 0.0
      %2099 = vmatpush.msra.mxu0 0.0
      %2100 = vmatpush.msra.mxu0 0.0
      %2101 = vmatpush.msra.mxu0 0.0
      %2102 = vmatpush.msra.mxu0 0.0
      %2103 = vmatpush.msra.mxu0 0.0
      %2104 = vmatpush.msra.mxu0 0.0
      %2105 = vmatpush.msra.mxu0 %v2089
      %2106 = vmatpush.msra.mxu0 %v2082
      %2107 = vmatpush.msra.mxu0 %v2080
      %2108 = vmatpush.msra.mxu0 %v2078
      %2109 = vmatpush.msra.mxu0 %v2076
      %2110 = vmatmul.f32.gmra.mxu0 %v2086
      %v2111 = vpop.f32.mrf.mxu0
      %v2112 = vadd.f32 0.0, %v2111
      %2113 = vdwg.mxu0
      %2114 = vmatpush.msra.mxu0 0.0
      %2115 = vmatpush.msra.mxu0 0.0
      %2116 = vmatpush.msra.mxu0 0.0
      %2117 = vmatpush.msra.mxu0 0.0
      %2118 = vmatpush.msra.mxu0 0.0
      %2119 = vmatpush.msra.mxu0 0.0
      %2120 = vmatpush.msra.mxu0 0.0
      %2121 = vmatpush.msra.mxu0 0.0
      %2122 = vmatpush.msra.mxu0 0.0
      %2123 = vmatpush.msra.mxu0 0.0
      %2124 = vmatpush.msra.mxu0 0.0
      %2125 = vmatpush.msra.mxu0 %v2092
      %2126 = vmatpush.msra.mxu0 %v2083
      %2127 = vmatpush.msra.mxu0 %v2081
      %2128 = vmatpush.msra.mxu0 %v2079
      %2129 = vmatpush.msra.mxu0 %v2077
      %2130 = vmatmul.f32.gmra.mxu0 %v2086
      %v2131 = vpop.f32.mrf.mxu0
      %v2132 = vadd.f32 0.0, %v2131
      %2133 = vdwg.mxu0
      %v2134 = vadd.f32 %v2112, %v2132
      %2135 = vadd.xlane.f32.xlu0 %v2134
      %v2136 = vpop.xlane.xlu0 %2135
      %v2137 = vmul.f32 %v2112, %v2112
      %v2138 = vmul.f32 %v2132, %v2132
      %v2139 = vadd.f32 %v2137, %v2138
      %2140 = vadd.xlane.f32.xlu0 %v2139
      %v2141 = vpop.xlane.xlu0 %2140
      %vm2142 = vcmask 7168
      %v2143 = vsel %vm2142, %v2136, %v2141
      %vm2144 = vcmask 15360
      %2145 = vst.msk [vmem:[%s141] sm:$0xff] %vm2144, %v2143
      %p2146 = scmp.lt.s32.totalorder %s13, 1
      %s2147 = scalar_select %p2146, %s13, 1
      %s2148 = smul.addr %s2147, 8
      %s2149 = scalar_lea.vmem %s2, %s2148
      // Predicated region
      $region29: #{conv_block.2} parent=27 // pred_check
        %p2150 = pneg %p78
      $region30: #{conv_block.2} parent=27 // pred_check_branch
        %2152 = sbr.rel (%p2150) target = $region32
      $region31: #{conv_block.2} parent=27 // pred_region
        _
      $region32: #{conv_block.2} parent=27 // pred_fallthru
        _
    $region28: #{conv_block.2} parent=5 // pred_fallthru
      _
    %p2153 = scmp.le.s32.totalorder 2, %s8
    // Predicated region
    $region33: #{conv_block.2} parent=5 // pred_check
      %p2154 = pneg %p2153
    $region34: #{conv_block.2} parent=5 // pred_check_branch
      %2156 = sbr.rel (%p2154) target = $region36
    $region35: #{conv_block.2} parent=5 // pred_region
      %s2157 = ssub.s32 %s8, 2
      // Predicated region
      $region37: #{conv_block.2} parent=35 // pred_check
        %p2158 = pneg %p84
      $region38: #{conv_block.2} parent=35 // pred_check_branch
        %2160 = sbr.rel (%p2158) target = $region40
      $region39: #{conv_block.2} parent=35 // pred_region
        %p2161 = scmp.lt.s32.totalorder %s14, 1
        %s2162 = scalar_select %p2161, %s14, 1
        %s2163 = smul.addr %s2162, 8
        %s2164 = scalar_lea.vmem %s2, %s2163
      $region40: #{conv_block.2} parent=35 // pred_fallthru
        _
    $region36: #{conv_block.2} parent=5 // pred_fallthru
      _
  $region6: #{conv_block.2} parent=0 // loop_footer
    %s12 = sadd.s32 1, %s8
  $region7: #{conv_block.2} parent=0 // loop_footer_branch
    %7 = sbr.rel target = $region3
  $region8: #{conv_block.2} parent=0 // loop_exit
    _

// kernel: conv_block.3
$region0: #{conv_block.3}
  #allocation0 [shape = 'u32[]', space=smem, size = 0x4, offset = 0x4, fixed_abs, tag = 'smem constant byte address 0x4 - core index']
  #allocation1 [shape = 'u32[72,128]{1,0:T(1,128)}', space=vmem, size = 0x9000, scoped, tag = 'internal scratch']
  %s0 = inlined_call_operand.vmem [shape: f32[2,4,18,18], index: 0, kind: input, shape index: {}]
  %s1 = inlined_call_operand.vmem [shape: f32[8,36], index: 1, kind: input, shape index: {}]
  %s2 = inlined_call_operand.vmem [shape: f32[8,1], index: 2, kind: input, shape index: {}]
  %s3 = inlined_call_operand.vmem [shape: f32[8,1], index: 3, kind: input, shape index: {}]
  %s4 = inlined_call_operand.vmem [shape: f32[2,8,256], index: 4, kind: output, shape index: {}]
  %s5 = sld [smem:[#allocation0]]
  $region49: #{conv_block.3} parent=0
    _
  %s7 = ssub.s32 1, %s5
  %s8 = scalar_select 0, %s7, %s5
  loop: start=0, step=1, limit=4
  $region2: #{conv_block.3} parent=0 // loop_pre_header
    _
  $region3: #{conv_block.3} parent=0 // loop_header
    %s10 = sphi 0, %s14
    %p11 = scmp.ge.s32.totalorder %s10, 4
    %s20 = sphi 0, %s22
    %s23 = sphi 0, %s20
    %s24 = sphi 0, %s23
    %s40 = sphi 0, %s24
    %s44 = sphi 0, %s44
    %s46 = sphi 0, %s44
    %s47 = sphi 0, %s46
    %s61 = sphi 0, %s47
    %s65 = sphi 0, %s65
    %s67 = sphi 0, %s65
    %s68 = sphi 0, %s67
    %s82 = sphi 0, %s68
    %s86 = sphi 0, %s86
    %s88 = sphi 0, %s86
    %s89 = sphi 0, %s88
    %s103 = sphi 0, %s89
    %s109 = sphi 0, %s111
    %s112 = sphi 0, %s109
    %s113 = sphi 0, %s112
    %s129 = sphi 0, %s113
  $region4: #{conv_block.3} parent=0 // loop_header_branch
    %13 = sbr.rel (%p11) target = $region8
  $region5: #{conv_block.3} parent=0 // loop_body
    %s15 = ssub.s32 %s10, 1
    %s16 = ssub.s32 %s10, 2
    %s17 = sadd.s32 %s10, 1
    %s18 = ssub.s32 %s10, %s17
    %p19 = scmp.eq.s32.totalorder %s18, 0
    %s21 = sadd.s32 %s20, 1
    %s22 = scalar_select %p19, %s20, %s21
    %p25 = pneg %p19
    %p26 = scmp.eq.s32.totalorder %s10, 1
    %p27 = por %p25, %p26
    %p28 = scmp.ne.s32.totalorder %s20, %s23
    %p29 = scmp.eq.s32.totalorder %s10, 0
    %p30 = por %p28, %p29
    %p31 = scmp.ne.s32.totalorder %s20, %s23
    %p32 = scmp.eq.s32.totalorder %s15, 1
    %p33 = por %p31, %p32
    %p34 = scmp.ne.s32.totalorder %s23, %s24
    %p35 = scmp.eq.s32.totalorder %s15, 0
    %p36 = por %p34, %p35
    %p37 = scmp.ne.s32.totalorder %s23, %s24
    %p38 = scmp.eq.s32.totalorder %s16, 1
    %p39 = por %p37, %p38
    %p41 = scmp.ne.s32.totalorder %s24, %s40
    %p42 = scmp.eq.s32.totalorder %s16, 0
    %p43 = por %p41, %p42
    %s45 = sadd.s32 %s44, 1
    %p48 = scmp.eq.s32.totalorder %s10, 1
    %p49 = scmp.ne.s32.totalorder %s44, %s46
    %p50 = scmp.eq.s32.totalorder %s10, 0
    %p51 = por %p49, %p50
    %p52 = scmp.ne.s32.totalorder %s44, %s46
    %p53 = scmp.eq.s32.totalorder %s15, 1
    %p54 = por %p52, %p53
    %p55 = scmp.ne.s32.totalorder %s46, %s47
    %p56 = scmp.eq.s32.totalorder %s15, 0
    %p57 = por %p55, %p56
    %p58 = scmp.ne.s32.totalorder %s46, %s47
    %p59 = scmp.eq.s32.totalorder %s16, 1
    %p60 = por %p58, %p59
    %p62 = scmp.ne.s32.totalorder %s47, %s61
    %p63 = scmp.eq.s32.totalorder %s16, 0
    %p64 = por %p62, %p63
    %s66 = sadd.s32 %s65, 1
    %p69 = scmp.eq.s32.totalorder %s10, 1
    %p70 = scmp.ne.s32.totalorder %s65, %s67
    %p71 = scmp.eq.s32.totalorder %s10, 0
    %p72 = por %p70, %p71
    %p73 = scmp.ne.s32.totalorder %s65, %s67
    %p74 = scmp.eq.s32.totalorder %s15, 1
    %p75 = por %p73, %p74
    %p76 = scmp.ne.s32.totalorder %s67, %s68
    %p77 = scmp.eq.s32.totalorder %s15, 0
    %p78 = por %p76, %p77
    %p79 = scmp.ne.s32.totalorder %s67, %s68
    %p80 = scmp.eq.s32.totalorder %s16, 1
    %p81 = por %p79, %p80
    %p83 = scmp.ne.s32.totalorder %s68, %s82
    %p84 = scmp.eq.s32.totalorder %s16, 0
    %p85 = por %p83, %p84
    %s87 = sadd.s32 %s86, 1
    %p90 = scmp.eq.s32.totalorder %s10, 1
    %p91 = scmp.ne.s32.totalorder %s86, %s88
    %p92 = scmp.eq.s32.totalorder %s10, 0
    %p93 = por %p91, %p92
    %p94 = scmp.ne.s32.totalorder %s86, %s88
    %p95 = scmp.eq.s32.totalorder %s15, 1
    %p96 = por %p94, %p95
    %p97 = scmp.ne.s32.totalorder %s88, %s89
    %p98 = scmp.eq.s32.totalorder %s15, 0
    %p99 = por %p97, %p98
    %p100 = scmp.ne.s32.totalorder %s88, %s89
    %p101 = scmp.eq.s32.totalorder %s16, 1
    %p102 = por %p100, %p101
    %p104 = scmp.ne.s32.totalorder %s89, %s103
    %p105 = scmp.eq.s32.totalorder %s16, 0
    %p106 = por %p104, %p105
    %s107 = ssub.s32 %s10, %s17
    %p108 = scmp.eq.s32.totalorder %s107, 0
    %s110 = sadd.s32 %s109, 1
    %s111 = scalar_select %p108, %s109, %s110
    %p114 = pneg %p108
    %p115 = scmp.eq.s32.totalorder %s10, 1
    %p116 = por %p114, %p115
    %p117 = scmp.ne.s32.totalorder %s109, %s112
    %p118 = scmp.eq.s32.totalorder %s10, 0
    %p119 = por %p117, %p118
    %p120 = scmp.ne.s32.totalorder %s109, %s112
    %p121 = scmp.eq.s32.totalorder %s15, 1
    %p122 = por %p120, %p121
    %p123 = scmp.ne.s32.totalorder %s112, %s113
    %p124 = scmp.eq.s32.totalorder %s15, 0
    %p125 = por %p123, %p124
    %p126 = scmp.ne.s32.totalorder %s112, %s113
    %p127 = scmp.eq.s32.totalorder %s16, 1
    %p128 = por %p126, %p127
    %p130 = scmp.ne.s32.totalorder %s113, %s129
    %p131 = scmp.eq.s32.totalorder %s16, 0
    %p132 = por %p130, %p131
    %p133 = scmp.le.s32.totalorder 1, %s10
    %p134 = scmp.lt.s32.totalorder %s10, 3
    %p135 = pnand %p133, %p134
    %p136 = pneg %p135
    // Predicated region
    $region9: #{conv_block.3} parent=5 // pred_check
      _
    $region10: #{conv_block.3} parent=5 // pred_check_branch
      %138 = sbr.rel (%p135) target = $region12
    $region11: #{conv_block.3} parent=5 // pred_region
      %s139 = ssub.s32 %s10, 1
      // Predicated region
      $region13: #{conv_block.3} parent=11 // pred_check
        %p140 = pneg %p57
      $region14: #{conv_block.3} parent=11 // pred_check_branch
        %142 = sbr.rel (%p140) target = $region16
      $region15: #{conv_block.3} parent=11 // pred_region
        _
      $region16: #{conv_block.3} parent=11 // pred_fallthru
        _
      // Predicated region
      $region17: #{conv_block.3} parent=11 // pred_check
        %p143 = pneg %p78
      $region18: #{conv_block.3} parent=11 // pred_check_branch
        %145 = sbr.rel (%p143) target = $region20
      $region19: #{conv_block.3} parent=11 // pred_region
        _
      $region20: #{conv_block.3} parent=11 // pred_fallthru
        _
      // Predicated region
      $region21: #{conv_block.3} parent=11 // pred_check
        %p146 = pneg %p99
      $region22: #{conv_block.3} parent=11 // pred_check_branch
        %148 = sbr.rel (%p146) target = $region24
      $region23: #{conv_block.3} parent=11 // pred_region
        _
      $region24: #{conv_block.3} parent=11 // pred_fallthru
        _
    $region12: #{conv_block.3} parent=5 // pred_fallthru
      _
    %p149 = scmp.lt.s32.totalorder %s10, 2
    // Predicated region
    $region25: #{conv_block.3} parent=5 // pred_check
      %p150 = pneg %p149
    $region26: #{conv_block.3} parent=5 // pred_check_branch
      %152 = sbr.rel (%p150) target = $region28
    $region27: #{conv_block.3} parent=5 // pred_region
      // Predicated region
      $region29: #{conv_block.3} parent=27 // pred_check
        %p153 = pneg %p30
      $region30: #{conv_block.3} parent=27 // pred_check_branch
        %155 = sbr.rel (%p153) target = $region32
      $region31: #{conv_block.3} parent=27 // pred_region
        %p156 = scmp.lt.s32.totalorder %s10, 1
        %s157 = scalar_select %p156, %s10, 1
        %s158 = smul.addr %s157, 12
        %s159 = smul.addr %s158, 8
        %s160 = scalar_lea.vmem %s0, %s159
      $region32: #{conv_block.3} parent=27 // pred_fallthru
        _
    $region28: #{conv_block.3} parent=5 // pred_fallthru
      _
    %p161 = scmp.le.s32.totalorder 1, %s10
    %p162 = scmp.lt.s32.totalorder %s10, 3
    %p163 = pnand %p161, %p162
    %p164 = pneg %p163
    // Predicated region
    $region33: #{conv_block.3} parent=5 // pred_check
      _
    $region34: #{conv_block.3} parent=5 // pred_check_branch
      %166 = sbr.rel (%p163) target = $region36
    $region35: #{conv_block.3} parent=5 // pred_region
      %s167 = ssub.s32 %s10, 1
      %p168 = scmp.lt.s32.totalorder %s15, 1
      %s169 = scalar_select %p168, %s15, 1
      %s170 = smul.addr %s169, 12
      %s171 = smul.addr %s170, 8
      %s172 = scalar_lea.vmem %s0, %s171
      %p173 = pneg %p36
      %p174 = pneg %p33
      %p175 = pneg %p57
      %p176 = pneg %p54
      %p177 = pneg %p78
      %p178 = pneg %p75
      %p179 = pneg %p99
      %p180 = pneg %p96
      %p181 = pneg %p125
      %p182 = pneg %p122
      %p183 = scmp.lt.s32.totalorder %s15, 1
      %s184 = scalar_select %p183, %s15, 1
      %s185 = smul.addr %s184, 2
      %s186 = smul.addr %s185, 8
      %s187 = scalar_lea.vmem %s4, %s186
      %p188 = scmp.lt.s32.totalorder %s15, 1
      %s189 = scalar_select %p188, %s15, 1
      %s190 = smul.addr %s189, 12
      %s191 = smul.addr %s190, 8
      %s192 = scalar_lea.vmem %s0, %s191
      %p193 = scmp.lt.s32.totalorder %s15, 1
      %s194 = scalar_select %p193, %s15, 1
      %s195 = smul.addr %s194, 2
      %s196 = smul.addr %s195, 8
      %s197 = scalar_lea.vmem %s4, %s196
      %v198 = vld [vmem:[%s192] sm:$0xff]
      %v199 = vld [vmem:[%s192 + $0x8] sm:$0xff]
      %v200 = vld [vmem:[%s192 + $0x10] sm:$0x3]
      %v201 = vld [vmem:[%s192 + $0x18] sm:$0xff]
      %v202 = vld [vmem:[%s192 + $0x20] sm:$0xff]
      %v203 = vld [vmem:[%s192 + $0x28] sm:$0x3]
      %v204 = vld [vmem:[%s192 + $0x30] sm:$0xff]
      %v205 = vld [vmem:[%s192 + $0x38] sm:$0xff]
      %v206 = vld [vmem:[%s192 + $0x40] sm:$0x3]
      %v207 = vld [vmem:[%s192 + $0x48] sm:$0xff]
      %v208 = vld [vmem:[%s192 + $0x50] sm:$0xff]
      %v209 = vld [vmem:[%s192 + $0x58] sm:$0x3]
      %v210 = vld [vmem:[%s1] sm:$0xff]
      %vm211 = vcmp.ge.f32.partialorder %v198, 0.0
      %vm212 = vcmp.ge.f32.partialorder %v199, 0.0
      %vm213 = vcmp.ge.f32.partialorder %v200, 0.0
      %vm214 = vcmp.ge.f32.partialorder %v201, 0.0
      %vm215 = vcmp.ge.f32.partialorder %v202, 0.0
      %vm216 = vcmp.ge.f32.partialorder %v203, 0.0
      %vm217 = vcmp.ge.f32.partialorder %v204, 0.0
      %vm218 = vcmp.ge.f32.partialorder %v205, 0.0
      %vm219 = vcmp.ge.f32.partialorder %v206, 0.0
      %vm220 = vcmp.ge.f32.partialorder %v207, 0.0
      %vm221 = vcmp.ge.f32.partialorder %v208, 0.0
      %vm222 = vcmp.ge.f32.partialorder %v209, 0.0
      %v223 = vmul.f32 %v198, 0.2
      %v224 = vmul.f32 %v199, 0.2
      %v225 = vmul.f32 %v200, 0.2
      %v226 = vmul.f32 %v201, 0.2
      %v227 = vmul.f32 %v202, 0.2
      %v228 = vmul.f32 %v203, 0.2
      %v229 = vmul.f32 %v204, 0.2
      %v230 = vmul.f32 %v205, 0.2
      %v231 = vmul.f32 %v206, 0.2
      %v232 = vmul.f32 %v207, 0.2
      %v233 = vmul.f32 %v208, 0.2
      %v234 = vmul.f32 %v209, 0.2
      %v235 = vsel %vm211, %v198, %v223
      %v236 = vsel %vm212, %v199, %v224
      %v237 = vsel %vm213, %v200, %v225
      %v238 = vsel %vm214, %v201, %v226
      %v239 = vsel %vm215, %v202, %v227
      %v240 = vsel %vm216, %v203, %v228
      %v241 = vsel %vm217, %v204, %v229
      %v242 = vsel %vm218, %v205, %v230
      %v243 = vsel %vm219, %v206, %v231
      %v244 = vsel %vm220, %v207, %v232
      %v245 = vsel %vm221, %v208, %v233
      %v246 = vsel %vm222, %v209, %v234
      %v247 = vrot.slane %v241, 4
      %vm248 = vcmask 1047556
      %v249 = vsel %vm248, %v247, %v235
      %v250 = vrot.slane %v235, 4
      %v251 = vsel %vm248, %v241, %v250
      %v253 = vunpack.c.l.s4 1983009808
      %v254 = vunpack.c.0.s8 %v253
      %v255 = vperm.slane %v249, %v254
      %v257 = vunpack.c.l.s4 1983009808
      %v258 = vunpack.c.0.s8 %v257
      %v259 = vperm.slane %v251, %v258
      %v260 = vrot.slane %v244, 4
      %v261 = vsel %vm248, %v260, %v238
      %v262 = vrot.slane %v238, 4
      %v263 = vsel %vm248, %v244, %v262
      %v265 = vunpack.c.l.s4 1983009808
      %v266 = vunpack.c.0.s8 %v265
      %v267 = vperm.slane %v261, %v266
      %v269 = vunpack.c.l.s4 1983009808
      %v270 = vunpack.c.0.s8 %v269
      %v271 = vperm.slane %v263, %v270
      %v272 = vrot.slane %v267, 4
      %v273 = vsel %vm248, %v272, %v255
      %v274 = vrot.slane %v255, 4
      %v275 = vsel %vm248, %v267, %v274
      %v277 = vunpack.c.l.s4 1934713408
      %v278 = vunpack.c.0.s8 %v277
      %v279 = vperm.slane %v273, %v278
      %v281 = vunpack.c.l.s4 1934713408
      %v282 = vunpack.c.0.s8 %v281
      %v283 = vperm.slane %v275, %v282
      %v284 = vrot.slane %v271, 4
      %v285 = vsel %vm248, %v284, %v259
      %v286 = vrot.slane %v259, 4
      %v287 = vsel %vm248, %v271, %v286
      %v289 = vunpack.c.l.s4 1934713408
      %v290 = vunpack.c.0.s8 %v289
      %v291 = vperm.slane %v285, %v290
      %v293 = vunpack.c.l.s4 1934713408
      %v294 = vunpack.c.0.s8 %v293
      %v295 = vperm.slane %v287, %v294
      %v296 = vrot.slane %v279, 4
      %v297 = vsel %vm248, 0.0, %v296
      %v298 = vrot.slane %v283, 4
      %v299 = vsel %vm248, 0.0, %v298
      %v300 = vrot.slane %v291, 4
      %v301 = vsel %vm248, 0.0, %v300
      %v302 = vrot.slane %v295, 4
      %v303 = vsel %vm248, 0.0, %v302
      %v304 = vrot.slane %v242, 4
      %v305 = vsel %vm248, %v304, %v236
      %v306 = vrot.slane %v236, 4
      %v307 = vsel %vm248, %v242, %v306
      %v309 = vunpack.c.l.s4 1983009808
      %v310 = vunpack.c.0.s8 %v309
      %v311 = vperm.slane %v305, %v310
      %v313 = vunpack.c.l.s4 1983009808
      %v314 = vunpack.c.0.s8 %v313
      %v315 = vperm.slane %v307, %v314
      %v316 = vrot.slane %v245, 4
      %v317 = vsel %vm248, %v316, %v239
      %v318 = vrot.slane %v239, 4
      %v319 = vsel %vm248, %v245, %v318
      %v321 = vunpack.c.l.s4 1983009808
      %v322 = vunpack.c.0.s8 %v321
      %v323 = vperm.slane %v317, %v322
      %v325 = vunpack.c.l.s4 1983009808
      %v326 = vunpack.c.0.s8 %v325
      %v327 = vperm.slane %v319, %v326
      %v328 = vrot.slane %v323, 4
      %v329 = vsel %vm248, %v328, %v311
      %v330 = vrot.slane %v311, 4
      %v331 = vsel %vm248, %v323, %v330
      %v333 = vunpack.c.l.s4 1934713408
      %v334 = vunpack.c.0.s8 %v333
      %v335 = vperm.slane %v329, %v334
      %v337 = vunpack.c.l.s4 1934713408
      %v338 = vunpack.c.0.s8 %v337
      %v339 = vperm.slane %v331, %v338
      %v340 = vrot.slane %v327, 4
      %v341 = vsel %vm248, %v340, %v315
      %v342 = vrot.slane %v315, 4
      %v343 = vsel %vm248, %v327, %v342
      %v345 = vunpack.c.l.s4 1934713408
      %v346 = vunpack.c.0.s8 %v345
      %v347 = vperm.slane %v341, %v346
      %v349 = vunpack.c.l.s4 1934713408
      %v350 = vunpack.c.0.s8 %v349
      %v351 = vperm.slane %v343, %v350
      %v352 = vrot.slane %v335, 4
      %v353 = vsel %vm248, 0.0, %v352
      %v354 = vrot.slane %v339, 4
      %v355 = vsel %vm248, 0.0, %v354
      %v356 = vrot.slane %v347, 4
      %v357 = vsel %vm248, 0.0, %v356
      %v358 = vrot.slane %v351, 4
      %v359 = vsel %vm248, 0.0, %v358
      %361 = vrot.lane.b32.xlu0 %v297, 16
      %v362 = vpop.permute.xlu0 %361
      %365 = vrot.lane.b32.xlu0 %v283, 32
      %v366 = vpop.permute.xlu0 %365
      %369 = vrot.lane.b32.xlu0 %v299, 48
      %v370 = vpop.permute.xlu0 %369
      %373 = vrot.lane.b32.xlu0 %v291, 64
      %v374 = vpop.permute.xlu0 %373
      %377 = vrot.lane.b32.xlu0 %v301, 80
      %v378 = vpop.permute.xlu0 %377
      %381 = vrot.lane.b32.xlu0 %v295, 96
      %v382 = vpop.permute.xlu0 %381
      %385 = vrot.lane.b32.xlu0 %v303, 112
      %v386 = vpop.permute.xlu0 %385
      %389 = vrot.lane.b32.xlu0 %v353, 16
      %v390 = vpop.permute.xlu0 %389
      %393 = vrot.lane.b32.xlu0 %v339, 32
      %v394 = vpop.permute.xlu0 %393
      %397 = vrot.lane.b32.xlu0 %v355, 48
      %v398 = vpop.permute.xlu0 %397
      %401 = vrot.lane.b32.xlu0 %v347, 64
      %v402 = vpop.permute.xlu0 %401
      %405 = vrot.lane.b32.xlu0 %v357, 80
      %v406 = vpop.permute.xlu0 %405
      %409 = vrot.lane.b32.xlu0 %v351, 96
      %v410 = vpop.permute.xlu0 %409
      %413 = vrot.lane.b32.xlu0 %v359, 112
      %v414 = vpop.permute.xlu0 %413
      %vm416 = vcmask 130048
      %v417 = vsel %vm416, %v279, %v362
      %vm418 = vcmask 261120
      %v419 = vsel %vm418, %v417, %v366
      %vm420 = vcmask 392192
      %v421 = vsel %vm420, %v419, %v370
      %vm422 = vcmask 523264
      %v423 = vsel %vm422, %v421, %v374
      %vm424 = vcmask 654336
      %v425 = vsel %vm424, %v423, %v378
      %vm426 = vcmask 785408
      %v427 = vsel %vm426, %v425, %v382
      %vm428 = vcmask 916480
      %v429 = vsel %vm428, %v427, %v386
      %v430 = vsel %vm416, %v335, %v390
      %v431 = vsel %vm418, %v430, %v394
      %v432 = vsel %vm420, %v431, %v398
      %v433 = vsel %vm422, %v432, %v402
      %v434 = vsel %vm424, %v433, %v406
      %v435 = vsel %vm426, %v434, %v410
      %v436 = vsel %vm428, %v435, %v414
      %445 = vrot.lane.b32.xlu0 %v235, 127
      %v446 = vpop.permute.xlu0 %445
      %447 = vrot.lane.b32.xlu0 %v236, 127
      %v448 = vpop.permute.xlu0 %447
      %449 = vrot.lane.b32.xlu0 %v238, 127
      %v450 = vpop.permute.xlu0 %449
      %451 = vrot.lane.b32.xlu0 %v239, 127
      %v452 = vpop.permute.xlu0 %451
      %453 = vrot.lane.b32.xlu0 %v241, 127
      %v454 = vpop.permute.xlu0 %453
      %455 = vrot.lane.b32.xlu0 %v242, 127
      %v456 = vpop.permute.xlu0 %455
      %457 = vrot.lane.b32.xlu0 %v244, 127
      %v458 = vpop.permute.xlu0 %457
      %459 = vrot.lane.b32.xlu0 %v245, 127
      %v460 = vpop.permute.xlu0 %459
      %v469 = vrot.slane %v454, 4
      %v470 = vsel %vm248, %v469, %v446
      %v471 = vrot.slane %v446, 4
      %v472 = vsel %vm248, %v454, %v471
      %v474 = vunpack.c.l.s4 1983009808
      %v475 = vunpack.c.0.s8 %v474
      %v476 = vperm.slane %v470, %v475
      %v478 = vunpack.c.l.s4 1983009808
      %v479 = vunpack.c.0.s8 %v478
      %v480 = vperm.slane %v472, %v479
      %v481 = vrot.slane %v458, 4
      %v482 = vsel %vm248, %v481, %v450
      %v483 = vrot.slane %v450, 4
      %v484 = vsel %vm248, %v458, %v483
      %v486 = vunpack.c.l.s4 1983009808
      %v487 = vunpack.c.0.s8 %v486
      %v488 = vperm.slane %v482, %v487
      %v490 = vunpack.c.l.s4 1983009808
      %v491 = vunpack.c.0.s8 %v490
      %v492 = vperm.slane %v484, %v491
      %v493 = vrot.slane %v488, 4
      %v494 = vsel %vm248, %v493, %v476
      %v495 = vrot.slane %v476, 4
      %v496 = vsel %vm248, %v488, %v495
      %v498 = vunpack.c.l.s4 1934713408
      %v499 = vunpack.c.0.s8 %v498
      %v500 = vperm.slane %v494, %v499
      %v502 = vunpack.c.l.s4 1934713408
      %v503 = vunpack.c.0.s8 %v502
      %v504 = vperm.slane %v496, %v503
      %v505 = vrot.slane %v492, 4
      %v506 = vsel %vm248, %v505, %v480
      %v507 = vrot.slane %v480, 4
      %v508 = vsel %vm248, %v492, %v507
      %v510 = vunpack.c.l.s4 1934713408
      %v511 = vunpack.c.0.s8 %v510
      %v512 = vperm.slane %v506, %v511
      %v514 = vunpack.c.l.s4 1934713408
      %v515 = vunpack.c.0.s8 %v514
      %v516 = vperm.slane %v508, %v515
      %v517 = vrot.slane %v500, 4
      %v518 = vsel %vm248, 0.0, %v517
      %v519 = vrot.slane %v504, 4
      %v520 = vsel %vm248, 0.0, %v519
      %v521 = vrot.slane %v512, 4
      %v522 = vsel %vm248, 0.0, %v521
      %v523 = vrot.slane %v516, 4
      %v524 = vsel %vm248, 0.0, %v523
      %v525 = vrot.slane %v456, 4
      %v526 = vsel %vm248, %v525, %v448
      %v527 = vrot.slane %v448, 4
      %v528 = vsel %vm248, %v456, %v527
      %v530 = vunpack.c.l.s4 1983009808
      %v531 = vunpack.c.0.s8 %v530
      %v532 = vperm.slane %v526, %v531
      %v534 = vunpack.c.l.s4 1983009808
      %v535 = vunpack.c.0.s8 %v534
      %v536 = vperm.slane %v528, %v535
      %v537 = vrot.slane %v460, 4
      %v538 = vsel %vm248, %v537, %v452
      %v539 = vrot.slane %v452, 4
      %v540 = vsel %vm248, %v460, %v539
      %v542 = vunpack.c.l.s4 1983009808
      %v543 = vunpack.c.0.s8 %v542
      %v544 = vperm.slane %v538, %v543
      %v546 = vunpack.c.l.s4 1983009808
      %v547 = vunpack.c.0.s8 %v546
      %v548 = vperm.slane %v540, %v547
      %v549 = vrot.slane %v544, 4
      %v550 = vsel %vm248, %v549, %v532
      %v551 = vrot.slane %v532, 4
      %v552 = vsel %vm248, %v544, %v551
      %v554 = vunpack.c.l.s4 1934713408
      %v555 = vunpack.c.0.s8 %v554
      %v556 = vperm.slane %v550, %v555
      %v558 = vunpack.c.l.s4 1934713408
      %v559 = vunpack.c.0.s8 %v558
      %v560 = vperm.slane %v552, %v559
      %v561 = vrot.slane %v548, 4
      %v562 = vsel %vm248, %v561, %v536
      %v563 = vrot.slane %v536, 4
      %v564 = vsel %vm248, %v548, %v563
      %v566 = vunpack.c.l.s4 1934713408
      %v567 = vunpack.c.0.s8 %v566
      %v568 = vperm.slane %v562, %v567
      %v570 = vunpack.c.l.s4 1934713408
      %v571 = vunpack.c.0.s8 %v570
      %v572 = vperm.slane %v564, %v571
      %v573 = vrot.slane %v556, 4
      %v574 = vsel %vm248, 0.0, %v573
      %v575 = vrot.slane %v560, 4
      %v576 = vsel %vm248, 0.0, %v575
      %v577 = vrot.slane %v568, 4
      %v578 = vsel %vm248, 0.0, %v577
      %v579 = vrot.slane %v572, 4
      %v580 = vsel %vm248, 0.0, %v579
      %582 = vrot.lane.b32.xlu0 %v518, 16
      %v583 = vpop.permute.xlu0 %582
      %586 = vrot.lane.b32.xlu0 %v504, 32
      %v587 = vpop.permute.xlu0 %586
      %590 = vrot.lane.b32.xlu0 %v520, 48
      %v591 = vpop.permute.xlu0 %590
      %594 = vrot.lane.b32.xlu0 %v512, 64
      %v595 = vpop.permute.xlu0 %594
      %598 = vrot.lane.b32.xlu0 %v522, 80
      %v599 = vpop.permute.xlu0 %598
      %602 = vrot.lane.b32.xlu0 %v516, 96
      %v603 = vpop.permute.xlu0 %602
      %606 = vrot.lane.b32.xlu0 %v524, 112
      %v607 = vpop.permute.xlu0 %606
      %610 = vrot.lane.b32.xlu0 %v574, 16
      %v611 = vpop.permute.xlu0 %610
      %614 = vrot.lane.b32.xlu0 %v560, 32
      %v615 = vpop.permute.xlu0 %614
      %618 = vrot.lane.b32.xlu0 %v576, 48
      %v619 = vpop.permute.xlu0 %618
      %622 = vrot.lane.b32.xlu0 %v568, 64
      %v623 = vpop.permute.xlu0 %622
      %626 = vrot.lane.b32.xlu0 %v578, 80
      %v627 = vpop.permute.xlu0 %626
      %630 = vrot.lane.b32.xlu0 %v572, 96
      %v631 = vpop.permute.xlu0 %630
      %634 = vrot.lane.b32.xlu0 %v580, 112
      %v635 = vpop.permute.xlu0 %634
      %v637 = vsel %vm416, %v500, %v583
      %v638 = vsel %vm418, %v637, %v587
      %v639 = vsel %vm420, %v638, %v591
      %v640 = vsel %vm422, %v639, %v595
      %v641 = vsel %vm424, %v640, %v599
      %v642 = vsel %vm426, %v641, %v603
      %v643 = vsel %vm428, %v642, %v607
      %v644 = vsel %vm416, %v556, %v611
      %v645 = vsel %vm418, %v644, %v615
      %v646 = vsel %vm420, %v645, %v619
      %v647 = vsel %vm422, %v646, %v623
      %v648 = vsel %vm424, %v647, %v627
      %v649 = vsel %vm426, %v648, %v631
      %v650 = vsel %vm428, %v649, %v635
      %651 = vrot.lane.b32.xlu0 %v235, 126
      %v652 = vpop.permute.xlu0 %651
      %653 = vrot.lane.b32.xlu0 %v236, 126
      %v654 = vpop.permute.xlu0 %653
      %655 = vrot.lane.b32.xlu0 %v238, 126
      %v656 = vpop.permute.xlu0 %655
      %657 = vrot.lane.b32.xlu0 %v239, 126
      %v658 = vpop.permute.xlu0 %657
      %659 = vrot.lane.b32.xlu0 %v241, 126
      %v660 = vpop.permute.xlu0 %659
      %661 = vrot.lane.b32.xlu0 %v242, 126
      %v662 = vpop.permute.xlu0 %661
      %663 = vrot.lane.b32.xlu0 %v244, 126
      %v664 = vpop.permute.xlu0 %663
      %665 = vrot.lane.b32.xlu0 %v245, 126
      %v666 = vpop.permute.xlu0 %665
      %v675 = vrot.slane %v660, 4
      %v676 = vsel %vm248, %v675, %v652
      %v677 = vrot.slane %v652, 4
      %v678 = vsel %vm248, %v660, %v677
      %v680 = vunpack.c.l.s4 1983009808
      %v681 = vunpack.c.0.s8 %v680
      %v682 = vperm.slane %v676, %v681
      %v684 = vunpack.c.l.s4 1983009808
      %v685 = vunpack.c.0.s8 %v684
      %v686 = vperm.slane %v678, %v685
      %v687 = vrot.slane %v664, 4
      %v688 = vsel %vm248, %v687, %v656
      %v689 = vrot.slane %v656, 4
      %v690 = vsel %vm248, %v664, %v689
      %v692 = vunpack.c.l.s4 1983009808
      %v693 = vunpack.c.0.s8 %v692
      %v694 = vperm.slane %v688, %v693
      %v696 = vunpack.c.l.s4 1983009808
      %v697 = vunpack.c.0.s8 %v696
      %v698 = vperm.slane %v690, %v697
      %v699 = vrot.slane %v694, 4
      %v700 = vsel %vm248, %v699, %v682
      %v701 = vrot.slane %v682, 4
      %v702 = vsel %vm248, %v694, %v701
      %v704 = vunpack.c.l.s4 1934713408
      %v705 = vunpack.c.0.s8 %v704
      %v706 = vperm.slane %v700, %v705
      %v708 = vunpack.c.l.s4 1934713408
      %v709 = vunpack.c.0.s8 %v708
      %v710 = vperm.slane %v702, %v709
      %v711 = vrot.slane %v698, 4
      %v712 = vsel %vm248, %v711, %v686
      %v713 = vrot.slane %v686, 4
      %v714 = vsel %vm248, %v698, %v713
      %v716 = vunpack.c.l.s4 1934713408
      %v717 = vunpack.c.0.s8 %v716
      %v718 = vperm.slane %v712, %v717
      %v720 = vunpack.c.l.s4 1934713408
      %v721 = vunpack.c.0.s8 %v720
      %v722 = vperm.slane %v714, %v721
      %v723 = vrot.slane %v706, 4
      %v724 = vsel %vm248, 0.0, %v723
      %v725 = vrot.slane %v710, 4
      %v726 = vsel %vm248, 0.0, %v725
      %v727 = vrot.slane %v718, 4
      %v728 = vsel %vm248, 0.0, %v727
      %v729 = vrot.slane %v722, 4
      %v730 = vsel %vm248, 0.0, %v729
      %v731 = vrot.slane %v662, 4
      %v732 = vsel %vm248, %v731, %v654
      %v733 = vrot.slane %v654, 4
      %v734 = vsel %vm248, %v662, %v733
      %v736 = vunpack.c.l.s4 1983009808
      %v737 = vunpack.c.0.s8 %v736
      %v738 = vperm.slane %v732, %v737
      %v740 = vunpack.c.l.s4 1983009808
      %v741 = vunpack.c.0.s8 %v740
      %v742 = vperm.slane %v734, %v741
      %v743 = vrot.slane %v666, 4
      %v744 = vsel %vm248, %v743, %v658
      %v745 = vrot.slane %v658, 4
      %v746 = vsel %vm248, %v666, %v745
      %v748 = vunpack.c.l.s4 1983009808
      %v749 = vunpack.c.0.s8 %v748
      %v750 = vperm.slane %v744, %v749
      %v752 = vunpack.c.l.s4 1983009808
      %v753 = vunpack.c.0.s8 %v752
      %v754 = vperm.slane %v746, %v753
      %v755 = vrot.slane %v750, 4
      %v756 = vsel %vm248, %v755, %v738
      %v757 = vrot.slane %v738, 4
      %v758 = vsel %vm248, %v750, %v757
      %v760 = vunpack.c.l.s4 1934713408
      %v761 = vunpack.c.0.s8 %v760
      %v762 = vperm.slane %v756, %v761
      %v764 = vunpack.c.l.s4 1934713408
      %v765 = vunpack.c.0.s8 %v764
      %v766 = vperm.slane %v758, %v765
      %v767 = vrot.slane %v754, 4
      %v768 = vsel %vm248, %v767, %v742
      %v769 = vrot.slane %v742, 4
      %v770 = vsel %vm248, %v754, %v769
      %v772 = vunpack.c.l.s4 1934713408
      %v773 = vunpack.c.0.s8 %v772
      %v774 = vperm.slane %v768, %v773
      %v776 = vunpack.c.l.s4 1934713408
      %v777 = vunpack.c.0.s8 %v776
      %v778 = vperm.slane %v770, %v777
      %v779 = vrot.slane %v762, 4
      %v780 = vsel %vm248, 0.0, %v779
      %v781 = vrot.slane %v766, 4
      %v782 = vsel %vm248, 0.0, %v781
      %v783 = vrot.slane %v774, 4
      %v784 = vsel %vm248, 0.0, %v783
      %v785 = vrot.slane %v778, 4
      %v786 = vsel %vm248, 0.0, %v785
      %788 = vrot.lane.b32.xlu0 %v724, 16
      %v789 = vpop.permute.xlu0 %788
      %792 = vrot.lane.b32.xlu0 %v710, 32
      %v793 = vpop.permute.xlu0 %792
      %796 = vrot.lane.b32.xlu0 %v726, 48
      %v797 = vpop.permute.xlu0 %796
      %800 = vrot.lane.b32.xlu0 %v718, 64
      %v801 = vpop.permute.xlu0 %800
      %804 = vrot.lane.b32.xlu0 %v728, 80
      %v805 = vpop.permute.xlu0 %804
      %808 = vrot.lane.b32.xlu0 %v722, 96
      %v809 = vpop.permute.xlu0 %808
      %812 = vrot.lane.b32.xlu0 %v730, 112
      %v813 = vpop.permute.xlu0 %812
      %816 = vrot.lane.b32.xlu0 %v780, 16
      %v817 = vpop.permute.xlu0 %816
      %820 = vrot.lane.b32.xlu0 %v766, 32
      %v821 = vpop.permute.xlu0 %820
      %824 = vrot.lane.b32.xlu0 %v782, 48
      %v825 = vpop.permute.xlu0 %824
      %828 = vrot.lane.b32.xlu0 %v774, 64
      %v829 = vpop.permute.xlu0 %828
      %832 = vrot.lane.b32.xlu0 %v784, 80
      %v833 = vpop.permute.xlu0 %832
      %836 = vrot.lane.b32.xlu0 %v778, 96
      %v837 = vpop.permute.xlu0 %836
      %840 = vrot.lane.b32.xlu0 %v786, 112
      %v841 = vpop.permute.xlu0 %840
      %v843 = vsel %vm416, %v706, %v789
      %v844 = vsel %vm418, %v843, %v793
      %v845 = vsel %vm420, %v844, %v797
      %v846 = vsel %vm422, %v845, %v801
      %v847 = vsel %vm424, %v846, %v805
      %v848 = vsel %vm426, %v847, %v809
      %v849 = vsel %vm428, %v848, %v813
      %v850 = vsel %vm416, %v762, %v817
      %v851 = vsel %vm418, %v850, %v821
      %v852 = vsel %vm420, %v851, %v825
      %v853 = vsel %vm422, %v852, %v829
      %v854 = vsel %vm424, %v853, %v833
      %v855 = vsel %vm426, %v854, %v837
      %v856 = vsel %vm428, %v855, %v841
      %vm861 = vcmask 1046528
      %v862 = vrot.slane %v235, 1
      %v863 = vrot.slane %v236, 1
      %v864 = vsel %vm861, %v862, %v863
      %v865 = vrot.slane %v237, 1
      %v866 = vsel %vm861, %v863, %v865
      %v867 = vrot.slane %v238, 1
      %v868 = vrot.slane %v239, 1
      %v869 = vsel %vm861, %v867, %v868
      %v870 = vrot.slane %v240, 1
      %v871 = vsel %vm861, %v868, %v870
      %v872 = vrot.slane %v241, 1
      %v873 = vrot.slane %v242, 1
      %v874 = vsel %vm861, %v872, %v873
      %v875 = vrot.slane %v243, 1
      %v876 = vsel %vm861, %v873, %v875
      %v877 = vrot.slane %v244, 1
      %v878 = vrot.slane %v245, 1
      %v879 = vsel %vm861, %v877, %v878
      %v880 = vrot.slane %v246, 1
      %v881 = vsel %vm861, %v878, %v880
      %v890 = vrot.slane %v874, 4
      %v891 = vsel %vm248, %v890, %v864
      %v892 = vrot.slane %v864, 4
      %v893 = vsel %vm248, %v874, %v892
      %v895 = vunpack.c.l.s4 1983009808
      %v896 = vunpack.c.0.s8 %v895
      %v897 = vperm.slane %v891, %v896
      %v899 = vunpack.c.l.s4 1983009808
      %v900 = vunpack.c.0.s8 %v899
      %v901 = vperm.slane %v893, %v900
      %v902 = vrot.slane %v879, 4
      %v903 = vsel %vm248, %v902, %v869
      %v904 = vrot.slane %v869, 4
      %v905 = vsel %vm248, %v879, %v904
      %v907 = vunpack.c.l.s4 1983009808
      %v908 = vunpack.c.0.s8 %v907
      %v909 = vperm.slane %v903, %v908
      %v911 = vunpack.c.l.s4 1983009808
      %v912 = vunpack.c.0.s8 %v911
      %v913 = vperm.slane %v905, %v912
      %v914 = vrot.slane %v909, 4
      %v915 = vsel %vm248, %v914, %v897
      %v916 = vrot.slane %v897, 4
      %v917 = vsel %vm248, %v909, %v916
      %v919 = vunpack.c.l.s4 1934713408
      %v920 = vunpack.c.0.s8 %v919
      %v921 = vperm.slane %v915, %v920
      %v923 = vunpack.c.l.s4 1934713408
      %v924 = vunpack.c.0.s8 %v923
      %v925 = vperm.slane %v917, %v924
      %v926 = vrot.slane %v913, 4
      %v927 = vsel %vm248, %v926, %v901
      %v928 = vrot.slane %v901, 4
      %v929 = vsel %vm248, %v913, %v928
      %v931 = vunpack.c.l.s4 1934713408
      %v932 = vunpack.c.0.s8 %v931
      %v933 = vperm.slane %v927, %v932
      %v935 = vunpack.c.l.s4 1934713408
      %v936 = vunpack.c.0.s8 %v935
      %v937 = vperm.slane %v929, %v936
      %v938 = vrot.slane %v921, 4
      %v939 = vsel %vm248, 0.0, %v938
      %v940 = vrot.slane %v925, 4
      %v941 = vsel %vm248, 0.0, %v940
      %v942 = vrot.slane %v933, 4
      %v943 = vsel %vm248, 0.0, %v942
      %v944 = vrot.slane %v937, 4
      %v945 = vsel %vm248, 0.0, %v944
      %v946 = vrot.slane %v876, 4
      %v947 = vsel %vm248, %v946, %v866
      %v948 = vrot.slane %v866, 4
      %v949 = vsel %vm248, %v876, %v948
      %v951 = vunpack.c.l.s4 1983009808
      %v952 = vunpack.c.0.s8 %v951
      %v953 = vperm.slane %v947, %v952
      %v955 = vunpack.c.l.s4 1983009808
      %v956 = vunpack.c.0.s8 %v955
      %v957 = vperm.slane %v949, %v956
      %v958 = vrot.slane %v881, 4
      %v959 = vsel %vm248, %v958, %v871
      %v960 = vrot.slane %v871, 4
      %v961 = vsel %vm248, %v881, %v960
      %v963 = vunpack.c.l.s4 1983009808
      %v964 = vunpack.c.0.s8 %v963
      %v965 = vperm.slane %v959, %v964
      %v967 = vunpack.c.l.s4 1983009808
      %v968 = vunpack.c.0.s8 %v967
      %v969 = vperm.slane %v961, %v968
      %v970 = vrot.slane %v965, 4
      %v971 = vsel %vm248, %v970, %v953
      %v972 = vrot.slane %v953, 4
      %v973 = vsel %vm248, %v965, %v972
      %v975 = vunpack.c.l.s4 1934713408
      %v976 = vunpack.c.0.s8 %v975
      %v977 = vperm.slane %v971, %v976
      %v979 = vunpack.c.l.s4 1934713408
      %v980 = vunpack.c.0.s8 %v979
      %v981 = vperm.slane %v973, %v980
      %v982 = vrot.slane %v969, 4
      %v983 = vsel %vm248, %v982, %v957
      %v984 = vrot.slane %v957, 4
      %v985 = vsel %vm248, %v969, %v984
      %v987 = vunpack.c.l.s4 1934713408
      %v988 = vunpack.c.0.s8 %v987
      %v989 = vperm.slane %v983, %v988
      %v991 = vunpack.c.l.s4 1934713408
      %v992 = vunpack.c.0.s8 %v991
      %v993 = vperm.slane %v985, %v992
      %v994 = vrot.slane %v977, 4
      %v995 = vsel %vm248, 0.0, %v994
      %v996 = vrot.slane %v981, 4
      %v997 = vsel %vm248, 0.0, %v996
      %v998 = vrot.slane %v989, 4
      %v999 = vsel %vm248, 0.0, %v998
      %v1000 = vrot.slane %v993, 4
      %v1001 = vsel %vm248, 0.0, %v1000
      %1003 = vrot.lane.b32.xlu0 %v939, 16
      %v1004 = vpop.permute.xlu0 %1003
      %1007 = vrot.lane.b32.xlu0 %v925, 32
      %v1008 = vpop.permute.xlu0 %1007
      %1011 = vrot.lane.b32.xlu0 %v941, 48
      %v1012 = vpop.permute.xlu0 %1011
      %1015 = vrot.lane.b32.xlu0 %v933, 64
      %v1016 = vpop.permute.xlu0 %1015
      %1019 = vrot.lane.b32.xlu0 %v943, 80
      %v1020 = vpop.permute.xlu0 %1019
      %1023 = vrot.lane.b32.xlu0 %v937, 96
      %v1024 = vpop.permute.xlu0 %1023
      %1027 = vrot.lane.b32.xlu0 %v945, 112
      %v1028 = vpop.permute.xlu0 %1027
      %1031 = vrot.lane.b32.xlu0 %v995, 16
      %v1032 = vpop.permute.xlu0 %1031
      %1035 = vrot.lane.b32.xlu0 %v981, 32
      %v1036 = vpop.permute.xlu0 %1035
      %1039 = vrot.lane.b32.xlu0 %v997, 48
      %v1040 = vpop.permute.xlu0 %1039
      %1043 = vrot.lane.b32.xlu0 %v989, 64
      %v1044 = vpop.permute.xlu0 %1043
      %1047 = vrot.lane.b32.xlu0 %v999, 80
      %v1048 = vpop.permute.xlu0 %1047
      %1051 = vrot.lane.b32.xlu0 %v993, 96
      %v1052 = vpop.permute.xlu0 %1051
      %1055 = vrot.lane.b32.xlu0 %v1001, 112
      %v1056 = vpop.permute.xlu0 %1055
      %v1058 = vsel %vm416, %v921, %v1004
      %v1059 = vsel %vm418, %v1058, %v1008
      %v1060 = vsel %vm420, %v1059, %v1012
      %v1061 = vsel %vm422, %v1060, %v1016
      %v1062 = vsel %vm424, %v1061, %v1020
      %v1063 = vsel %vm426, %v1062, %v1024
      %v1064 = vsel %vm428, %v1063, %v1028
      %v1065 = vsel %vm416, %v977, %v1032
      %v1066 = vsel %vm418, %v1065, %v1036
      %v1067 = vsel %vm420, %v1066, %v1040
      %v1068 = vsel %vm422, %v1067, %v1044
      %v1069 = vsel %vm424, %v1068, %v1048
      %v1070 = vsel %vm426, %v1069, %v1052
      %v1071 = vsel %vm428, %v1070, %v1056
      %1072 = vrot.lane.b32.xlu0 %v864, 127
      %v1073 = vpop.permute.xlu0 %1072
      %1074 = vrot.lane.b32.xlu0 %v866, 127
      %v1075 = vpop.permute.xlu0 %1074
      %1076 = vrot.lane.b32.xlu0 %v869, 127
      %v1077 = vpop.permute.xlu0 %1076
      %1078 = vrot.lane.b32.xlu0 %v871, 127
      %v1079 = vpop.permute.xlu0 %1078
      %1080 = vrot.lane.b32.xlu0 %v874, 127
      %v1081 = vpop.permute.xlu0 %1080
      %1082 = vrot.lane.b32.xlu0 %v876, 127
      %v1083 = vpop.permute.xlu0 %1082
      %1084 = vrot.lane.b32.xlu0 %v879, 127
      %v1085 = vpop.permute.xlu0 %1084
      %1086 = vrot.lane.b32.xlu0 %v881, 127
      %v1087 = vpop.permute.xlu0 %1086
      %v1096 = vrot.slane %v1081, 4
      %v1097 = vsel %vm248, %v1096, %v1073
      %v1098 = vrot.slane %v1073, 4
      %v1099 = vsel %vm248, %v1081, %v1098
      %v1101 = vunpack.c.l.s4 1983009808
      %v1102 = vunpack.c.0.s8 %v1101
      %v1103 = vperm.slane %v1097, %v1102
      %v1105 = vunpack.c.l.s4 1983009808
      %v1106 = vunpack.c.0.s8 %v1105
      %v1107 = vperm.slane %v1099, %v1106
      %v1108 = vrot.slane %v1085, 4
      %v1109 = vsel %vm248, %v1108, %v1077
      %v1110 = vrot.slane %v1077, 4
      %v1111 = vsel %vm248, %v1085, %v1110
      %v1113 = vunpack.c.l.s4 1983009808
      %v1114 = vunpack.c.0.s8 %v1113
      %v1115 = vperm.slane %v1109, %v1114
      %v1117 = vunpack.c.l.s4 1983009808
      %v1118 = vunpack.c.0.s8 %v1117
      %v1119 = vperm.slane %v1111, %v1118
      %v1120 = vrot.slane %v1115, 4
      %v1121 = vsel %vm248, %v1120, %v1103
      %v1122 = vrot.slane %v1103, 4
      %v1123 = vsel %vm248, %v1115, %v1122
      %v1125 = vunpack.c.l.s4 1934713408
      %v1126 = vunpack.c.0.s8 %v1125
      %v1127 = vperm.slane %v1121, %v1126
      %v1129 = vunpack.c.l.s4 1934713408
      %v1130 = vunpack.c.0.s8 %v1129
      %v1131 = vperm.slane %v1123, %v1130
      %v1132 = vrot.slane %v1119, 4
      %v1133 = vsel %vm248, %v1132, %v1107
      %v1134 = vrot.slane %v1107, 4
      %v1135 = vsel %vm248, %v1119, %v1134
      %v1137 = vunpack.c.l.s4 1934713408
      %v1138 = vunpack.c.0.s8 %v1137
      %v1139 = vperm.slane %v1133, %v1138
      %v1141 = vunpack.c.l.s4 1934713408
      %v1142 = vunpack.c.0.s8 %v1141
      %v1143 = vperm.slane %v1135, %v1142
      %v1144 = vrot.slane %v1127, 4
      %v1145 = vsel %vm248, 0.0, %v1144
      %v1146 = vrot.slane %v1131, 4
      %v1147 = vsel %vm248, 0.0, %v1146
      %v1148 = vrot.slane %v1139, 4
      %v1149 = vsel %vm248, 0.0, %v1148
      %v1150 = vrot.slane %v1143, 4
      %v1151 = vsel %vm248, 0.0, %v1150
      %v1152 = vrot.slane %v1083, 4
      %v1153 = vsel %vm248, %v1152, %v1075
      %v1154 = vrot.slane %v1075, 4
      %v1155 = vsel %vm248, %v1083, %v1154
      %v1157 = vunpack.c.l.s4 1983009808
      %v1158 = vunpack.c.0.s8 %v1157
      %v1159 = vperm.slane %v1153, %v1158
      %v1161 = vunpack.c.l.s4 1983009808
      %v1162 = vunpack.c.0.s8 %v1161
      %v1163 = vperm.slane %v1155, %v1162
      %v1164 = vrot.slane %v1087, 4
      %v1165 = vsel %vm248, %v1164, %v1079
      %v1166 = vrot.slane %v1079, 4
      %v1167 = vsel %vm248, %v1087, %v1166
      %v1169 = vunpack.c.l.s4 1983009808
      %v1170 = vunpack.c.0.s8 %v1169
      %v1171 = vperm.slane %v1165, %v1170
      %v1173 = vunpack.c.l.s4 1983009808
      %v1174 = vunpack.c.0.s8 %v1173
      %v1175 = vperm.slane %v1167, %v1174
      %v1176 = vrot.slane %v1171, 4
      %v1177 = vsel %vm248, %v1176, %v1159
      %v1178 = vrot.slane %v1159, 4
      %v1179 = vsel %vm248, %v1171, %v1178
      %v1181 = vunpack.c.l.s4 1934713408
      %v1182 = vunpack.c.0.s8 %v1181
      %v1183 = vperm.slane %v1177, %v1182
      %v1185 = vunpack.c.l.s4 1934713408
      %v1186 = vunpack.c.0.s8 %v1185
      %v1187 = vperm.slane %v1179, %v1186
      %v1188 = vrot.slane %v1175, 4
      %v1189 = vsel %vm248, %v1188, %v1163
      %v1190 = vrot.slane %v1163, 4
      %v1191 = vsel %vm248, %v1175, %v1190
      %v1193 = vunpack.c.l.s4 1934713408
      %v1194 = vunpack.c.0.s8 %v1193
      %v1195 = vperm.slane %v1189, %v1194
      %v1197 = vunpack.c.l.s4 1934713408
      %v1198 = vunpack.c.0.s8 %v1197
      %v1199 = vperm.slane %v1191, %v1198
      %v1200 = vrot.slane %v1183, 4
      %v1201 = vsel %vm248, 0.0, %v1200
      %v1202 = vrot.slane %v1187, 4
      %v1203 = vsel %vm248, 0.0, %v1202
      %v1204 = vrot.slane %v1195, 4
      %v1205 = vsel %vm248, 0.0, %v1204
      %v1206 = vrot.slane %v1199, 4
      %v1207 = vsel %vm248, 0.0, %v1206
      %1209 = vrot.lane.b32.xlu0 %v1145, 16
      %v1210 = vpop.permute.xlu0 %1209
      %1213 = vrot.lane.b32.xlu0 %v1131, 32
      %v1214 = vpop.permute.xlu0 %1213
      %1217 = vrot.lane.b32.xlu0 %v1147, 48
      %v1218 = vpop.permute.xlu0 %1217
      %1221 = vrot.lane.b32.xlu0 %v1139, 64
      %v1222 = vpop.permute.xlu0 %1221
      %1225 = vrot.lane.b32.xlu0 %v1149, 80
      %v1226 = vpop.permute.xlu0 %1225
      %1229 = vrot.lane.b32.xlu0 %v1143, 96
      %v1230 = vpop.permute.xlu0 %1229
      %1233 = vrot.lane.b32.xlu0 %v1151, 112
      %v1234 = vpop.permute.xlu0 %1233
      %1237 = vrot.lane.b32.xlu0 %v1201, 16
      %v1238 = vpop.permute.xlu0 %1237
      %1241 = vrot.lane.b32.xlu0 %v1187, 32
      %v1242 = vpop.permute.xlu0 %1241
      %1245 = vrot.lane.b32.xlu0 %v1203, 48
      %v1246 = vpop.permute.xlu0 %1245
      %1249 = vrot.lane.b32.xlu0 %v1195, 64
      %v1250 = vpop.permute.xlu0 %1249
      %1253 = vrot.lane.b32.xlu0 %v1205, 80
      %v1254 = vpop.permute.xlu0 %1253
      %1257 = vrot.lane.b32.xlu0 %v1199, 96
      %v1258 = vpop.permute.xlu0 %1257
      %1261 = vrot.lane.b32.xlu0 %v1207, 112
      %v1262 = vpop.permute.xlu0 %1261
      %v1264 = vsel %vm416, %v1127, %v1210
      %v1265 = vsel %vm418, %v1264, %v1214
      %v1266 = vsel %vm420, %v1265, %v1218
      %v1267 = vsel %vm422, %v1266, %v1222
      %v1268 = vsel %vm424, %v1267, %v1226
      %v1269 = vsel %vm426, %v1268, %v1230
      %v1270 = vsel %vm428, %v1269, %v1234
      %v1271 = vsel %vm416, %v1183, %v1238
      %v1272 = vsel %vm418, %v1271, %v1242
      %v1273 = vsel %vm420, %v1272, %v1246
      %v1274 = vsel %vm422, %v1273, %v1250
      %v1275 = vsel %vm424, %v1274, %v1254
      %v1276 = vsel %vm426, %v1275, %v1258
      %v1277 = vsel %vm428, %v1276, %v1262
      %1278 = vrot.lane.b32.xlu0 %v864, 126
      %v1279 = vpop.permute.xlu0 %1278
      %1280 = vrot.lane.b32.xlu0 %v866, 126
      %v1281 = vpop.permute.xlu0 %1280
      %1282 = vrot.lane.b32.xlu0 %v869, 126
      %v1283 = vpop.permute.xlu0 %1282
      %1284 = vrot.lane.b32.xlu0 %v871, 126
      %v1285 = vpop.permute.xlu0 %1284
      %1286 = vrot.lane.b32.xlu0 %v874, 126
      %v1287 = vpop.permute.xlu0 %1286
      %1288 = vrot.lane.b32.xlu0 %v876, 126
      %v1289 = vpop.permute.xlu0 %1288
      %1290 = vrot.lane.b32.xlu0 %v879, 126
      %v1291 = vpop.permute.xlu0 %1290
      %1292 = vrot.lane.b32.xlu0 %v881, 126
      %v1293 = vpop.permute.xlu0 %1292
      %v1302 = vrot.slane %v1287, 4
      %v1303 = vsel %vm248, %v1302, %v1279
      %v1304 = vrot.slane %v1279, 4
      %v1305 = vsel %vm248, %v1287, %v1304
      %v1307 = vunpack.c.l.s4 1983009808
      %v1308 = vunpack.c.0.s8 %v1307
      %v1309 = vperm.slane %v1303, %v1308
      %v1311 = vunpack.c.l.s4 1983009808
      %v1312 = vunpack.c.0.s8 %v1311
      %v1313 = vperm.slane %v1305, %v1312
      %v1314 = vrot.slane %v1291, 4
      %v1315 = vsel %vm248, %v1314, %v1283
      %v1316 = vrot.slane %v1283, 4
      %v1317 = vsel %vm248, %v1291, %v1316
      %v1319 = vunpack.c.l.s4 1983009808
      %v1320 = vunpack.c.0.s8 %v1319
      %v1321 = vperm.slane %v1315, %v1320
      %v1323 = vunpack.c.l.s4 1983009808
      %v1324 = vunpack.c.0.s8 %v1323
      %v1325 = vperm.slane %v1317, %v1324
      %v1326 = vrot.slane %v1321, 4
      %v1327 = vsel %vm248, %v1326, %v1309
      %v1328 = vrot.slane %v1309, 4
      %v1329 = vsel %vm248, %v1321, %v1328
      %v1331 = vunpack.c.l.s4 1934713408
      %v1332 = vunpack.c.0.s8 %v1331
      %v1333 = vperm.slane %v1327, %v1332
      %v1335 = vunpack.c.l.s4 1934713408
      %v1336 = vunpack.c.0.s8 %v1335
      %v1337 = vperm.slane %v1329, %v1336
      %v1338 = vrot.slane %v1325, 4
      %v1339 = vsel %vm248, %v1338, %v1313
      %v1340 = vrot.slane %v1313, 4
      %v1341 = vsel %vm248, %v1325, %v1340
      %v1343 = vunpack.c.l.s4 1934713408
      %v1344 = vunpack.c.0.s8 %v1343
      %v1345 = vperm.slane %v1339, %v1344
      %v1347 = vunpack.c.l.s4 1934713408
      %v1348 = vunpack.c.0.s8 %v1347
      %v1349 = vperm.slane %v1341, %v1348
      %v1350 = vrot.slane %v1333, 4
      %v1351 = vsel %vm248, 0.0, %v1350
      %v1352 = vrot.slane %v1337, 4
      %v1353 = vsel %vm248, 0.0, %v1352
      %v1354 = vrot.slane %v1345, 4
      %v1355 = vsel %vm248, 0.0, %v1354
      %v1356 = vrot.slane %v1349, 4
      %v1357 = vsel %vm248, 0.0, %v1356
      %v1358 = vrot.slane %v1289, 4
      %v1359 = vsel %vm248, %v1358, %v1281
      %v1360 = vrot.slane %v1281, 4
      %v1361 = vsel %vm248, %v1289, %v1360
      %v1363 = vunpack.c.l.s4 1983009808
      %v1364 = vunpack.c.0.s8 %v1363
      %v1365 = vperm.slane %v1359, %v1364
      %v1367 = vunpack.c.l.s4 1983009808
      %v1368 = vunpack.c.0.s8 %v1367
      %v1369 = vperm.slane %v1361, %v1368
      %v1370 = vrot.slane %v1293, 4
      %v1371 = vsel %vm248, %v1370, %v1285
      %v1372 = vrot.slane %v1285, 4
      %v1373 = vsel %vm248, %v1293, %v1372
      %v1375 = vunpack.c.l.s4 1983009808
      %v1376 = vunpack.c.0.s8 %v1375
      %v1377 = vperm.slane %v1371, %v1376
      %v1379 = vunpack.c.l.s4 1983009808
      %v1380 = vunpack.c.0.s8 %v1379
      %v1381 = vperm.slane %v1373, %v1380
      %v1382 = vrot.slane %v1377, 4
      %v1383 = vsel %vm248, %v1382, %v1365
      %v1384 = vrot.slane %v1365, 4
      %v1385 = vsel %vm248, %v1377, %v1384
      %v1387 = vunpack.c.l.s4 1934713408
      %v1388 = vunpack.c.0.s8 %v1387
      %v1389 = vperm.slane %v1383, %v1388
      %v1391 = vunpack.c.l.s4 1934713408
      %v1392 = vunpack.c.0.s8 %v1391
      %v1393 = vperm.slane %v1385, %v1392
      %v1394 = vrot.slane %v1381, 4
      %v1395 = vsel %vm248, %v1394, %v1369
      %v1396 = vrot.slane %v1369, 4
      %v1397 = vsel %vm248, %v1381, %v1396
      %v1399 = vunpack.c.l.s4 1934713408
      %v1400 = vunpack.c.0.s8 %v1399
      %v1401 = vperm.slane %v1395, %v1400
      %v1403 = vunpack.c.l.s4 1934713408
      %v1404 = vunpack.c.0.s8 %v1403
      %v1405 = vperm.slane %v1397, %v1404
      %v1406 = vrot.slane %v1389, 4
      %v1407 = vsel %vm248, 0.0, %v1406
      %v1408 = vrot.slane %v1393, 4
      %v1409 = vsel %vm248, 0.0, %v1408
      %v1410 = vrot.slane %v1401, 4
      %v1411 = vsel %vm248, 0.0, %v1410
      %v1412 = vrot.slane %v1405, 4
      %v1413 = vsel %vm248, 0.0, %v1412
      %1415 = vrot.lane.b32.xlu0 %v1351, 16
      %v1416 = vpop.permute.xlu0 %1415
      %1419 = vrot.lane.b32.xlu0 %v1337, 32
      %v1420 = vpop.permute.xlu0 %1419
      %1423 = vrot.lane.b32.xlu0 %v1353, 48
      %v1424 = vpop.permute.xlu0 %1423
      %1427 = vrot.lane.b32.xlu0 %v1345, 64
      %v1428 = vpop.permute.xlu0 %1427
      %1431 = vrot.lane.b32.xlu0 %v1355, 80
      %v1432 = vpop.permute.xlu0 %1431
      %1435 = vrot.lane.b32.xlu0 %v1349, 96
      %v1436 = vpop.permute.xlu0 %1435
      %1439 = vrot.lane.b32.xlu0 %v1357, 112
      %v1440 = vpop.permute.xlu0 %1439
      %1443 = vrot.lane.b32.xlu0 %v1407, 16
      %v1444 = vpop.permute.xlu0 %1443
      %1447 = vrot.lane.b32.xlu0 %v1393, 32
      %v1448 = vpop.permute.xlu0 %1447
      %1451 = vrot.lane.b32.xlu0 %v1409, 48
      %v1452 = vpop.permute.xlu0 %1451
      %1455 = vrot.lane.b32.xlu0 %v1401, 64
      %v1456 = vpop.permute.xlu0 %1455
      %1459 = vrot.lane.b32.xlu0 %v1411, 80
      %v1460 = vpop.permute.xlu0 %1459
      %1463 = vrot.lane.b32.xlu0 %v1405, 96
      %v1464 = vpop.permute.xlu0 %1463
      %1467 = vrot.lane.b32.xlu0 %v1413, 112
      %v1468 = vpop.permute.xlu0 %1467
      %v1470 = vsel %vm416, %v1333, %v1416
      %v1471 = vsel %vm418, %v1470, %v1420
      %v1472 = vsel %vm420, %v1471, %v1424
      %v1473 = vsel %vm422, %v1472, %v1428
      %v1474 = vsel %vm424, %v1473, %v1432
      %v1475 = vsel %vm426, %v1474, %v1436
      %v1476 = vsel %vm428, %v1475, %v1440
      %v1477 = vsel %vm416, %v1389, %v1444
      %v1478 = vsel %vm418, %v1477, %v1448
      %v1479 = vsel %vm420, %v1478, %v1452
      %v1480 = vsel %vm422, %v1479, %v1456
      %v1481 = vsel %vm424, %v1480, %v1460
      %v1482 = vsel %vm426, %v1481, %v1464
      %v1483 = vsel %vm428, %v1482, %v1468
      %vm1484 = vcmask 1045504
      %v1485 = vrot.slane %v235, 2
      %v1486 = vrot.slane %v236, 2
      %v1487 = vsel %vm1484, %v1485, %v1486
      %v1488 = vrot.slane %v237, 2
      %v1489 = vsel %vm1484, %v1486, %v1488
      %v1490 = vrot.slane %v238, 2
      %v1491 = vrot.slane %v239, 2
      %v1492 = vsel %vm1484, %v1490, %v1491
      %v1493 = vrot.slane %v240, 2
      %v1494 = vsel %vm1484, %v1491, %v1493
      %v1495 = vrot.slane %v241, 2
      %v1496 = vrot.slane %v242, 2
      %v1497 = vsel %vm1484, %v1495, %v1496
      %v1498 = vrot.slane %v243, 2
      %v1499 = vsel %vm1484, %v1496, %v1498
      %v1500 = vrot.slane %v244, 2
      %v1501 = vrot.slane %v245, 2
      %v1502 = vsel %vm1484, %v1500, %v1501
      %v1503 = vrot.slane %v246, 2
      %v1504 = vsel %vm1484, %v1501, %v1503
      %v1513 = vrot.slane %v1497, 4
      %v1514 = vsel %vm248, %v1513, %v1487
      %v1515 = vrot.slane %v1487, 4
      %v1516 = vsel %vm248, %v1497, %v1515
      %v1518 = vunpack.c.l.s4 1983009808
      %v1519 = vunpack.c.0.s8 %v1518
      %v1520 = vperm.slane %v1514, %v1519
      %v1522 = vunpack.c.l.s4 1983009808
      %v1523 = vunpack.c.0.s8 %v1522
      %v1524 = vperm.slane %v1516, %v1523
      %v1525 = vrot.slane %v1502, 4
      %v1526 = vsel %vm248, %v1525, %v1492
      %v1527 = vrot.slane %v1492, 4
      %v1528 = vsel %vm248, %v1502, %v1527
      %v1530 = vunpack.c.l.s4 1983009808
      %v1531 = vunpack.c.0.s8 %v1530
      %v1532 = vperm.slane %v1526, %v1531
      %v1534 = vunpack.c.l.s4 1983009808
      %v1535 = vunpack.c.0.s8 %v1534
      %v1536 = vperm.slane %v1528, %v1535
      %v1537 = vrot.slane %v1532, 4
      %v1538 = vsel %vm248, %v1537, %v1520
      %v1539 = vrot.slane %v1520, 4
      %v1540 = vsel %vm248, %v1532, %v1539
      %v1542 = vunpack.c.l.s4 1934713408
      %v1543 = vunpack.c.0.s8 %v1542
      %v1544 = vperm.slane %v1538, %v1543
      %v1546 = vunpack.c.l.s4 1934713408
      %v1547 = vunpack.c.0.s8 %v1546
      %v1548 = vperm.slane %v1540, %v1547
      %v1549 = vrot.slane %v1536, 4
      %v1550 = vsel %vm248, %v1549, %v1524
      %v1551 = vrot.slane %v1524, 4
      %v1552 = vsel %vm248, %v1536, %v1551
      %v1554 = vunpack.c.l.s4 1934713408
      %v1555 = vunpack.c.0.s8 %v1554
      %v1556 = vperm.slane %v1550, %v1555
      %v1558 = vunpack.c.l.s4 1934713408
      %v1559 = vunpack.c.0.s8 %v1558
      %v1560 = vperm.slane %v1552, %v1559
      %v1561 = vrot.slane %v1544, 4
      %v1562 = vsel %vm248, 0.0, %v1561
      %v1563 = vrot.slane %v1548, 4
      %v1564 = vsel %vm248, 0.0, %v1563
      %v1565 = vrot.slane %v1556, 4
      %v1566 = vsel %vm248, 0.0, %v1565
      %v1567 = vrot.slane %v1560, 4
      %v1568 = vsel %vm248, 0.0, %v1567
      %v1569 = vrot.slane %v1499, 4
      %v1570 = vsel %vm248, %v1569, %v1489
      %v1571 = vrot.slane %v1489, 4
      %v1572 = vsel %vm248, %v1499, %v1571
      %v1574 = vunpack.c.l.s4 1983009808
      %v1575 = vunpack.c.0.s8 %v1574
      %v1576 = vperm.slane %v1570, %v1575
      %v1578 = vunpack.c.l.s4 1983009808
      %v1579 = vunpack.c.0.s8 %v1578
      %v1580 = vperm.slane %v1572, %v1579
      %v1581 = vrot.slane %v1504, 4
      %v1582 = vsel %vm248, %v1581, %v1494
      %v1583 = vrot.slane %v1494, 4
      %v1584 = vsel %vm248, %v1504, %v1583
      %v1586 = vunpack.c.l.s4 1983009808
      %v1587 = vunpack.c.0.s8 %v1586
      %v1588 = vperm.slane %v1582, %v1587
      %v1590 = vunpack.c.l.s4 1983009808
      %v1591 = vunpack.c.0.s8 %v1590
      %v1592 = vperm.slane %v1584, %v1591
      %v1593 = vrot.slane %v1588, 4
      %v1594 = vsel %vm248, %v1593, %v1576
      %v1595 = vrot.slane %v1576, 4
      %v1596 = vsel %vm248, %v1588, %v1595
      %v1598 = vunpack.c.l.s4 1934713408
      %v1599 = vunpack.c.0.s8 %v1598
      %v1600 = vperm.slane %v1594, %v1599
      %v1602 = vunpack.c.l.s4 1934713408
      %v1603 = vunpack.c.0.s8 %v1602
      %v1604 = vperm.slane %v1596, %v1603
      %v1605 = vrot.slane %v1592, 4
      %v1606 = vsel %vm248, %v1605, %v1580
      %v1607 = vrot.slane %v1580, 4
      %v1608 = vsel %vm248, %v1592, %v1607
      %v1610 = vunpack.c.l.s4 1934713408
      %v1611 = vunpack.c.0.s8 %v1610
      %v1612 = vperm.slane %v1606, %v1611
      %v1614 = vunpack.c.l.s4 1934713408
      %v1615 = vunpack.c.0.s8 %v1614
      %v1616 = vperm.slane %v1608, %v1615
      %v1617 = vrot.slane %v1600, 4
      %v1618 = vsel %vm248, 0.0, %v1617
      %v1619 = vrot.slane %v1604, 4
      %v1620 = vsel %vm248, 0.0, %v1619
      %v1621 = vrot.slane %v1612, 4
      %v1622 = vsel %vm248, 0.0, %v1621
      %v1623 = vrot.slane %v1616, 4
      %v1624 = vsel %vm248, 0.0, %v1623
      %1626 = vrot.lane.b32.xlu0 %v1562, 16
      %v1627 = vpop.permute.xlu0 %1626
      %1630 = vrot.lane.b32.xlu0 %v1548, 32
      %v1631 = vpop.permute.xlu0 %1630
      %1634 = vrot.lane.b32.xlu0 %v1564, 48
      %v1635 = vpop.permute.xlu0 %1634
      %1638 = vrot.lane.b32.xlu0 %v1556, 64
      %v1639 = vpop.permute.xlu0 %1638
      %1642 = vrot.lane.b32.xlu0 %v1566, 80
      %v1643 = vpop.permute.xlu0 %1642
      %1646 = vrot.lane.b32.xlu0 %v1560, 96
      %v1647 = vpop.permute.xlu0 %1646
      %1650 = vrot.lane.b32.xlu0 %v1568, 112
      %v1651 = vpop.permute.xlu0 %1650
      %1654 = vrot.lane.b32.xlu0 %v1618, 16
      %v1655 = vpop.permute.xlu0 %1654
      %1658 = vrot.lane.b32.xlu0 %v1604, 32
      %v1659 = vpop.permute.xlu0 %1658
      %1662 = vrot.lane.b32.xlu0 %v1620, 48
      %v1663 = vpop.permute.xlu0 %1662
      %1666 = vrot.lane.b32.xlu0 %v1612, 64
      %v1667 = vpop.permute.xlu0 %1666
      %1670 = vrot.lane.b32.xlu0 %v1622, 80
      %v1671 = vpop.permute.xlu0 %1670
      %1674 = vrot.lane.b32.xlu0 %v1616, 96
      %v1675 = vpop.permute.xlu0 %1674
      %1678 = vrot.lane.b32.xlu0 %v1624, 112
      %v1679 = vpop.permute.xlu0 %1678
      %v1681 = vsel %vm416, %v1544, %v1627
      %v1682 = vsel %vm418, %v1681, %v1631
      %v1683 = vsel %vm420, %v1682, %v1635
      %v1684 = vsel %vm422, %v1683, %v1639
      %v1685 = vsel %vm424, %v1684, %v1643
      %v1686 = vsel %vm426, %v1685, %v1647
      %v1687 = vsel %vm428, %v1686, %v1651
      %v1688 = vsel %vm416, %v1600, %v1655
      %v1689 = vsel %vm418, %v1688, %v1659
      %v1690 = vsel %vm420, %v1689, %v1663
      %v1691 = vsel %vm422, %v1690, %v1667
      %v1692 = vsel %vm424, %v1691, %v1671
      %v1693 = vsel %vm426, %v1692, %v1675
      %v1694 = vsel %vm428, %v1693, %v1679
      %1695 = vrot.lane.b32.xlu0 %v1487, 127
      %v1696 = vpop.permute.xlu0 %1695
      %1697 = vrot.lane.b32.xlu0 %v1489, 127
      %v1698 = vpop.permute.xlu0 %1697
      %1699 = vrot.lane.b32.xlu0 %v1492, 127
      %v1700 = vpop.permute.xlu0 %1699
      %1701 = vrot.lane.b32.xlu0 %v1494, 127
      %v1702 = vpop.permute.xlu0 %1701
      %1703 = vrot.lane.b32.xlu0 %v1497, 127
      %v1704 = vpop.permute.xlu0 %1703
      %1705 = vrot.lane.b32.xlu0 %v1499, 127
      %v1706 = vpop.permute.xlu0 %1705
      %1707 = vrot.lane.b32.xlu0 %v1502, 127
      %v1708 = vpop.permute.xlu0 %1707
      %1709 = vrot.lane.b32.xlu0 %v1504, 127
      %v1710 = vpop.permute.xlu0 %1709
      %v1719 = vrot.slane %v1704, 4
      %v1720 = vsel %vm248, %v1719, %v1696
      %v1721 = vrot.slane %v1696, 4
      %v1722 = vsel %vm248, %v1704, %v1721
      %v1724 = vunpack.c.l.s4 1983009808
      %v1725 = vunpack.c.0.s8 %v1724
      %v1726 = vperm.slane %v1720, %v1725
      %v1728 = vunpack.c.l.s4 1983009808
      %v1729 = vunpack.c.0.s8 %v1728
      %v1730 = vperm.slane %v1722, %v1729
      %v1731 = vrot.slane %v1708, 4
      %v1732 = vsel %vm248, %v1731, %v1700
      %v1733 = vrot.slane %v1700, 4
      %v1734 = vsel %vm248, %v1708, %v1733
      %v1736 = vunpack.c.l.s4 1983009808
      %v1737 = vunpack.c.0.s8 %v1736
      %v1738 = vperm.slane %v1732, %v1737
      %v1740 = vunpack.c.l.s4 1983009808
      %v1741 = vunpack.c.0.s8 %v1740
      %v1742 = vperm.slane %v1734, %v1741
      %v1743 = vrot.slane %v1738, 4
      %v1744 = vsel %vm248, %v1743, %v1726
      %v1745 = vrot.slane %v1726, 4
      %v1746 = vsel %vm248, %v1738, %v1745
      %v1748 = vunpack.c.l.s4 1934713408
      %v1749 = vunpack.c.0.s8 %v1748
      %v1750 = vperm.slane %v1744, %v1749
      %v1752 = vunpack.c.l.s4 1934713408
      %v1753 = vunpack.c.0.s8 %v1752
      %v1754 = vperm.slane %v1746, %v1753
      %v1755 = vrot.slane %v1742, 4
      %v1756 = vsel %vm248, %v1755, %v1730
      %v1757 = vrot.slane %v1730, 4
      %v1758 = vsel %vm248, %v1742, %v1757
      %v1760 = vunpack.c.l.s4 1934713408
      %v1761 = vunpack.c.0.s8 %v1760
      %v1762 = vperm.slane %v1756, %v1761
      %v1764 = vunpack.c.l.s4 1934713408
      %v1765 = vunpack.c.0.s8 %v1764
      %v1766 = vperm.slane %v1758, %v1765
      %v1767 = vrot.slane %v1750, 4
      %v1768 = vsel %vm248, 0.0, %v1767
      %v1769 = vrot.slane %v1754, 4
      %v1770 = vsel %vm248, 0.0, %v1769
      %v1771 = vrot.slane %v1762, 4
      %v1772 = vsel %vm248, 0.0, %v1771
      %v1773 = vrot.slane %v1766, 4
      %v1774 = vsel %vm248, 0.0, %v1773
      %v1775 = vrot.slane %v1706, 4
      %v1776 = vsel %vm248, %v1775, %v1698
      %v1777 = vrot.slane %v1698, 4
      %v1778 = vsel %vm248, %v1706, %v1777
      %v1780 = vunpack.c.l.s4 1983009808
      %v1781 = vunpack.c.0.s8 %v1780
      %v1782 = vperm.slane %v1776, %v1781
      %v1784 = vunpack.c.l.s4 1983009808
      %v1785 = vunpack.c.0.s8 %v1784
      %v1786 = vperm.slane %v1778, %v1785
      %v1787 = vrot.slane %v1710, 4
      %v1788 = vsel %vm248, %v1787, %v1702
      %v1789 = vrot.slane %v1702, 4
      %v1790 = vsel %vm248, %v1710, %v1789
      %v1792 = vunpack.c.l.s4 1983009808
      %v1793 = vunpack.c.0.s8 %v1792
      %v1794 = vperm.slane %v1788, %v1793
      %v1796 = vunpack.c.l.s4 1983009808
      %v1797 = vunpack.c.0.s8 %v1796
      %v1798 = vperm.slane %v1790, %v1797
      %v1799 = vrot.slane %v1794, 4
      %v1800 = vsel %vm248, %v1799, %v1782
      %v1801 = vrot.slane %v1782, 4
      %v1802 = vsel %vm248, %v1794, %v1801
      %v1804 = vunpack.c.l.s4 1934713408
      %v1805 = vunpack.c.0.s8 %v1804
      %v1806 = vperm.slane %v1800, %v1805
      %v1808 = vunpack.c.l.s4 1934713408
      %v1809 = vunpack.c.0.s8 %v1808
      %v1810 = vperm.slane %v1802, %v1809
      %v1811 = vrot.slane %v1798, 4
      %v1812 = vsel %vm248, %v1811, %v1786
      %v1813 = vrot.slane %v1786, 4
      %v1814 = vsel %vm248, %v1798, %v1813
      %v1816 = vunpack.c.l.s4 1934713408
      %v1817 = vunpack.c.0.s8 %v1816
      %v1818 = vperm.slane %v1812, %v1817
      %v1820 = vunpack.c.l.s4 1934713408
      %v1821 = vunpack.c.0.s8 %v1820
      %v1822 = vperm.slane %v1814, %v1821
      %v1823 = vrot.slane %v1806, 4
      %v1824 = vsel %vm248, 0.0, %v1823
      %v1825 = vrot.slane %v1810, 4
      %v1826 = vsel %vm248, 0.0, %v1825
      %v1827 = vrot.slane %v1818, 4
      %v1828 = vsel %vm248, 0.0, %v1827
      %v1829 = vrot.slane %v1822, 4
      %v1830 = vsel %vm248, 0.0, %v1829
      %1832 = vrot.lane.b32.xlu0 %v1768, 16
      %v1833 = vpop.permute.xlu0 %1832
      %1836 = vrot.lane.b32.xlu0 %v1754, 32
      %v1837 = vpop.permute.xlu0 %1836
      %1840 = vrot.lane.b32.xlu0 %v1770, 48
      %v1841 = vpop.permute.xlu0 %1840
      %1844 = vrot.lane.b32.xlu0 %v1762, 64
      %v1845 = vpop.permute.xlu0 %1844
      %1848 = vrot.lane.b32.xlu0 %v1772, 80
      %v1849 = vpop.permute.xlu0 %1848
      %1852 = vrot.lane.b32.xlu0 %v1766, 96
      %v1853 = vpop.permute.xlu0 %1852
      %1856 = vrot.lane.b32.xlu0 %v1774, 112
      %v1857 = vpop.permute.xlu0 %1856
      %1860 = vrot.lane.b32.xlu0 %v1824, 16
      %v1861 = vpop.permute.xlu0 %1860
      %1864 = vrot.lane.b32.xlu0 %v1810, 32
      %v1865 = vpop.permute.xlu0 %1864
      %1868 = vrot.lane.b32.xlu0 %v1826, 48
      %v1869 = vpop.permute.xlu0 %1868
      %1872 = vrot.lane.b32.xlu0 %v1818, 64
      %v1873 = vpop.permute.xlu0 %1872
      %1876 = vrot.lane.b32.xlu0 %v1828, 80
      %v1877 = vpop.permute.xlu0 %1876
      %1880 = vrot.lane.b32.xlu0 %v1822, 96
      %v1881 = vpop.permute.xlu0 %1880
      %1884 = vrot.lane.b32.xlu0 %v1830, 112
      %v1885 = vpop.permute.xlu0 %1884
      %v1887 = vsel %vm416, %v1750, %v1833
      %v1888 = vsel %vm418, %v1887, %v1837
      %v1889 = vsel %vm420, %v1888, %v1841
      %v1890 = vsel %vm422, %v1889, %v1845
      %v1891 = vsel %vm424, %v1890, %v1849
      %v1892 = vsel %vm426, %v1891, %v1853
      %v1893 = vsel %vm428, %v1892, %v1857
      %v1894 = vsel %vm416, %v1806, %v1861
      %v1895 = vsel %vm418, %v1894, %v1865
      %v1896 = vsel %vm420, %v1895, %v1869
      %v1897 = vsel %vm422, %v1896, %v1873
      %v1898 = vsel %vm424, %v1897, %v1877
      %v1899 = vsel %vm426, %v1898, %v1881
      %v1900 = vsel %vm428, %v1899, %v1885
      %1901 = vrot.lane.b32.xlu0 %v1487, 126
      %v1902 = vpop.permute.xlu0 %1901
      %1903 = vrot.lane.b32.xlu0 %v1489, 126
      %v1904 = vpop.permute.xlu0 %1903
      %1905 = vrot.lane.b32.xlu0 %v1492, 126
      %v1906 = vpop.permute.xlu0 %1905
      %1907 = vrot.lane.b32.xlu0 %v1494, 126
      %v1908 = vpop.permute.xlu0 %1907
      %1909 = vrot.lane.b32.xlu0 %v1497, 126
      %v1910 = vpop.permute.xlu0 %1909
      %1911 = vrot.lane.b32.xlu0 %v1499, 126
      %v1912 = vpop.permute.xlu0 %1911
      %1913 = vrot.lane.b32.xlu0 %v1502, 126
      %v1914 = vpop.permute.xlu0 %1913
      %1915 = vrot.lane.b32.xlu0 %v1504, 126
      %v1916 = vpop.permute.xlu0 %1915
      %v1925 = vrot.slane %v1910, 4
      %v1926 = vsel %vm248, %v1925, %v1902
      %v1927 = vrot.slane %v1902, 4
      %v1928 = vsel %vm248, %v1910, %v1927
      %v1930 = vunpack.c.l.s4 1983009808
      %v1931 = vunpack.c.0.s8 %v1930
      %v1932 = vperm.slane %v1926, %v1931
      %v1934 = vunpack.c.l.s4 1983009808
      %v1935 = vunpack.c.0.s8 %v1934
      %v1936 = vperm.slane %v1928, %v1935
      %v1937 = vrot.slane %v1914, 4
      %v1938 = vsel %vm248, %v1937, %v1906
      %v1939 = vrot.slane %v1906, 4
      %v1940 = vsel %vm248, %v1914, %v1939
      %v1942 = vunpack.c.l.s4 1983009808
      %v1943 = vunpack.c.0.s8 %v1942
      %v1944 = vperm.slane %v1938, %v1943
      %v1946 = vunpack.c.l.s4 1983009808
      %v1947 = vunpack.c.0.s8 %v1946
      %v1948 = vperm.slane %v1940, %v1947
      %v1949 = vrot.slane %v1944, 4
      %v1950 = vsel %vm248, %v1949, %v1932
      %v1951 = vrot.slane %v1932, 4
      %v1952 = vsel %vm248, %v1944, %v1951
      %v1954 = vunpack.c.l.s4 1934713408
      %v1955 = vunpack.c.0.s8 %v1954
      %v1956 = vperm.slane %v1950, %v1955
      %v1958 = vunpack.c.l.s4 1934713408
      %v1959 = vunpack.c.0.s8 %v1958
      %v1960 = vperm.slane %v1952, %v1959
      %v1961 = vrot.slane %v1948, 4
      %v1962 = vsel %vm248, %v1961, %v1936
      %v1963 = vrot.slane %v1936, 4
      %v1964 = vsel %vm248, %v1948, %v1963
      %v1966 = vunpack.c.l.s4 1934713408
      %v1967 = vunpack.c.0.s8 %v1966
      %v1968 = vperm.slane %v1962, %v1967
      %v1970 = vunpack.c.l.s4 1934713408
      %v1971 = vunpack.c.0.s8 %v1970
      %v1972 = vperm.slane %v1964, %v1971
      %v1973 = vrot.slane %v1956, 4
      %v1974 = vsel %vm248, 0.0, %v1973
      %v1975 = vrot.slane %v1960, 4
      %v1976 = vsel %vm248, 0.0, %v1975
      %v1977 = vrot.slane %v1968, 4
      %v1978 = vsel %vm248, 0.0, %v1977
      %v1979 = vrot.slane %v1972, 4
      %v1980 = vsel %vm248, 0.0, %v1979
      %v1981 = vrot.slane %v1912, 4
      %v1982 = vsel %vm248, %v1981, %v1904
      %v1983 = vrot.slane %v1904, 4
      %v1984 = vsel %vm248, %v1912, %v1983
      %v1986 = vunpack.c.l.s4 1983009808
      %v1987 = vunpack.c.0.s8 %v1986
      %v1988 = vperm.slane %v1982, %v1987
      %v1990 = vunpack.c.l.s4 1983009808
      %v1991 = vunpack.c.0.s8 %v1990
      %v1992 = vperm.slane %v1984, %v1991
      %v1993 = vrot.slane %v1916, 4
      %v1994 = vsel %vm248, %v1993, %v1908
      %v1995 = vrot.slane %v1908, 4
      %v1996 = vsel %vm248, %v1916, %v1995
      %v1998 = vunpack.c.l.s4 1983009808
      %v1999 = vunpack.c.0.s8 %v1998
      %v2000 = vperm.slane %v1994, %v1999
      %v2002 = vunpack.c.l.s4 1983009808
      %v2003 = vunpack.c.0.s8 %v2002
      %v2004 = vperm.slane %v1996, %v2003
      %v2005 = vrot.slane %v2000, 4
      %v2006 = vsel %vm248, %v2005, %v1988
      %v2007 = vrot.slane %v1988, 4
      %v2008 = vsel %vm248, %v2000, %v2007
      %v2010 = vunpack.c.l.s4 1934713408
      %v2011 = vunpack.c.0.s8 %v2010
      %v2012 = vperm.slane %v2006, %v2011
      %v2014 = vunpack.c.l.s4 1934713408
      %v2015 = vunpack.c.0.s8 %v2014
      %v2016 = vperm.slane %v2008, %v2015
      %v2017 = vrot.slane %v2004, 4
      %v2018 = vsel %vm248, %v2017, %v1992
      %v2019 = vrot.slane %v1992, 4
      %v2020 = vsel %vm248, %v2004, %v2019
      %v2022 = vunpack.c.l.s4 1934713408
      %v2023 = vunpack.c.0.s8 %v2022
      %v2024 = vperm.slane %v2018, %v2023
      %v2026 = vunpack.c.l.s4 1934713408
      %v2027 = vunpack.c.0.s8 %v2026
      %v2028 = vperm.slane %v2020, %v2027
      %v2029 = vrot.slane %v2012, 4
      %v2030 = vsel %vm248, 0.0, %v2029
      %v2031 = vrot.slane %v2016, 4
      %v2032 = vsel %vm248, 0.0, %v2031
      %v2033 = vrot.slane %v2024, 4
      %v2034 = vsel %vm248, 0.0, %v2033
      %v2035 = vrot.slane %v2028, 4
      %v2036 = vsel %vm248, 0.0, %v2035
      %2038 = vrot.lane.b32.xlu0 %v1974, 16
      %v2039 = vpop.permute.xlu0 %2038
      %2042 = vrot.lane.b32.xlu0 %v1960, 32
      %v2043 = vpop.permute.xlu0 %2042
      %2046 = vrot.lane.b32.xlu0 %v1976, 48
      %v2047 = vpop.permute.xlu0 %2046
      %2050 = vrot.lane.b32.xlu0 %v1968, 64
      %v2051 = vpop.permute.xlu0 %2050
      %2054 = vrot.lane.b32.xlu0 %v1978, 80
      %v2055 = vpop.permute.xlu0 %2054
      %2058 = vrot.lane.b32.xlu0 %v1972, 96
      %v2059 = vpop.permute.xlu0 %2058
      %2062 = vrot.lane.b32.xlu0 %v1980, 112
      %v2063 = vpop.permute.xlu0 %2062
      %2066 = vrot.lane.b32.xlu0 %v2030, 16
      %v2067 = vpop.permute.xlu0 %2066
      %2070 = vrot.lane.b32.xlu0 %v2016, 32
      %v2071 = vpop.permute.xlu0 %2070
      %2074 = vrot.lane.b32.xlu0 %v2032, 48
      %v2075 = vpop.permute.xlu0 %2074
      %2078 = vrot.lane.b32.xlu0 %v2024, 64
      %v2079 = vpop.permute.xlu0 %2078
      %2082 = vrot.lane.b32.xlu0 %v2034, 80
      %v2083 = vpop.permute.xlu0 %2082
      %2086 = vrot.lane.b32.xlu0 %v2028, 96
      %v2087 = vpop.permute.xlu0 %2086
      %2090 = vrot.lane.b32.xlu0 %v2036, 112
      %v2091 = vpop.permute.xlu0 %2090
      %v2093 = vsel %vm416, %v1956, %v2039
      %v2094 = vsel %vm418, %v2093, %v2043
      %v2095 = vsel %vm420, %v2094, %v2047
      %v2096 = vsel %vm422, %v2095, %v2051
      %v2097 = vsel %vm424, %v2096, %v2055
      %v2098 = vsel %vm426, %v2097, %v2059
      %v2099 = vsel %vm428, %v2098, %v2063
      %v2100 = vsel %vm416, %v2012, %v2067
      %v2101 = vsel %vm418, %v2100, %v2071
      %v2102 = vsel %vm420, %v2101, %v2075
      %v2103 = vsel %vm422, %v2102, %v2079
      %v2104 = vsel %vm424, %v2103, %v2083
      %v2105 = vsel %vm426, %v2104, %v2087
      %v2106 = vsel %vm428, %v2105, %v2091
      %v2109 = vrot.slane %v643, 4
      %v2110 = vrot.slane %v650, 4
      %v2115 = vrot.slane %v1064, 4
      %v2116 = vrot.slane %v1071, 4
      %v2121 = vrot.slane %v1476, 4
      %v2122 = vrot.slane %v1483, 4
      %v2127 = vrot.slane %v1893, 4
      %v2128 = vrot.slane %v1900, 4
      %vm2131 = vcmask 1043456
      %v2132 = vsel %vm2131, %v429, %v2109
      %v2133 = vsel %vm2131, %v436, %v2110
      %v2134 = vsel %vm2131, %v849, %v2115
      %v2135 = vsel %vm2131, %v856, %v2116
      %v2136 = vsel %vm2131, %v1270, %v2121
      %v2137 = vsel %vm2131, %v1277, %v2122
      %v2138 = vsel %vm2131, %v1687, %v2127
      %v2139 = vsel %vm2131, %v1694, %v2128
      %vm2140 = vcmask 293888
      %v2142 = vsel %vm2140, %v210, 0
      %v2145 = vsel %vm2131, %v2099, 0
      %v2148 = vsel %vm2131, %v2106, 0
      %2150 = vmatpush.msra.mxu0 0.0
      %2151 = vmatpush.msra.mxu0 0.0
      %2152 = vmatpush.msra.mxu0 0.0
      %2153 = vmatpush.msra.mxu0 0.0
      %2154 = vmatpush.msra.mxu0 0.0
      %2155 = vmatpush.msra.mxu0 0.0
      %2156 = vmatpush.msra.mxu0 0.0
      %2157 = vmatpush.msra.mxu0 0.0
      %2158 = vmatpush.msra.mxu0 0.0
      %2159 = vmatpush.msra.mxu0 0.0
      %2160 = vmatpush.msra.mxu0 0.0
      %2161 = vmatpush.msra.mxu0 %v2145
      %2162 = vmatpush.msra.mxu0 %v2138
      %2163 = vmatpush.msra.mxu0 %v2136
      %2164 = vmatpush.msra.mxu0 %v2134
      %2165 = vmatpush.msra.mxu0 %v2132
      %2166 = vmatmul.f32.gmra.mxu0 %v2142
      %v2167 = vpop.f32.mrf.mxu0
      %v2168 = vadd.f32 0.0, %v2167
      %2169 = vdwg.mxu0
      %2170 = vmatpush.msra.mxu0 0.0
      %2171 = vmatpush.msra.mxu0 0.0
      %2172 = vmatpush.msra.mxu0 0.0
      %2173 = vmatpush.msra.mxu0 0.0
      %2174 = vmatpush.msra.mxu0 0.0
      %2175 = vmatpush.msra.mxu0 0.0
      %2176 = vmatpush.msra.mxu0 0.0
      %2177 = vmatpush.msra.mxu0 0.0
      %2178 = vmatpush.msra.mxu0 0.0
      %2179 = vmatpush.msra.mxu0 0.0
      %2180 = vmatpush.msra.mxu0 0.0
      %2181 = vmatpush.msra.mxu0 %v2148
      %2182 = vmatpush.msra.mxu0 %v2139
      %2183 = vmatpush.msra.mxu0 %v2137
      %2184 = vmatpush.msra.mxu0 %v2135
      %2185 = vmatpush.msra.mxu0 %v2133
      %2186 = vmatmul.f32.gmra.mxu0 %v2142
      %v2187 = vpop.f32.mrf.mxu0
      %v2188 = vadd.f32 0.0, %v2187
      %2189 = vdwg.mxu0
      %v2190 = vld [vmem:[%s2] sm:$0xff]
      %2192 = vset.pattern.permute.xlu0 0
      %2193 = vperm.xlu0 %2192, %v2190
      %v2194 = vpop.permute.xlu0 %2193
      %v2196 = vmul.f32 %v2168, %v2194
      %v2197 = vmul.f32 %v2188, %v2194
      %v2198 = vld [vmem:[%s3] sm:$0xff]
      %2200 = vset.pattern.permute.xlu0 0
      %2201 = vperm.xlu0 %2200, %v2198
      %v2202 = vpop.permute.xlu0 %2201
      %v2204 = vadd.f32 %v2196, %v2202
      %v2205 = vadd.f32 %v2197, %v2202
      %2206 = vst [vmem:[%s197] sm:$0xff] %v2204
      %2207 = vst [vmem:[%s197 + $0x8] sm:$0xff] %v2205
      %p2208 = scmp.lt.s32.totalorder %s15, 1
      %s2209 = scalar_select %p2208, %s15, 1
      %s2210 = smul.addr %s2209, 2
      %s2211 = smul.addr %s2210, 8
      %s2212 = scalar_lea.vmem %s4, %s2211
      // Predicated region
      $region37: #{conv_block.3} parent=35 // pred_check
        %p2213 = pneg %p122
      $region38: #{conv_block.3} parent=35 // pred_check_branch
        %2215 = sbr.rel (%p2213) target = $region40
      $region39: #{conv_block.3} parent=35 // pred_region
        _
      $region40: #{conv_block.3} parent=35 // pred_fallthru
        _
    $region36: #{conv_block.3} parent=5 // pred_fallthru
      _
    %p2216 = scmp.le.s32.totalorder 2, %s10
    // Predicated region
    $region41: #{conv_block.3} parent=5 // pred_check
      %p2217 = pneg %p2216
    $region42: #{conv_block.3} parent=5 // pred_check_branch
      %2219 = sbr.rel (%p2217) target = $region44
    $region43: #{conv_block.3} parent=5 // pred_region
      %s2220 = ssub.s32 %s10, 2
      // Predicated region
      $region45: #{conv_block.3} parent=43 // pred_check
        %p2221 = pneg %p128
      $region46: #{conv_block.3} parent=43 // pred_check_branch
        %2223 = sbr.rel (%p2221) target = $region48
      $region47: #{conv_block.3} parent=43 // pred_region
        %p2224 = scmp.lt.s32.totalorder %s16, 1
        %s2225 = scalar_select %p2224, %s16, 1
        %s2226 = smul.addr %s2225, 2
        %s2227 = smul.addr %s2226, 8
        %s2228 = scalar_lea.vmem %s4, %s2227
      $region48: #{conv_block.3} parent=43 // pred_fallthru
        _
    $region44: #{conv_block.3} parent=5 // pred_fallthru
      _
  $region6: #{conv_block.3} parent=0 // loop_footer
    %s14 = sadd.s32 1, %s10
  $region7: #{conv_block.3} parent=0 // loop_footer_branch
    %9 = sbr.rel target = $region3
  $region8: #{conv_block.3} parent=0 // loop_exit
    _

</llo_original>
